<compile_context>
chip_gen: v6e
topology: v6e:2x2x1
jax: 0.10.0
libtpu: 0.0.40
codegen_flags: <defaults>
</compile_context>

<pallas_src>
import functools

import jax
import jax.numpy as jnp
from jax import lax
from jax.experimental import pallas as pl
from jax.experimental.pallas import tpu as pltpu


D = 512  # hidden size fixed by the module (nn.Linear(512, 512))


def _round_up(n, m):
    return -(-n // m) * m


def _cdiv(a, b):
    return -(-a // b)


def _mlp(x_bf16, w1, b1, w2, b2):
    """Linear -> Tanh -> Linear. bf16 MXU operands, f32 accumulation,
    f32 bias add / tanh (EUP overlaps the MXU; keeps v5e on one path)."""
    h = jnp.dot(x_bf16, w1, preferred_element_type=jnp.float32) + b1
    h = jnp.tanh(h).astype(jnp.bfloat16)
    return jnp.dot(h, w2, preferred_element_type=jnp.float32) + b2


def _colbert_kernel(txt_ref, img_ref,
                    tw1_ref, tb1_ref, tw2_ref, tb2_ref,
                    iw1_ref, ib1_ref, iw2_ref, ib2_ref,
                    out_ref, *, bblk, nqp, ndp, ndc, qip):
    # txt_ref: [bblk, RT, D]  (query text rows || doc text rows || pad, bf16)
    # img_ref: [bblk, RI, D]  (query image rows || doc image rows || pad, bf16)
    rt = txt_ref.shape[1]
    ri = img_ref.shape[1]

    # RT/RI are multiples of 16 (bf16 sublane tile), so flattening the batch
    # dim into the matmul M dim is a free view (no per-step relayout).
    txt = txt_ref[...].reshape(bblk * rt, D)
    img = img_ref[...].reshape(bblk * ri, D)

    # One merged text MLP and one merged image MLP for the whole batch block.
    tvecs = _mlp(txt, tw1_ref[...], tb1_ref[...], tw2_ref[...], tb2_ref[...])
    ivecs = _mlp(img, iw1_ref[...], ib1_ref[...], iw2_ref[...], ib2_ref[...])

    tvecs = tvecs.reshape(bblk, rt, D)        # f32, rt multiple of 16 -> view
    ivecs = ivecs.reshape(bblk, ri, D)

    # Slice boundaries are sublane-aligned (nqp mult of 8, qip = 8, ndp mult
    # of 16).  Score operands are cast to bf16 (f32 accumulation below).
    q = tvecs[:, :nqp, :].astype(jnp.bfloat16)              # [bblk, nqp, D]
    d = tvecs[:, nqp:nqp + ndp, :].astype(jnp.bfloat16)     # [bblk, ndp, D]
    qiv = ivecs[:, 0:1, :].astype(jnp.bfloat16)             # [bblk, 1,   D]
    div = ivecs[:, qip:qip + ndp, :].astype(jnp.bfloat16)   # [bblk, ndp, D]

    # Lane-dense output: pad the doc-side operands to ndc (multiple of 128)
    # rows.  The score matmul's N axis -> ndc, so the output block's last dim
    # is 128-dense and stores are unmasked full vregs.  The MXU pads N to 128
    # internally anyway and the zero rows yield exactly-zero extra columns,
    # which the wrapper slices off.
    if ndc > ndp:
        zpad = jnp.zeros((bblk, ndc - ndp, D), jnp.bfloat16)
        d = jnp.concatenate([d, zpad], axis=1)               # [bblk, ndc, D]
        div = jnp.concatenate([div, zpad], axis=1)            # [bblk, ndc, D]

    # Contract the feature axis of both operands directly (einsum 'bqd,bkd->bqk').
    # TODO(synk): verify via pl.lower_as_mlir that no per-batch vxpose of the
    #             doc operand is emitted once Nd grows to >= 128.
    dn = (((2,), (2,)), ((0,), (0,)))
    text_score = lax.dot_general(q, d, dn,
                                 preferred_element_type=jnp.float32)    # [bblk,nqp,ndc]
    image_score = lax.dot_general(qiv, div, dn,
                                  preferred_element_type=jnp.float32)   # [bblk,1,ndc]

    # 0.5 * text + 0.5 * image (image score broadcasts over the query axis,
    # matching torch's query_image.unsqueeze(0) semantics).
    out_ref[...] = 0.5 * text_score + 0.5 * image_score


def _device_config():
    """Generation-aware knobs (single-TC vs megacore, row targets, VMEM)."""
    kind = ""
    try:
        kind = jax.devices()[0].device_kind.lower()
    except Exception:
        pass
    cfg = {
        "num_tc": 1,                     # conservative default (v4/v5p/unknown)
        "min_fill_rows": 256,            # merged rows that fill the MXU
        "max_rows": 2048,                # cap on merged text rows per step
        "vmem_limit": 32 * 1024 * 1024,
    }
    if ("v5 lite" in kind) or ("v5e" in kind) or ("v5lite" in kind):
        cfg.update(num_tc=1, min_fill_rows=128, max_rows=4096,
                   vmem_limit=64 * 1024 * 1024)
    elif "v6" in kind:
        cfg.update(num_tc=1, min_fill_rows=256, max_rows=4096,
                   vmem_limit=64 * 1024 * 1024)
    elif "v7" in kind:
        cfg.update(num_tc=2, min_fill_rows=256, max_rows=2048,
                   vmem_limit=48 * 1024 * 1024)
    return cfg


def _choose_blocking(B, per_batch_bytes, rows_txt, cfg):
    """Pick (bblk, steps, padded B): one big step on single-TC chips; split
    into 2 parallel steps on v7x only if each half still fills the MXU."""
    fixed = 6 * 1024 * 1024  # bf16 weights (double-buffered) + biases + slack
    budget = int(cfg["vmem_limit"] * 0.7) - fixed
    cap_vmem = max(1, budget // max(per_batch_bytes, 1))
    cap_rows = max(1, cfg["max_rows"] // max(rows_txt, 1))
    bblk_cap = max(1, min(cap_vmem, cap_rows))

    steps = _cdiv(B, bblk_cap)
    if cfg["num_tc"] >= 2 and steps == 1 and B >= 2:
        if _cdiv(B, 2) * rows_txt >= cfg["min_fill_rows"]:
            steps = 2
    bblk = _cdiv(B, steps)
    return bblk, steps, steps * bblk


def colbert_scores(qt, dt, qi, di, text_params, image_params):
    """qt:[B,Nq,D] dt:[B,Nd,D] qi:[B,1,D] di:[B,Nd,D] -> scores [B,Nq,Nd] f32."""
    B, Nq, _ = qt.shape
    Nd = dt.shape[1]

    cfg = _device_config()

    # Defensive param prep: weights -> bf16 MXU operands; biases -> (1, D) f32
    # (handles both (D,) and (1, D) nn.Linear bias shapes).
    def prep(params):
        w1, b1, w2, b2 = params
        return (w1.astype(jnp.bfloat16),
                jnp.reshape(b1, (1, D)).astype(jnp.float32),
                w2.astype(jnp.bfloat16),
                jnp.reshape(b2, (1, D)).astype(jnp.float32))

    tw1, tb1, tw2, tb2 = prep(text_params)
    iw1, ib1, iw2, ib2 = prep(image_params)

    # Row padding:
    #   NQP: query-text rows, 8-aligned (free f32 post-MLP slice).
    #   NDP: doc rows (text & image), 16-aligned (bf16 tile) so the in-kernel
    #        zero-pad concat of the score operands is tile-aligned.
    #   QIP: the single query-image row padded to 8 so doc-image rows start
    #        on a sublane boundary.
    #   RT/RI: per-batch row totals, 16-aligned so (bblk,R,D)->(bblk*R,D) is
    #        a free view.
    #   NDC: score columns padded to a multiple of 128 -> unmasked stores.
    NQP = _round_up(Nq, 8)
    NDP = _round_up(Nd, 16)
    QIP = 8
    RT = _round_up(NQP + NDP, 16)
    RI = _round_up(QIP + NDP, 16)
    NDC = _round_up(NDP, 128)

    # Rough per-batch VMEM footprint for block sizing.
    per_batch = (
        (RT + RI) * D * 2 * 2            # bf16 feature blocks, double-buffered
        + (RT + RI) * D * 4 * 2          # f32 hidden + output activations
        + (NQP + 2 * NDC + 1) * D * 2    # bf16 score operands (docs padded)
        + NQP * NDC * 4 * 2              # f32 score block, double-buffered
    )
    bblk, steps, B_pad = _choose_blocking(B, per_batch, RT, cfg)

    def pad3(x, rows):
        b, r, _ = x.shape
        return jnp.pad(x, ((0, B_pad - b), (0, rows - r), (0, 0)))

    # One bf16 materialization of the (padded) features.  The pad / bf16 cast
    # needs a copy anyway, and keeping query+doc rows merged means each
    # 512x512 weight matrix is pushed through the MXU once per block instead
    # of twice.
    txt = jnp.concatenate([pad3(qt, NQP), pad3(dt, RT - NQP)],
                          axis=1).astype(jnp.bfloat16)   # [B_pad, RT, D]
    img = jnp.concatenate([pad3(qi, QIP), pad3(di, RI - QIP)],
                          axis=1).astype(jnp.bfloat16)   # [B_pad, RI, D]

    kernel = functools.partial(_colbert_kernel, bblk=bblk, nqp=NQP, ndp=NDP,
                               ndc=NDC, qip=QIP)

    feat_spec = lambda rows: pl.BlockSpec((bblk, rows, D), lambda i: (i, 0, 0))
    # Constant index_maps: weights / biases are DMA'd once and reused across
    # the (1-2) grid steps.
    w_spec = pl.BlockSpec((D, D), lambda i: (0, 0))
    b_spec = pl.BlockSpec((1, D), lambda i: (0, 0))

    mt, mi = B_pad * RT, B_pad * RI
    cost = pl.CostEstimate(
        flops=4 * (mt + mi) * D * D + 2 * B_pad * (NQP + 1) * NDC * D,
        transcendentals=(mt + mi) * D,
        bytes_accessed=2 * (4 * D * D) + 4 * 4 * D
        + (mt + mi) * D * 2 + B_pad * NQP * NDC * 4,
    )

    out = pl.pallas_call(
        kernel,
        out_shape=jax.ShapeDtypeStruct((B_pad, NQP, NDC), jnp.float32),
        grid_spec=pltpu.PrefetchScalarGridSpec(
            num_scalar_prefetch=0,
            grid=(steps,),
            in_specs=[
                feat_spec(RT), feat_spec(RI),
                w_spec, b_spec, w_spec, b_spec,
                w_spec, b_spec, w_spec, b_spec,
            ],
            out_specs=pl.BlockSpec((bblk, NQP, NDC), lambda i: (i, 0, 0)),
        ),
        compiler_params=pltpu.CompilerParams(
            dimension_semantics=("parallel",),
            vmem_limit_bytes=cfg["vmem_limit"],
        ),
        cost_estimate=cost,
    )(txt, img, tw1, tb1, tw2, tb2, iw1, ib1, iw2, ib2)

    # Strip batch / row / column padding.
    return out[:B, :Nq, :Nd]


def _ref(qt, dt, qi, di, text_params, image_params):
    # Pure f32 reference matching the PyTorch module semantics.
    tw1, tb1, tw2, tb2 = text_params
    iw1, ib1, iw2, ib2 = image_params

    def mlp(x, w1, b1, w2, b2):
        return jnp.tanh(x @ w1 + b1) @ w2 + b2

    qv = mlp(qt, tw1, tb1, tw2, tb2)
    dv = mlp(dt, tw1, tb1, tw2, tb2)
    qiv = mlp(qi, iw1, ib1, iw2, ib2)
    div = mlp(di, iw1, ib1, iw2, ib2)
    ts = jnp.einsum('bqd,bkd->bqk', qv, dv)
    im = jnp.einsum('bqd,bkd->bqk', qiv, div)
    return 0.5 * ts + 0.5 * im


if __name__ == "__main__":
    key = jax.random.PRNGKey(0)
    B, Nq, Nd = 2, 8, 8

    keys = jax.random.split(key, 12)
    # Deterministic synthetic parameters (shapes from nn.Linear(512, 512)).
    scale = 1.0 / jnp.sqrt(jnp.float32(D))
    tw1 = jax.random.normal(keys[0], (D, D), jnp.float32) * scale
    tb1 = jax.random.normal(keys[1], (1, D), jnp.float32) * 0.01
    tw2 = jax.random.normal(keys[2], (D, D), jnp.float32) * scale
    tb2 = jax.random.normal(keys[3], (1, D), jnp.float32) * 0.01
    iw1 = jax.random.normal(keys[4], (D, D), jnp.float32) * scale
    ib1 = jax.random.normal(keys[5], (1, D), jnp.float32) * 0.01
    iw2 = jax.random.normal(keys[6], (D, D), jnp.float32) * scale
    ib2 = jax.random.normal(keys[7], (1, D), jnp.float32) * 0.01

    # Synthetic BioCLIP encoder outputs (512-d features).
    qt = jax.random.normal(keys[8], (B, Nq, D), jnp.float32)
    dt = jax.random.normal(keys[9], (B, Nd, D), jnp.float32)
    qi = jax.random.normal(keys[10], (B, 1, D), jnp.float32)
    di = jax.random.normal(keys[11], (B, Nd, D), jnp.float32)

    text_params = (tw1, tb1, tw2, tb2)
    image_params = (iw1, ib1, iw2, ib2)

    scores = colbert_scores(qt, dt, qi, di, text_params, image_params)
    jax.block_until_ready(scores)

    expected = _ref(qt, dt, qi, di, text_params, image_params)
    assert scores.shape == (B, Nq, Nd)
    # bf16 matmul operands in the kernel vs. pure-f32 reference => relaxed tol.
    assert jnp.allclose(scores, expected, rtol=5e-2, atol=1e-1), (
        float(jnp.max(jnp.abs(scores - expected))))

    print("KERNEL_OK")
</pallas_src>

<mosaic_0001>
module attributes {stable_mosaic.version = 11 : i64} {
  func.func @_colbert_kernel(%arg0: i32, %arg1: memref<2x32x512xbf16, #tpu.memory_space<vmem>>, %arg2: memref<2x32x512xbf16, #tpu.memory_space<vmem>>, %arg3: memref<512x512xbf16, #tpu.memory_space<vmem>>, %arg4: memref<1x512xf32, #tpu.memory_space<vmem>>, %arg5: memref<512x512xbf16, #tpu.memory_space<vmem>>, %arg6: memref<1x512xf32, #tpu.memory_space<vmem>>, %arg7: memref<512x512xbf16, #tpu.memory_space<vmem>>, %arg8: memref<1x512xf32, #tpu.memory_space<vmem>>, %arg9: memref<512x512xbf16, #tpu.memory_space<vmem>>, %arg10: memref<1x512xf32, #tpu.memory_space<vmem>>, %arg11: memref<2x8x128xf32, #tpu.memory_space<vmem>>) attributes {dimension_semantics = [#tpu.dimension_semantics<parallel>], iteration_bounds = array<i64: 1>, scalar_prefetch = 0 : i64, scratch_operands = 0 : i64, tpu.core_type = #tpu.core_type<tc>, window_params = [{transform_indices = @transform_0, window_bounds = array<i64: 2, 32, 512>}, {transform_indices = @transform_1, window_bounds = array<i64: 2, 32, 512>}, {pipeline_mode = #tpu.pipeline_mode<synchronous>, transform_indices = @transform_2, window_bounds = array<i64: 512, 512>}, {pipeline_mode = #tpu.pipeline_mode<synchronous>, transform_indices = @transform_3, window_bounds = array<i64: 1, 512>}, {pipeline_mode = #tpu.pipeline_mode<synchronous>, transform_indices = @transform_4, window_bounds = array<i64: 512, 512>}, {pipeline_mode = #tpu.pipeline_mode<synchronous>, transform_indices = @transform_5, window_bounds = array<i64: 1, 512>}, {pipeline_mode = #tpu.pipeline_mode<synchronous>, transform_indices = @transform_6, window_bounds = array<i64: 512, 512>}, {pipeline_mode = #tpu.pipeline_mode<synchronous>, transform_indices = @transform_7, window_bounds = array<i64: 1, 512>}, {pipeline_mode = #tpu.pipeline_mode<synchronous>, transform_indices = @transform_8, window_bounds = array<i64: 512, 512>}, {pipeline_mode = #tpu.pipeline_mode<synchronous>, transform_indices = @transform_9, window_bounds = array<i64: 1, 512>}, {transform_indices = @transform_10, window_bounds = array<i64: 2, 8, 128>}]} {
    %c0 = arith.constant 0 : index
    %c0_0 = arith.constant 0 : index
    %c0_1 = arith.constant 0 : index
    %0 = vector.load %arg1[%c0, %c0_0, %c0_1] : memref<2x32x512xbf16, #tpu.memory_space<vmem>>, vector<2x32x512xbf16>
    %1 = vector.shape_cast %0 : vector<2x32x512xbf16> to vector<64x512xbf16>
    %c0_2 = arith.constant 0 : index
    %c0_3 = arith.constant 0 : index
    %c0_4 = arith.constant 0 : index
    %2 = vector.load %arg2[%c0_2, %c0_3, %c0_4] : memref<2x32x512xbf16, #tpu.memory_space<vmem>>, vector<2x32x512xbf16>
    %3 = vector.shape_cast %2 : vector<2x32x512xbf16> to vector<64x512xbf16>
    %c0_5 = arith.constant 0 : index
    %c0_6 = arith.constant 0 : index
    %4 = vector.load %arg3[%c0_5, %c0_6] : memref<512x512xbf16, #tpu.memory_space<vmem>>, vector<512x512xbf16>
    %c0_7 = arith.constant 0 : index
    %c0_8 = arith.constant 0 : index
    %5 = vector.load %arg4[%c0_7, %c0_8] : memref<1x512xf32, #tpu.memory_space<vmem>>, vector<1x512xf32>
    %c0_9 = arith.constant 0 : index
    %c0_10 = arith.constant 0 : index
    %6 = vector.load %arg5[%c0_9, %c0_10] : memref<512x512xbf16, #tpu.memory_space<vmem>>, vector<512x512xbf16>
    %c0_11 = arith.constant 0 : index
    %c0_12 = arith.constant 0 : index
    %7 = vector.load %arg6[%c0_11, %c0_12] : memref<1x512xf32, #tpu.memory_space<vmem>>, vector<1x512xf32>
    %cst = arith.constant dense<0.000000e+00> : vector<64x512xf32>
    %8 = tpu.matmul %1, %4, %cst {dimension_numbers = #tpu.dot_dimension_numbers<[1], [0], [0], [1], [0, 0, 1, 1], [], []>} : vector<64x512xbf16>, vector<512x512xbf16>, vector<64x512xf32> -> vector<64x512xf32>
    %9 = vector.broadcast %5 : vector<1x512xf32> to vector<64x512xf32>
    %10 = arith.addf %8, %9 : vector<64x512xf32>
    %11 = math.tanh %10 : vector<64x512xf32>
    %12 = arith.truncf %11 : vector<64x512xf32> to vector<64x512xbf16>
    %cst_13 = arith.constant dense<0.000000e+00> : vector<64x512xf32>
    %13 = tpu.matmul %12, %6, %cst_13 {dimension_numbers = #tpu.dot_dimension_numbers<[1], [0], [0], [1], [0, 0, 1, 1], [], []>} : vector<64x512xbf16>, vector<512x512xbf16>, vector<64x512xf32> -> vector<64x512xf32>
    %14 = vector.broadcast %7 : vector<1x512xf32> to vector<64x512xf32>
    %15 = arith.addf %13, %14 : vector<64x512xf32>
    %c0_14 = arith.constant 0 : index
    %c0_15 = arith.constant 0 : index
    %16 = vector.load %arg7[%c0_14, %c0_15] : memref<512x512xbf16, #tpu.memory_space<vmem>>, vector<512x512xbf16>
    %c0_16 = arith.constant 0 : index
    %c0_17 = arith.constant 0 : index
    %17 = vector.load %arg8[%c0_16, %c0_17] : memref<1x512xf32, #tpu.memory_space<vmem>>, vector<1x512xf32>
    %c0_18 = arith.constant 0 : index
    %c0_19 = arith.constant 0 : index
    %18 = vector.load %arg9[%c0_18, %c0_19] : memref<512x512xbf16, #tpu.memory_space<vmem>>, vector<512x512xbf16>
    %c0_20 = arith.constant 0 : index
    %c0_21 = arith.constant 0 : index
    %19 = vector.load %arg10[%c0_20, %c0_21] : memref<1x512xf32, #tpu.memory_space<vmem>>, vector<1x512xf32>
    %cst_22 = arith.constant dense<0.000000e+00> : vector<64x512xf32>
    %20 = tpu.matmul %3, %16, %cst_22 {dimension_numbers = #tpu.dot_dimension_numbers<[1], [0], [0], [1], [0, 0, 1, 1], [], []>} : vector<64x512xbf16>, vector<512x512xbf16>, vector<64x512xf32> -> vector<64x512xf32>
    %21 = vector.broadcast %17 : vector<1x512xf32> to vector<64x512xf32>
    %22 = arith.addf %20, %21 : vector<64x512xf32>
    %23 = math.tanh %22 : vector<64x512xf32>
    %24 = arith.truncf %23 : vector<64x512xf32> to vector<64x512xbf16>
    %cst_23 = arith.constant dense<0.000000e+00> : vector<64x512xf32>
    %25 = tpu.matmul %24, %18, %cst_23 {dimension_numbers = #tpu.dot_dimension_numbers<[1], [0], [0], [1], [0, 0, 1, 1], [], []>} : vector<64x512xbf16>, vector<512x512xbf16>, vector<64x512xf32> -> vector<64x512xf32>
    %26 = vector.broadcast %19 : vector<1x512xf32> to vector<64x512xf32>
    %27 = arith.addf %25, %26 : vector<64x512xf32>
    %28 = vector.shape_cast %15 : vector<64x512xf32> to vector<2x32x512xf32>
    %29 = vector.shape_cast %27 : vector<64x512xf32> to vector<2x32x512xf32>
    %30 = vector.extract_strided_slice %28 {offsets = [0, 0, 0], sizes = [2, 8, 512], strides = [1, 1, 1]} : vector<2x32x512xf32> to vector<2x8x512xf32>
    %31 = arith.truncf %30 : vector<2x8x512xf32> to vector<2x8x512xbf16>
    %32 = vector.extract_strided_slice %28 {offsets = [0, 8, 0], sizes = [2, 16, 512], strides = [1, 1, 1]} : vector<2x32x512xf32> to vector<2x16x512xf32>
    %33 = arith.truncf %32 : vector<2x16x512xf32> to vector<2x16x512xbf16>
    %34 = vector.extract_strided_slice %29 {offsets = [0, 0, 0], sizes = [2, 1, 512], strides = [1, 1, 1]} : vector<2x32x512xf32> to vector<2x1x512xf32>
    %35 = arith.truncf %34 : vector<2x1x512xf32> to vector<2x1x512xbf16>
    %36 = vector.extract_strided_slice %29 {offsets = [0, 8, 0], sizes = [2, 16, 512], strides = [1, 1, 1]} : vector<2x32x512xf32> to vector<2x16x512xf32>
    %37 = arith.truncf %36 : vector<2x16x512xf32> to vector<2x16x512xbf16>
    %cst_24 = arith.constant 0.000000e+00 : bf16
    %38 = vector.broadcast %cst_24 : bf16 to vector<2x112x512xbf16>
    %39 = tpu.concatenate %33, %38 in 1 : vector<2x16x512xbf16>, vector<2x112x512xbf16> -> vector<2x128x512xbf16>
    %40 = tpu.concatenate %37, %38 in 1 : vector<2x16x512xbf16>, vector<2x112x512xbf16> -> vector<2x128x512xbf16>
    %cst_25 = arith.constant dense<0.000000e+00> : vector<2x8x128xf32>
    %41 = tpu.matmul %31, %39, %cst_25 {dimension_numbers = #tpu.dot_dimension_numbers<[2], [2], [1], [1], [0, 0, 0, 1, 1, 1], [0], [0]>} : vector<2x8x512xbf16>, vector<2x128x512xbf16>, vector<2x8x128xf32> -> vector<2x8x128xf32>
    %cst_26 = arith.constant dense<0.000000e+00> : vector<2x1x128xf32>
    %42 = tpu.matmul %35, %40, %cst_26 {dimension_numbers = #tpu.dot_dimension_numbers<[2], [2], [1], [1], [0, 0, 0, 1, 1, 1], [0], [0]>} : vector<2x1x512xbf16>, vector<2x128x512xbf16>, vector<2x1x128xf32> -> vector<2x1x128xf32>
    %cst_27 = arith.constant 5.000000e-01 : f32
    %43 = vector.broadcast %cst_27 : f32 to vector<2x8x128xf32>
    %44 = arith.mulf %43, %41 : vector<2x8x128xf32>
    %cst_28 = arith.constant 5.000000e-01 : f32
    %45 = vector.broadcast %cst_28 : f32 to vector<2x1x128xf32>
    %46 = arith.mulf %45, %42 : vector<2x1x128xf32>
    %47 = vector.broadcast %46 : vector<2x1x128xf32> to vector<2x8x128xf32>
    %48 = arith.addf %44, %47 : vector<2x8x128xf32>
    %c0_29 = arith.constant 0 : index
    %c0_30 = arith.constant 0 : index
    %c0_31 = arith.constant 0 : index
    %49 = vector.load %arg11[%c0_29, %c0_30, %c0_31] : memref<2x8x128xf32, #tpu.memory_space<vmem>>, vector<2x8x128xf32>
    tpu.vector_store %arg11[%c0_29, %c0_30, %c0_31], %48 {strides = array<i32>} : memref<2x8x128xf32, #tpu.memory_space<vmem>>, vector<2x8x128xf32>,
    return
  }
  func.func @transform_0(%arg0: i32) -> (i32, i32, i32) {
    %c0_i32 = arith.constant 0 : i32
    %c0_i32_0 = arith.constant 0 : i32
    %c0_i32_1 = arith.constant 0 : i32
    return %arg0, %c0_i32, %c0_i32_0 : i32, i32, i32
  }
  func.func @transform_1(%arg0: i32) -> (i32, i32, i32) {
    %c0_i32 = arith.constant 0 : i32
    %c0_i32_0 = arith.constant 0 : i32
    %c0_i32_1 = arith.constant 0 : i32
    return %arg0, %c0_i32, %c0_i32_0 : i32, i32, i32
  }
  func.func @transform_2(%arg0: i32) -> (i32, i32) {
    %c0_i32 = arith.constant 0 : i32
    %c0_i32_0 = arith.constant 0 : i32
    %c0_i32_1 = arith.constant 0 : i32
    return %c0_i32, %c0_i32_0 : i32, i32
  }
  func.func @transform_3(%arg0: i32) -> (i32, i32) {
    %c0_i32 = arith.constant 0 : i32
    %c0_i32_0 = arith.constant 0 : i32
    %c0_i32_1 = arith.constant 0 : i32
    return %c0_i32, %c0_i32_0 : i32, i32
  }
  func.func @transform_4(%arg0: i32) -> (i32, i32) {
    %c0_i32 = arith.constant 0 : i32
    %c0_i32_0 = arith.constant 0 : i32
    %c0_i32_1 = arith.constant 0 : i32
    return %c0_i32, %c0_i32_0 : i32, i32
  }
  func.func @transform_5(%arg0: i32) -> (i32, i32) {
    %c0_i32 = arith.constant 0 : i32
    %c0_i32_0 = arith.constant 0 : i32
    %c0_i32_1 = arith.constant 0 : i32
    return %c0_i32, %c0_i32_0 : i32, i32
  }
  func.func @transform_6(%arg0: i32) -> (i32, i32) {
    %c0_i32 = arith.constant 0 : i32
    %c0_i32_0 = arith.constant 0 : i32
    %c0_i32_1 = arith.constant 0 : i32
    return %c0_i32, %c0_i32_0 : i32, i32
  }
  func.func @transform_7(%arg0: i32) -> (i32, i32) {
    %c0_i32 = arith.constant 0 : i32
    %c0_i32_0 = arith.constant 0 : i32
    %c0_i32_1 = arith.constant 0 : i32
    return %c0_i32, %c0_i32_0 : i32, i32
  }
  func.func @transform_8(%arg0: i32) -> (i32, i32) {
    %c0_i32 = arith.constant 0 : i32
    %c0_i32_0 = arith.constant 0 : i32
    %c0_i32_1 = arith.constant 0 : i32
    return %c0_i32, %c0_i32_0 : i32, i32
  }
  func.func @transform_9(%arg0: i32) -> (i32, i32) {
    %c0_i32 = arith.constant 0 : i32
    %c0_i32_0 = arith.constant 0 : i32
    %c0_i32_1 = arith.constant 0 : i32
    return %c0_i32, %c0_i32_0 : i32, i32
  }
  func.func @transform_10(%arg0: i32) -> (i32, i32, i32) {
    %c0_i32 = arith.constant 0 : i32
    %c0_i32_0 = arith.constant 0 : i32
    %c0_i32_1 = arith.constant 0 : i32
    return %arg0, %c0_i32, %c0_i32_0 : i32, i32, i32
  }
}

</mosaic_0001>

<llo_original>
// kernel: tpu_custom_call.1
$region0: #{tpu_custom_call.1}
  #allocation0 [shape = 'u32[]', space=smem, size = 0x4, offset = 0x4, fixed_abs, tag = 'smem constant byte address 0x4 - core index']
  #allocation1 [shape = 'u32[144,128]{1,0:T(1,128)}', space=vmem, size = 0x12000, scoped, tag = 'internal scratch']
  %s0 = inlined_call_operand.hbm [shape: bf16[2,32,512], index: 0, kind: input, shape index: {}]
  %s1 = inlined_call_operand.hbm [shape: bf16[2,32,512], index: 1, kind: input, shape index: {}]
  %s2 = inlined_call_operand.hbm [shape: bf16[512,512], index: 2, kind: input, shape index: {}]
  %s3 = inlined_call_operand.vmem [shape: f32[1,512], index: 3, kind: input, shape index: {}]
  %s4 = inlined_call_operand.hbm [shape: bf16[512,512], index: 4, kind: input, shape index: {}]
  %s5 = inlined_call_operand.vmem [shape: f32[1,512], index: 5, kind: input, shape index: {}]
  %s6 = inlined_call_operand.hbm [shape: bf16[512,512], index: 6, kind: input, shape index: {}]
  %s7 = inlined_call_operand.vmem [shape: f32[1,512], index: 7, kind: input, shape index: {}]
  %s8 = inlined_call_operand.hbm [shape: bf16[512,512], index: 8, kind: input, shape index: {}]
  %s9 = inlined_call_operand.vmem [shape: f32[1,512], index: 9, kind: input, shape index: {}]
  %s10 = inlined_call_operand.hbm [shape: f32[2,8,128], index: 10, kind: output, shape index: {}]
  %s11 = sld [smem:[#allocation0]]
  $region74: #{tpu_custom_call.1} parent=0
    _
  %s13 = ssub.s32 1, %s11
  %s14 = scalar_select 0, %s13, %s11
  $region1: #{tpu_custom_call.1} parent=0
    #allocation2 [shape = 'u8[65536]{0}', space=vmem, size = 0x10000, scoped, tag = 'input window, operand 0, single buffered']
    #allocation3 [shape = 's32[1]{0}', space=sflag, size = 0x4, scoped, tag = 'scoped memory for tpu_custom_call.1']
    #allocation4 [shape = 's32[1]{0}', space=sflag, size = 0x4, scoped, tag = 'scoped memory for tpu_custom_call.1']
    #allocation5 [shape = 'u8[65536]{0}', space=vmem, size = 0x10000, scoped, tag = 'input window, operand 1, single buffered']
    #allocation6 [shape = 's32[1]{0}', space=sflag, size = 0x4, scoped, tag = 'scoped memory for tpu_custom_call.1']
    #allocation7 [shape = 'u8[524288]{0}', space=vmem, size = 0x80000, scoped, tag = 'input window, operand 2, single buffered']
    #allocation8 [shape = 'u8[524288]{0}', space=vmem, size = 0x80000, scoped, tag = 'input window, operand 4, single buffered']
    #allocation9 [shape = 's32[1]{0}', space=sflag, size = 0x4, scoped, tag = 'scoped memory for tpu_custom_call.1']
    #allocation10 [shape = 'u8[524288]{0}', space=vmem, size = 0x80000, scoped, tag = 'input window, operand 6, single buffered']
    #allocation11 [shape = 'u8[524288]{0}', space=vmem, size = 0x80000, scoped, tag = 'input window, operand 8, single buffered']
    #allocation12 [shape = 's32[1]{0}', space=sflag, size = 0x4, scoped, tag = 'scoped memory for tpu_custom_call.1']
    #allocation13 [shape = 'u8[8192]{0}', space=vmem, size = 0x2000, scoped, tag = 'output window, operand 0, single buffered']
    %15 = vsyncpa [#allocation3], 0
    %16 = vsyncpa [#allocation6], 0
    %17 = vsyncpa [#allocation9], 0
    %18 = vsyncpa [#allocation12], 0
    %19 = vsyncpa [#allocation4], 0
    // Predicated region
    $region2: #{tpu_custom_call.1} parent=1 // pred_check
      _
    $region3: #{tpu_custom_call.1} parent=1 // pred_check_branch
      %21 = sbr.rel (0) target = $region5
    $region4: #{tpu_custom_call.1} parent=1 // pred_region
      %s23 = ssub.s32 2048, 2048
      %24 = vsyncadd [#allocation3], %s23
      %s25 = sshll.u32 [#allocation2], 4
      %s26 = int_to_ptr.vmem [resolvable:$true] %s25
      %31 = dma.hbm_to_vmem [thread:$0]  %s0, 2048, %s26, [#allocation3], 256, 256, 16
    $region5: #{tpu_custom_call.1} parent=1 // pred_fallthru
      _
    // Predicated region
    $region6: #{tpu_custom_call.1} parent=1 // pred_check
      _
    $region7: #{tpu_custom_call.1} parent=1 // pred_check_branch
      %33 = sbr.rel (0) target = $region9
    $region8: #{tpu_custom_call.1} parent=1 // pred_region
      %s35 = ssub.s32 2048, 2048
      %36 = vsyncadd [#allocation6], %s35
      %s37 = sshll.u32 [#allocation5], 4
      %s38 = int_to_ptr.vmem [resolvable:$true] %s37
      %43 = dma.hbm_to_vmem [thread:$0]  %s1, 2048, %s38, [#allocation6], 256, 256, 16
    $region9: #{tpu_custom_call.1} parent=1 // pred_fallthru
      _
    // Predicated region
    $region10: #{tpu_custom_call.1} parent=1 // pred_check
      _
    $region11: #{tpu_custom_call.1} parent=1 // pred_check_branch
      %45 = sbr.rel (0) target = $region13
    $region12: #{tpu_custom_call.1} parent=1 // pred_region
      %s47 = ssub.s32 16384, 16384
      %48 = vsyncadd [#allocation6], %s47
      %s49 = sshll.u32 [#allocation7], 4
      %s50 = int_to_ptr.vmem [resolvable:$true] %s49
      %55 = dma.hbm_to_vmem [thread:$0]  %s2, 16384, %s50, [#allocation6], 256, 256, 16
    $region13: #{tpu_custom_call.1} parent=1 // pred_fallthru
      _
    // Predicated region
    $region14: #{tpu_custom_call.1} parent=1 // pred_check
      _
    $region15: #{tpu_custom_call.1} parent=1 // pred_check_branch
      %57 = sbr.rel (0) target = $region17
    $region16: #{tpu_custom_call.1} parent=1 // pred_region
      _
    $region17: #{tpu_custom_call.1} parent=1 // pred_fallthru
      _
    // Predicated region
    $region18: #{tpu_custom_call.1} parent=1 // pred_check
      _
    $region19: #{tpu_custom_call.1} parent=1 // pred_check_branch
      %59 = sbr.rel (0) target = $region21
    $region20: #{tpu_custom_call.1} parent=1 // pred_region
      %s61 = ssub.s32 16384, 16384
      %62 = vsyncadd [#allocation9], %s61
      %s63 = sshll.u32 [#allocation8], 4
      %s64 = int_to_ptr.vmem [resolvable:$true] %s63
      %69 = dma.hbm_to_vmem [thread:$0]  %s4, 16384, %s64, [#allocation9], 256, 256, 16
    $region21: #{tpu_custom_call.1} parent=1 // pred_fallthru
      _
    // Predicated region
    $region22: #{tpu_custom_call.1} parent=1 // pred_check
      _
    $region23: #{tpu_custom_call.1} parent=1 // pred_check_branch
      %71 = sbr.rel (0) target = $region25
    $region24: #{tpu_custom_call.1} parent=1 // pred_region
      _
    $region25: #{tpu_custom_call.1} parent=1 // pred_fallthru
      _
    // Predicated region
    $region26: #{tpu_custom_call.1} parent=1 // pred_check
      _
    $region27: #{tpu_custom_call.1} parent=1 // pred_check_branch
      %73 = sbr.rel (0) target = $region29
    $region28: #{tpu_custom_call.1} parent=1 // pred_region
      %s75 = ssub.s32 16384, 16384
      %76 = vsyncadd [#allocation9], %s75
      %s77 = sshll.u32 [#allocation10], 4
      %s78 = int_to_ptr.vmem [resolvable:$true] %s77
      %83 = dma.hbm_to_vmem [thread:$0]  %s6, 16384, %s78, [#allocation9], 256, 256, 16
    $region29: #{tpu_custom_call.1} parent=1 // pred_fallthru
      _
    // Predicated region
    $region30: #{tpu_custom_call.1} parent=1 // pred_check
      _
    $region31: #{tpu_custom_call.1} parent=1 // pred_check_branch
      %85 = sbr.rel (0) target = $region33
    $region32: #{tpu_custom_call.1} parent=1 // pred_region
      _
    $region33: #{tpu_custom_call.1} parent=1 // pred_fallthru
      _
    // Predicated region
    $region34: #{tpu_custom_call.1} parent=1 // pred_check
      _
    $region35: #{tpu_custom_call.1} parent=1 // pred_check_branch
      %87 = sbr.rel (0) target = $region37
    $region36: #{tpu_custom_call.1} parent=1 // pred_region
      %s89 = ssub.s32 16384, 16384
      %90 = vsyncadd [#allocation12], %s89
      %s91 = sshll.u32 [#allocation11], 4
      %s92 = int_to_ptr.vmem [resolvable:$true] %s91
      %97 = dma.hbm_to_vmem [thread:$0]  %s8, 16384, %s92, [#allocation12], 256, 256, 16
    $region37: #{tpu_custom_call.1} parent=1 // pred_fallthru
      _
    // Predicated region
    $region38: #{tpu_custom_call.1} parent=1 // pred_check
      _
    $region39: #{tpu_custom_call.1} parent=1 // pred_check_branch
      %99 = sbr.rel (0) target = $region41
    $region40: #{tpu_custom_call.1} parent=1 // pred_region
      _
    $region41: #{tpu_custom_call.1} parent=1 // pred_fallthru
      _
    // Predicated region
    $region42: #{tpu_custom_call.1} parent=1 // pred_check
      _
    $region43: #{tpu_custom_call.1} parent=1 // pred_check_branch
      %101 = sbr.rel (0) target = $region45
    $region44: #{tpu_custom_call.1} parent=1 // pred_region
      %102 = dma.done [#allocation3], 2048
    $region45: #{tpu_custom_call.1} parent=1 // pred_fallthru
      _
    // Predicated region
    $region46: #{tpu_custom_call.1} parent=1 // pred_check
      _
    $region47: #{tpu_custom_call.1} parent=1 // pred_check_branch
      %104 = sbr.rel (0) target = $region49
    $region48: #{tpu_custom_call.1} parent=1 // pred_region
      %105 = dma.done [#allocation6], 2048
    $region49: #{tpu_custom_call.1} parent=1 // pred_fallthru
      _
    // Predicated region
    $region50: #{tpu_custom_call.1} parent=1 // pred_check
      _
    $region51: #{tpu_custom_call.1} parent=1 // pred_check_branch
      %107 = sbr.rel (0) target = $region53
    $region52: #{tpu_custom_call.1} parent=1 // pred_region
      %108 = dma.done [#allocation6], 16384
    $region53: #{tpu_custom_call.1} parent=1 // pred_fallthru
      _
    // Predicated region
    $region54: #{tpu_custom_call.1} parent=1 // pred_check
      _
    $region55: #{tpu_custom_call.1} parent=1 // pred_check_branch
      %110 = sbr.rel (0) target = $region57
    $region56: #{tpu_custom_call.1} parent=1 // pred_region
      %111 = dma.done [#allocation9], 16384
    $region57: #{tpu_custom_call.1} parent=1 // pred_fallthru
      _
    // Predicated region
    $region58: #{tpu_custom_call.1} parent=1 // pred_check
      _
    $region59: #{tpu_custom_call.1} parent=1 // pred_check_branch
      %113 = sbr.rel (0) target = $region61
    $region60: #{tpu_custom_call.1} parent=1 // pred_region
      %114 = dma.done [#allocation9], 16384
    $region61: #{tpu_custom_call.1} parent=1 // pred_fallthru
      _
    // Predicated region
    $region62: #{tpu_custom_call.1} parent=1 // pred_check
      _
    $region63: #{tpu_custom_call.1} parent=1 // pred_check_branch
      %116 = sbr.rel (0) target = $region65
    $region64: #{tpu_custom_call.1} parent=1 // pred_region
      %117 = dma.done [#allocation12], 16384
    $region65: #{tpu_custom_call.1} parent=1 // pred_fallthru
      _
    %v119 = vld [vmem:[#allocation2] sm:$0xff]
    %v120 = vld [vmem:[#allocation2 + $0x8] sm:$0xff]
    %v121 = vld [vmem:[#allocation2 + $0x10] sm:$0xff]
    %v122 = vld [vmem:[#allocation2 + $0x18] sm:$0xff]
    %v123 = vld [vmem:[#allocation2 + $0x20] sm:$0xff]
    %v124 = vld [vmem:[#allocation2 + $0x28] sm:$0xff]
    %v125 = vld [vmem:[#allocation2 + $0x30] sm:$0xff]
    %v126 = vld [vmem:[#allocation2 + $0x38] sm:$0xff]
    %v127 = vld [vmem:[#allocation2 + $0x40] sm:$0xff]
    %v128 = vld [vmem:[#allocation2 + $0x48] sm:$0xff]
    %v129 = vld [vmem:[#allocation2 + $0x50] sm:$0xff]
    %v130 = vld [vmem:[#allocation2 + $0x58] sm:$0xff]
    %v131 = vld [vmem:[#allocation2 + $0x60] sm:$0xff]
    %v132 = vld [vmem:[#allocation2 + $0x68] sm:$0xff]
    %v133 = vld [vmem:[#allocation2 + $0x70] sm:$0xff]
    %v134 = vld [vmem:[#allocation2 + $0x78] sm:$0xff]
    %v135 = vld [vmem:[#allocation5] sm:$0xff]
    %v136 = vld [vmem:[#allocation5 + $0x8] sm:$0xff]
    %v137 = vld [vmem:[#allocation5 + $0x10] sm:$0xff]
    %v138 = vld [vmem:[#allocation5 + $0x18] sm:$0xff]
    %v139 = vld [vmem:[#allocation5 + $0x20] sm:$0xff]
    %v140 = vld [vmem:[#allocation5 + $0x28] sm:$0xff]
    %v141 = vld [vmem:[#allocation5 + $0x30] sm:$0xff]
    %v142 = vld [vmem:[#allocation5 + $0x38] sm:$0xff]
    %v143 = vld [vmem:[#allocation5 + $0x40] sm:$0xff]
    %v144 = vld [vmem:[#allocation5 + $0x48] sm:$0xff]
    %v145 = vld [vmem:[#allocation5 + $0x50] sm:$0xff]
    %v146 = vld [vmem:[#allocation5 + $0x58] sm:$0xff]
    %v147 = vld [vmem:[#allocation5 + $0x60] sm:$0xff]
    %v148 = vld [vmem:[#allocation5 + $0x68] sm:$0xff]
    %v149 = vld [vmem:[#allocation5 + $0x70] sm:$0xff]
    %v150 = vld [vmem:[#allocation5 + $0x78] sm:$0xff]
    %v151 = vld [vmem:[#allocation7] sm:$0xff]
    %v152 = vld [vmem:[#allocation7 + $0x8] sm:$0xff]
    %v153 = vld [vmem:[#allocation7 + $0x10] sm:$0xff]
    %v154 = vld [vmem:[#allocation7 + $0x18] sm:$0xff]
    %v155 = vld [vmem:[#allocation7 + $0x20] sm:$0xff]
    %v156 = vld [vmem:[#allocation7 + $0x28] sm:$0xff]
    %v157 = vld [vmem:[#allocation7 + $0x30] sm:$0xff]
    %v158 = vld [vmem:[#allocation7 + $0x38] sm:$0xff]
    %v159 = vld [vmem:[#allocation7 + $0x40] sm:$0xff]
    %v160 = vld [vmem:[#allocation7 + $0x48] sm:$0xff]
    %v161 = vld [vmem:[#allocation7 + $0x50] sm:$0xff]
    %v162 = vld [vmem:[#allocation7 + $0x58] sm:$0xff]
    %v163 = vld [vmem:[#allocation7 + $0x60] sm:$0xff]
    %v164 = vld [vmem:[#allocation7 + $0x68] sm:$0xff]
    %v165 = vld [vmem:[#allocation7 + $0x70] sm:$0xff]
    %v166 = vld [vmem:[#allocation7 + $0x78] sm:$0xff]
    %v167 = vld [vmem:[#allocation7 + $0x80] sm:$0xff]
    %v168 = vld [vmem:[#allocation7 + $0x88] sm:$0xff]
    %v169 = vld [vmem:[#allocation7 + $0x90] sm:$0xff]
    %v170 = vld [vmem:[#allocation7 + $0x98] sm:$0xff]
    %v171 = vld [vmem:[#allocation7 + $0xa0] sm:$0xff]
    %v172 = vld [vmem:[#allocation7 + $0xa8] sm:$0xff]
    %v173 = vld [vmem:[#allocation7 + $0xb0] sm:$0xff]
    %v174 = vld [vmem:[#allocation7 + $0xb8] sm:$0xff]
    %v175 = vld [vmem:[#allocation7 + $0xc0] sm:$0xff]
    %v176 = vld [vmem:[#allocation7 + $0xc8] sm:$0xff]
    %v177 = vld [vmem:[#allocation7 + $0xd0] sm:$0xff]
    %v178 = vld [vmem:[#allocation7 + $0xd8] sm:$0xff]
    %v179 = vld [vmem:[#allocation7 + $0xe0] sm:$0xff]
    %v180 = vld [vmem:[#allocation7 + $0xe8] sm:$0xff]
    %v181 = vld [vmem:[#allocation7 + $0xf0] sm:$0xff]
    %v182 = vld [vmem:[#allocation7 + $0xf8] sm:$0xff]
    %v183 = vld [vmem:[#allocation7 + $0x100] sm:$0xff]
    %v184 = vld [vmem:[#allocation7 + $0x108] sm:$0xff]
    %v185 = vld [vmem:[#allocation7 + $0x110] sm:$0xff]
    %v186 = vld [vmem:[#allocation7 + $0x118] sm:$0xff]
    %v187 = vld [vmem:[#allocation7 + $0x120] sm:$0xff]
    %v188 = vld [vmem:[#allocation7 + $0x128] sm:$0xff]
    %v189 = vld [vmem:[#allocation7 + $0x130] sm:$0xff]
    %v190 = vld [vmem:[#allocation7 + $0x138] sm:$0xff]
    %v191 = vld [vmem:[#allocation7 + $0x140] sm:$0xff]
    %v192 = vld [vmem:[#allocation7 + $0x148] sm:$0xff]
    %v193 = vld [vmem:[#allocation7 + $0x150] sm:$0xff]
    %v194 = vld [vmem:[#allocation7 + $0x158] sm:$0xff]
    %v195 = vld [vmem:[#allocation7 + $0x160] sm:$0xff]
    %v196 = vld [vmem:[#allocation7 + $0x168] sm:$0xff]
    %v197 = vld [vmem:[#allocation7 + $0x170] sm:$0xff]
    %v198 = vld [vmem:[#allocation7 + $0x178] sm:$0xff]
    %v199 = vld [vmem:[#allocation7 + $0x180] sm:$0xff]
    %v200 = vld [vmem:[#allocation7 + $0x188] sm:$0xff]
    %v201 = vld [vmem:[#allocation7 + $0x190] sm:$0xff]
    %v202 = vld [vmem:[#allocation7 + $0x198] sm:$0xff]
    %v203 = vld [vmem:[#allocation7 + $0x1a0] sm:$0xff]
    %v204 = vld [vmem:[#allocation7 + $0x1a8] sm:$0xff]
    %v205 = vld [vmem:[#allocation7 + $0x1b0] sm:$0xff]
    %v206 = vld [vmem:[#allocation7 + $0x1b8] sm:$0xff]
    %v207 = vld [vmem:[#allocation7 + $0x1c0] sm:$0xff]
    %v208 = vld [vmem:[#allocation7 + $0x1c8] sm:$0xff]
    %v209 = vld [vmem:[#allocation7 + $0x1d0] sm:$0xff]
    %v210 = vld [vmem:[#allocation7 + $0x1d8] sm:$0xff]
    %v211 = vld [vmem:[#allocation7 + $0x1e0] sm:$0xff]
    %v212 = vld [vmem:[#allocation7 + $0x1e8] sm:$0xff]
    %v213 = vld [vmem:[#allocation7 + $0x1f0] sm:$0xff]
    %v214 = vld [vmem:[#allocation7 + $0x1f8] sm:$0xff]
    %v215 = vld [vmem:[#allocation7 + $0x200] sm:$0xff]
    %v216 = vld [vmem:[#allocation7 + $0x208] sm:$0xff]
    %v217 = vld [vmem:[#allocation7 + $0x210] sm:$0xff]
    %v218 = vld [vmem:[#allocation7 + $0x218] sm:$0xff]
    %v219 = vld [vmem:[#allocation7 + $0x220] sm:$0xff]
    %v220 = vld [vmem:[#allocation7 + $0x228] sm:$0xff]
    %v221 = vld [vmem:[#allocation7 + $0x230] sm:$0xff]
    %v222 = vld [vmem:[#allocation7 + $0x238] sm:$0xff]
    %v223 = vld [vmem:[#allocation7 + $0x240] sm:$0xff]
    %v224 = vld [vmem:[#allocation7 + $0x248] sm:$0xff]
    %v225 = vld [vmem:[#allocation7 + $0x250] sm:$0xff]
    %v226 = vld [vmem:[#allocation7 + $0x258] sm:$0xff]
    %v227 = vld [vmem:[#allocation7 + $0x260] sm:$0xff]
    %v228 = vld [vmem:[#allocation7 + $0x268] sm:$0xff]
    %v229 = vld [vmem:[#allocation7 + $0x270] sm:$0xff]
    %v230 = vld [vmem:[#allocation7 + $0x278] sm:$0xff]
    %v231 = vld [vmem:[#allocation7 + $0x280] sm:$0xff]
    %v232 = vld [vmem:[#allocation7 + $0x288] sm:$0xff]
    %v233 = vld [vmem:[#allocation7 + $0x290] sm:$0xff]
    %v234 = vld [vmem:[#allocation7 + $0x298] sm:$0xff]
    %v235 = vld [vmem:[#allocation7 + $0x2a0] sm:$0xff]
    %v236 = vld [vmem:[#allocation7 + $0x2a8] sm:$0xff]
    %v237 = vld [vmem:[#allocation7 + $0x2b0] sm:$0xff]
    %v238 = vld [vmem:[#allocation7 + $0x2b8] sm:$0xff]
    %v239 = vld [vmem:[#allocation7 + $0x2c0] sm:$0xff]
    %v240 = vld [vmem:[#allocation7 + $0x2c8] sm:$0xff]
    %v241 = vld [vmem:[#allocation7 + $0x2d0] sm:$0xff]
    %v242 = vld [vmem:[#allocation7 + $0x2d8] sm:$0xff]
    %v243 = vld [vmem:[#allocation7 + $0x2e0] sm:$0xff]
    %v244 = vld [vmem:[#allocation7 + $0x2e8] sm:$0xff]
    %v245 = vld [vmem:[#allocation7 + $0x2f0] sm:$0xff]
    %v246 = vld [vmem:[#allocation7 + $0x2f8] sm:$0xff]
    %v247 = vld [vmem:[#allocation7 + $0x300] sm:$0xff]
    %v248 = vld [vmem:[#allocation7 + $0x308] sm:$0xff]
    %v249 = vld [vmem:[#allocation7 + $0x310] sm:$0xff]
    %v250 = vld [vmem:[#allocation7 + $0x318] sm:$0xff]
    %v251 = vld [vmem:[#allocation7 + $0x320] sm:$0xff]
    %v252 = vld [vmem:[#allocation7 + $0x328] sm:$0xff]
    %v253 = vld [vmem:[#allocation7 + $0x330] sm:$0xff]
    %v254 = vld [vmem:[#allocation7 + $0x338] sm:$0xff]
    %v255 = vld [vmem:[#allocation7 + $0x340] sm:$0xff]
    %v256 = vld [vmem:[#allocation7 + $0x348] sm:$0xff]
    %v257 = vld [vmem:[#allocation7 + $0x350] sm:$0xff]
    %v258 = vld [vmem:[#allocation7 + $0x358] sm:$0xff]
    %v259 = vld [vmem:[#allocation7 + $0x360] sm:$0xff]
    %v260 = vld [vmem:[#allocation7 + $0x368] sm:$0xff]
    %v261 = vld [vmem:[#allocation7 + $0x370] sm:$0xff]
    %v262 = vld [vmem:[#allocation7 + $0x378] sm:$0xff]
    %v263 = vld [vmem:[#allocation7 + $0x380] sm:$0xff]
    %v264 = vld [vmem:[#allocation7 + $0x388] sm:$0xff]
    %v265 = vld [vmem:[#allocation7 + $0x390] sm:$0xff]
    %v266 = vld [vmem:[#allocation7 + $0x398] sm:$0xff]
    %v267 = vld [vmem:[#allocation7 + $0x3a0] sm:$0xff]
    %v268 = vld [vmem:[#allocation7 + $0x3a8] sm:$0xff]
    %v269 = vld [vmem:[#allocation7 + $0x3b0] sm:$0xff]
    %v270 = vld [vmem:[#allocation7 + $0x3b8] sm:$0xff]
    %v271 = vld [vmem:[#allocation7 + $0x3c0] sm:$0xff]
    %v272 = vld [vmem:[#allocation7 + $0x3c8] sm:$0xff]
    %v273 = vld [vmem:[#allocation7 + $0x3d0] sm:$0xff]
    %v274 = vld [vmem:[#allocation7 + $0x3d8] sm:$0xff]
    %v275 = vld [vmem:[#allocation7 + $0x3e0] sm:$0xff]
    %v276 = vld [vmem:[#allocation7 + $0x3e8] sm:$0xff]
    %v277 = vld [vmem:[#allocation7 + $0x3f0] sm:$0xff]
    %v278 = vld [vmem:[#allocation7 + $0x3f8] sm:$0xff]
    %v279 = vld [vmem:[%s3] sm:$0xf]
    %v280 = vld [vmem:[#allocation8] sm:$0xff]
    %v281 = vld [vmem:[#allocation8 + $0x8] sm:$0xff]
    %v282 = vld [vmem:[#allocation8 + $0x10] sm:$0xff]
    %v283 = vld [vmem:[#allocation8 + $0x18] sm:$0xff]
    %v284 = vld [vmem:[#allocation8 + $0x20] sm:$0xff]
    %v285 = vld [vmem:[#allocation8 + $0x28] sm:$0xff]
    %v286 = vld [vmem:[#allocation8 + $0x30] sm:$0xff]
    %v287 = vld [vmem:[#allocation8 + $0x38] sm:$0xff]
    %v288 = vld [vmem:[#allocation8 + $0x40] sm:$0xff]
    %v289 = vld [vmem:[#allocation8 + $0x48] sm:$0xff]
    %v290 = vld [vmem:[#allocation8 + $0x50] sm:$0xff]
    %v291 = vld [vmem:[#allocation8 + $0x58] sm:$0xff]
    %v292 = vld [vmem:[#allocation8 + $0x60] sm:$0xff]
    %v293 = vld [vmem:[#allocation8 + $0x68] sm:$0xff]
    %v294 = vld [vmem:[#allocation8 + $0x70] sm:$0xff]
    %v295 = vld [vmem:[#allocation8 + $0x78] sm:$0xff]
    %v296 = vld [vmem:[#allocation8 + $0x80] sm:$0xff]
    %v297 = vld [vmem:[#allocation8 + $0x88] sm:$0xff]
    %v298 = vld [vmem:[#allocation8 + $0x90] sm:$0xff]
    %v299 = vld [vmem:[#allocation8 + $0x98] sm:$0xff]
    %v300 = vld [vmem:[#allocation8 + $0xa0] sm:$0xff]
    %v301 = vld [vmem:[#allocation8 + $0xa8] sm:$0xff]
    %v302 = vld [vmem:[#allocation8 + $0xb0] sm:$0xff]
    %v303 = vld [vmem:[#allocation8 + $0xb8] sm:$0xff]
    %v304 = vld [vmem:[#allocation8 + $0xc0] sm:$0xff]
    %v305 = vld [vmem:[#allocation8 + $0xc8] sm:$0xff]
    %v306 = vld [vmem:[#allocation8 + $0xd0] sm:$0xff]
    %v307 = vld [vmem:[#allocation8 + $0xd8] sm:$0xff]
    %v308 = vld [vmem:[#allocation8 + $0xe0] sm:$0xff]
    %v309 = vld [vmem:[#allocation8 + $0xe8] sm:$0xff]
    %v310 = vld [vmem:[#allocation8 + $0xf0] sm:$0xff]
    %v311 = vld [vmem:[#allocation8 + $0xf8] sm:$0xff]
    %v312 = vld [vmem:[#allocation8 + $0x100] sm:$0xff]
    %v313 = vld [vmem:[#allocation8 + $0x108] sm:$0xff]
    %v314 = vld [vmem:[#allocation8 + $0x110] sm:$0xff]
    %v315 = vld [vmem:[#allocation8 + $0x118] sm:$0xff]
    %v316 = vld [vmem:[#allocation8 + $0x120] sm:$0xff]
    %v317 = vld [vmem:[#allocation8 + $0x128] sm:$0xff]
    %v318 = vld [vmem:[#allocation8 + $0x130] sm:$0xff]
    %v319 = vld [vmem:[#allocation8 + $0x138] sm:$0xff]
    %v320 = vld [vmem:[#allocation8 + $0x140] sm:$0xff]
    %v321 = vld [vmem:[#allocation8 + $0x148] sm:$0xff]
    %v322 = vld [vmem:[#allocation8 + $0x150] sm:$0xff]
    %v323 = vld [vmem:[#allocation8 + $0x158] sm:$0xff]
    %v324 = vld [vmem:[#allocation8 + $0x160] sm:$0xff]
    %v325 = vld [vmem:[#allocation8 + $0x168] sm:$0xff]
    %v326 = vld [vmem:[#allocation8 + $0x170] sm:$0xff]
    %v327 = vld [vmem:[#allocation8 + $0x178] sm:$0xff]
    %v328 = vld [vmem:[#allocation8 + $0x180] sm:$0xff]
    %v329 = vld [vmem:[#allocation8 + $0x188] sm:$0xff]
    %v330 = vld [vmem:[#allocation8 + $0x190] sm:$0xff]
    %v331 = vld [vmem:[#allocation8 + $0x198] sm:$0xff]
    %v332 = vld [vmem:[#allocation8 + $0x1a0] sm:$0xff]
    %v333 = vld [vmem:[#allocation8 + $0x1a8] sm:$0xff]
    %v334 = vld [vmem:[#allocation8 + $0x1b0] sm:$0xff]
    %v335 = vld [vmem:[#allocation8 + $0x1b8] sm:$0xff]
    %v336 = vld [vmem:[#allocation8 + $0x1c0] sm:$0xff]
    %v337 = vld [vmem:[#allocation8 + $0x1c8] sm:$0xff]
    %v338 = vld [vmem:[#allocation8 + $0x1d0] sm:$0xff]
    %v339 = vld [vmem:[#allocation8 + $0x1d8] sm:$0xff]
    %v340 = vld [vmem:[#allocation8 + $0x1e0] sm:$0xff]
    %v341 = vld [vmem:[#allocation8 + $0x1e8] sm:$0xff]
    %v342 = vld [vmem:[#allocation8 + $0x1f0] sm:$0xff]
    %v343 = vld [vmem:[#allocation8 + $0x1f8] sm:$0xff]
    %v344 = vld [vmem:[#allocation8 + $0x200] sm:$0xff]
    %v345 = vld [vmem:[#allocation8 + $0x208] sm:$0xff]
    %v346 = vld [vmem:[#allocation8 + $0x210] sm:$0xff]
    %v347 = vld [vmem:[#allocation8 + $0x218] sm:$0xff]
    %v348 = vld [vmem:[#allocation8 + $0x220] sm:$0xff]
    %v349 = vld [vmem:[#allocation8 + $0x228] sm:$0xff]
    %v350 = vld [vmem:[#allocation8 + $0x230] sm:$0xff]
    %v351 = vld [vmem:[#allocation8 + $0x238] sm:$0xff]
    %v352 = vld [vmem:[#allocation8 + $0x240] sm:$0xff]
    %v353 = vld [vmem:[#allocation8 + $0x248] sm:$0xff]
    %v354 = vld [vmem:[#allocation8 + $0x250] sm:$0xff]
    %v355 = vld [vmem:[#allocation8 + $0x258] sm:$0xff]
    %v356 = vld [vmem:[#allocation8 + $0x260] sm:$0xff]
    %v357 = vld [vmem:[#allocation8 + $0x268] sm:$0xff]
    %v358 = vld [vmem:[#allocation8 + $0x270] sm:$0xff]
    %v359 = vld [vmem:[#allocation8 + $0x278] sm:$0xff]
    %v360 = vld [vmem:[#allocation8 + $0x280] sm:$0xff]
    %v361 = vld [vmem:[#allocation8 + $0x288] sm:$0xff]
    %v362 = vld [vmem:[#allocation8 + $0x290] sm:$0xff]
    %v363 = vld [vmem:[#allocation8 + $0x298] sm:$0xff]
    %v364 = vld [vmem:[#allocation8 + $0x2a0] sm:$0xff]
    %v365 = vld [vmem:[#allocation8 + $0x2a8] sm:$0xff]
    %v366 = vld [vmem:[#allocation8 + $0x2b0] sm:$0xff]
    %v367 = vld [vmem:[#allocation8 + $0x2b8] sm:$0xff]
    %v368 = vld [vmem:[#allocation8 + $0x2c0] sm:$0xff]
    %v369 = vld [vmem:[#allocation8 + $0x2c8] sm:$0xff]
    %v370 = vld [vmem:[#allocation8 + $0x2d0] sm:$0xff]
    %v371 = vld [vmem:[#allocation8 + $0x2d8] sm:$0xff]
    %v372 = vld [vmem:[#allocation8 + $0x2e0] sm:$0xff]
    %v373 = vld [vmem:[#allocation8 + $0x2e8] sm:$0xff]
    %v374 = vld [vmem:[#allocation8 + $0x2f0] sm:$0xff]
    %v375 = vld [vmem:[#allocation8 + $0x2f8] sm:$0xff]
    %v376 = vld [vmem:[#allocation8 + $0x300] sm:$0xff]
    %v377 = vld [vmem:[#allocation8 + $0x308] sm:$0xff]
    %v378 = vld [vmem:[#allocation8 + $0x310] sm:$0xff]
    %v379 = vld [vmem:[#allocation8 + $0x318] sm:$0xff]
    %v380 = vld [vmem:[#allocation8 + $0x320] sm:$0xff]
    %v381 = vld [vmem:[#allocation8 + $0x328] sm:$0xff]
    %v382 = vld [vmem:[#allocation8 + $0x330] sm:$0xff]
    %v383 = vld [vmem:[#allocation8 + $0x338] sm:$0xff]
    %v384 = vld [vmem:[#allocation8 + $0x340] sm:$0xff]
    %v385 = vld [vmem:[#allocation8 + $0x348] sm:$0xff]
    %v386 = vld [vmem:[#allocation8 + $0x350] sm:$0xff]
    %v387 = vld [vmem:[#allocation8 + $0x358] sm:$0xff]
    %v388 = vld [vmem:[#allocation8 + $0x360] sm:$0xff]
    %v389 = vld [vmem:[#allocation8 + $0x368] sm:$0xff]
    %v390 = vld [vmem:[#allocation8 + $0x370] sm:$0xff]
    %v391 = vld [vmem:[#allocation8 + $0x378] sm:$0xff]
    %v392 = vld [vmem:[#allocation8 + $0x380] sm:$0xff]
    %v393 = vld [vmem:[#allocation8 + $0x388] sm:$0xff]
    %v394 = vld [vmem:[#allocation8 + $0x390] sm:$0xff]
    %v395 = vld [vmem:[#allocation8 + $0x398] sm:$0xff]
    %v396 = vld [vmem:[#allocation8 + $0x3a0] sm:$0xff]
    %v397 = vld [vmem:[#allocation8 + $0x3a8] sm:$0xff]
    %v398 = vld [vmem:[#allocation8 + $0x3b0] sm:$0xff]
    %v399 = vld [vmem:[#allocation8 + $0x3b8] sm:$0xff]
    %v400 = vld [vmem:[#allocation8 + $0x3c0] sm:$0xff]
    %v401 = vld [vmem:[#allocation8 + $0x3c8] sm:$0xff]
    %v402 = vld [vmem:[#allocation8 + $0x3d0] sm:$0xff]
    %v403 = vld [vmem:[#allocation8 + $0x3d8] sm:$0xff]
    %v404 = vld [vmem:[#allocation8 + $0x3e0] sm:$0xff]
    %v405 = vld [vmem:[#allocation8 + $0x3e8] sm:$0xff]
    %v406 = vld [vmem:[#allocation8 + $0x3f0] sm:$0xff]
    %v407 = vld [vmem:[#allocation8 + $0x3f8] sm:$0xff]
    %v408 = vld [vmem:[%s5] sm:$0xf]
    %v410 = vlaneseq
    %v411 = vshrl.u32 %v410, 7
    %v412 = vsub.s32 0, %v411
    %v413 = vrot.slane %v279, %v412
    %v414 = vlaneseq
    %v415 = vshrl.u32 %v414, 7
    %v416 = vsub.s32 1, %v415
    %v417 = vrot.slane %v279, %v416
    %v418 = vlaneseq
    %v419 = vshrl.u32 %v418, 7
    %v420 = vsub.s32 2, %v419
    %v421 = vrot.slane %v279, %v420
    %v422 = vlaneseq
    %v423 = vshrl.u32 %v422, 7
    %v424 = vsub.s32 3, %v423
    %v425 = vrot.slane %v279, %v424
    %v446 = vunpack.c.l.b16 %v119
    %v447 = vunpack.c.h.b16 %v119
    %v448 = vunpack.c.l.b16 %v120
    %v449 = vunpack.c.h.b16 %v120
    %v450 = vunpack.c.l.b16 %v121
    %v451 = vunpack.c.h.b16 %v121
    %v452 = vunpack.c.l.b16 %v122
    %v453 = vunpack.c.h.b16 %v122
    %v454 = vunpack.c.l.b16 %v123
    %v455 = vunpack.c.h.b16 %v123
    %v456 = vunpack.c.l.b16 %v124
    %v457 = vunpack.c.h.b16 %v124
    %v458 = vunpack.c.l.b16 %v125
    %v459 = vunpack.c.h.b16 %v125
    %v460 = vunpack.c.l.b16 %v126
    %v461 = vunpack.c.h.b16 %v126
    %v462 = vunpack.c.l.b16 %v127
    %v463 = vunpack.c.h.b16 %v127
    %v464 = vunpack.c.l.b16 %v128
    %v465 = vunpack.c.h.b16 %v128
    %v466 = vunpack.c.l.b16 %v129
    %v467 = vunpack.c.h.b16 %v129
    %v468 = vunpack.c.l.b16 %v130
    %v469 = vunpack.c.h.b16 %v130
    %v470 = vunpack.c.l.b16 %v131
    %v471 = vunpack.c.h.b16 %v131
    %v472 = vunpack.c.l.b16 %v132
    %v473 = vunpack.c.h.b16 %v132
    %v474 = vunpack.c.l.b16 %v133
    %v475 = vunpack.c.h.b16 %v133
    %v476 = vunpack.c.l.b16 %v134
    %v477 = vunpack.c.h.b16 %v134
    %v478 = vpack.c.b16 %v450, %v446
    %v479 = vpack.c.b16 %v451, %v447
    %v480 = vpack.c.b16 %v452, %v448
    %v481 = vpack.c.b16 %v453, %v449
    %v482 = vpack.c.b16 %v458, %v454
    %v483 = vpack.c.b16 %v459, %v455
    %v484 = vpack.c.b16 %v460, %v456
    %v485 = vpack.c.b16 %v461, %v457
    %v486 = vpack.c.b16 %v466, %v462
    %v487 = vpack.c.b16 %v467, %v463
    %v488 = vpack.c.b16 %v468, %v464
    %v489 = vpack.c.b16 %v469, %v465
    %v490 = vpack.c.b16 %v474, %v470
    %v491 = vpack.c.b16 %v475, %v471
    %v492 = vpack.c.b16 %v476, %v472
    %v493 = vpack.c.b16 %v477, %v473
    %v638 = vunpack.c.l.b16 %v151
    %v639 = vunpack.c.h.b16 %v151
    %v640 = vunpack.c.l.b16 %v152
    %v641 = vunpack.c.h.b16 %v152
    %v642 = vunpack.c.l.b16 %v153
    %v643 = vunpack.c.h.b16 %v153
    %v644 = vunpack.c.l.b16 %v154
    %v645 = vunpack.c.h.b16 %v154
    %v646 = vunpack.c.l.b16 %v155
    %v647 = vunpack.c.h.b16 %v155
    %v648 = vunpack.c.l.b16 %v156
    %v649 = vunpack.c.h.b16 %v156
    %v650 = vunpack.c.l.b16 %v157
    %v651 = vunpack.c.h.b16 %v157
    %v652 = vunpack.c.l.b16 %v158
    %v653 = vunpack.c.h.b16 %v158
    %v654 = vunpack.c.l.b16 %v159
    %v655 = vunpack.c.h.b16 %v159
    %v656 = vunpack.c.l.b16 %v160
    %v657 = vunpack.c.h.b16 %v160
    %v658 = vunpack.c.l.b16 %v161
    %v659 = vunpack.c.h.b16 %v161
    %v660 = vunpack.c.l.b16 %v162
    %v661 = vunpack.c.h.b16 %v162
    %v662 = vunpack.c.l.b16 %v163
    %v663 = vunpack.c.h.b16 %v163
    %v664 = vunpack.c.l.b16 %v164
    %v665 = vunpack.c.h.b16 %v164
    %v666 = vunpack.c.l.b16 %v165
    %v667 = vunpack.c.h.b16 %v165
    %v668 = vunpack.c.l.b16 %v166
    %v669 = vunpack.c.h.b16 %v166
    %v670 = vunpack.c.l.b16 %v167
    %v671 = vunpack.c.h.b16 %v167
    %v672 = vunpack.c.l.b16 %v168
    %v673 = vunpack.c.h.b16 %v168
    %v674 = vunpack.c.l.b16 %v169
    %v675 = vunpack.c.h.b16 %v169
    %v676 = vunpack.c.l.b16 %v170
    %v677 = vunpack.c.h.b16 %v170
    %v678 = vunpack.c.l.b16 %v171
    %v679 = vunpack.c.h.b16 %v171
    %v680 = vunpack.c.l.b16 %v172
    %v681 = vunpack.c.h.b16 %v172
    %v682 = vunpack.c.l.b16 %v173
    %v683 = vunpack.c.h.b16 %v173
    %v684 = vunpack.c.l.b16 %v174
    %v685 = vunpack.c.h.b16 %v174
    %v686 = vunpack.c.l.b16 %v175
    %v687 = vunpack.c.h.b16 %v175
    %v688 = vunpack.c.l.b16 %v176
    %v689 = vunpack.c.h.b16 %v176
    %v690 = vunpack.c.l.b16 %v177
    %v691 = vunpack.c.h.b16 %v177
    %v692 = vunpack.c.l.b16 %v178
    %v693 = vunpack.c.h.b16 %v178
    %v694 = vunpack.c.l.b16 %v179
    %v695 = vunpack.c.h.b16 %v179
    %v696 = vunpack.c.l.b16 %v180
    %v697 = vunpack.c.h.b16 %v180
    %v698 = vunpack.c.l.b16 %v181
    %v699 = vunpack.c.h.b16 %v181
    %v700 = vunpack.c.l.b16 %v182
    %v701 = vunpack.c.h.b16 %v182
    %v702 = vunpack.c.l.b16 %v183
    %v703 = vunpack.c.h.b16 %v183
    %v704 = vunpack.c.l.b16 %v184
    %v705 = vunpack.c.h.b16 %v184
    %v706 = vunpack.c.l.b16 %v185
    %v707 = vunpack.c.h.b16 %v185
    %v708 = vunpack.c.l.b16 %v186
    %v709 = vunpack.c.h.b16 %v186
    %v710 = vunpack.c.l.b16 %v187
    %v711 = vunpack.c.h.b16 %v187
    %v712 = vunpack.c.l.b16 %v188
    %v713 = vunpack.c.h.b16 %v188
    %v714 = vunpack.c.l.b16 %v189
    %v715 = vunpack.c.h.b16 %v189
    %v716 = vunpack.c.l.b16 %v190
    %v717 = vunpack.c.h.b16 %v190
    %v718 = vunpack.c.l.b16 %v191
    %v719 = vunpack.c.h.b16 %v191
    %v720 = vunpack.c.l.b16 %v192
    %v721 = vunpack.c.h.b16 %v192
    %v722 = vunpack.c.l.b16 %v193
    %v723 = vunpack.c.h.b16 %v193
    %v724 = vunpack.c.l.b16 %v194
    %v725 = vunpack.c.h.b16 %v194
    %v726 = vunpack.c.l.b16 %v195
    %v727 = vunpack.c.h.b16 %v195
    %v728 = vunpack.c.l.b16 %v196
    %v729 = vunpack.c.h.b16 %v196
    %v730 = vunpack.c.l.b16 %v197
    %v731 = vunpack.c.h.b16 %v197
    %v732 = vunpack.c.l.b16 %v198
    %v733 = vunpack.c.h.b16 %v198
    %v734 = vunpack.c.l.b16 %v199
    %v735 = vunpack.c.h.b16 %v199
    %v736 = vunpack.c.l.b16 %v200
    %v737 = vunpack.c.h.b16 %v200
    %v738 = vunpack.c.l.b16 %v201
    %v739 = vunpack.c.h.b16 %v201
    %v740 = vunpack.c.l.b16 %v202
    %v741 = vunpack.c.h.b16 %v202
    %v742 = vunpack.c.l.b16 %v203
    %v743 = vunpack.c.h.b16 %v203
    %v744 = vunpack.c.l.b16 %v204
    %v745 = vunpack.c.h.b16 %v204
    %v746 = vunpack.c.l.b16 %v205
    %v747 = vunpack.c.h.b16 %v205
    %v748 = vunpack.c.l.b16 %v206
    %v749 = vunpack.c.h.b16 %v206
    %v750 = vunpack.c.l.b16 %v207
    %v751 = vunpack.c.h.b16 %v207
    %v752 = vunpack.c.l.b16 %v208
    %v753 = vunpack.c.h.b16 %v208
    %v754 = vunpack.c.l.b16 %v209
    %v755 = vunpack.c.h.b16 %v209
    %v756 = vunpack.c.l.b16 %v210
    %v757 = vunpack.c.h.b16 %v210
    %v758 = vunpack.c.l.b16 %v211
    %v759 = vunpack.c.h.b16 %v211
    %v760 = vunpack.c.l.b16 %v212
    %v761 = vunpack.c.h.b16 %v212
    %v762 = vunpack.c.l.b16 %v213
    %v763 = vunpack.c.h.b16 %v213
    %v764 = vunpack.c.l.b16 %v214
    %v765 = vunpack.c.h.b16 %v214
    %v766 = vunpack.c.l.b16 %v215
    %v767 = vunpack.c.h.b16 %v215
    %v768 = vunpack.c.l.b16 %v216
    %v769 = vunpack.c.h.b16 %v216
    %v770 = vunpack.c.l.b16 %v217
    %v771 = vunpack.c.h.b16 %v217
    %v772 = vunpack.c.l.b16 %v218
    %v773 = vunpack.c.h.b16 %v218
    %v774 = vunpack.c.l.b16 %v219
    %v775 = vunpack.c.h.b16 %v219
    %v776 = vunpack.c.l.b16 %v220
    %v777 = vunpack.c.h.b16 %v220
    %v778 = vunpack.c.l.b16 %v221
    %v779 = vunpack.c.h.b16 %v221
    %v780 = vunpack.c.l.b16 %v222
    %v781 = vunpack.c.h.b16 %v222
    %v782 = vunpack.c.l.b16 %v223
    %v783 = vunpack.c.h.b16 %v223
    %v784 = vunpack.c.l.b16 %v224
    %v785 = vunpack.c.h.b16 %v224
    %v786 = vunpack.c.l.b16 %v225
    %v787 = vunpack.c.h.b16 %v225
    %v788 = vunpack.c.l.b16 %v226
    %v789 = vunpack.c.h.b16 %v226
    %v790 = vunpack.c.l.b16 %v227
    %v791 = vunpack.c.h.b16 %v227
    %v792 = vunpack.c.l.b16 %v228
    %v793 = vunpack.c.h.b16 %v228
    %v794 = vunpack.c.l.b16 %v229
    %v795 = vunpack.c.h.b16 %v229
    %v796 = vunpack.c.l.b16 %v230
    %v797 = vunpack.c.h.b16 %v230
    %v798 = vunpack.c.l.b16 %v231
    %v799 = vunpack.c.h.b16 %v231
    %v800 = vunpack.c.l.b16 %v232
    %v801 = vunpack.c.h.b16 %v232
    %v802 = vunpack.c.l.b16 %v233
    %v803 = vunpack.c.h.b16 %v233
    %v804 = vunpack.c.l.b16 %v234
    %v805 = vunpack.c.h.b16 %v234
    %v806 = vunpack.c.l.b16 %v235
    %v807 = vunpack.c.h.b16 %v235
    %v808 = vunpack.c.l.b16 %v236
    %v809 = vunpack.c.h.b16 %v236
    %v810 = vunpack.c.l.b16 %v237
    %v811 = vunpack.c.h.b16 %v237
    %v812 = vunpack.c.l.b16 %v238
    %v813 = vunpack.c.h.b16 %v238
    %v814 = vunpack.c.l.b16 %v239
    %v815 = vunpack.c.h.b16 %v239
    %v816 = vunpack.c.l.b16 %v240
    %v817 = vunpack.c.h.b16 %v240
    %v818 = vunpack.c.l.b16 %v241
    %v819 = vunpack.c.h.b16 %v241
    %v820 = vunpack.c.l.b16 %v242
    %v821 = vunpack.c.h.b16 %v242
    %v822 = vunpack.c.l.b16 %v243
    %v823 = vunpack.c.h.b16 %v243
    %v824 = vunpack.c.l.b16 %v244
    %v825 = vunpack.c.h.b16 %v244
    %v826 = vunpack.c.l.b16 %v245
    %v827 = vunpack.c.h.b16 %v245
    %v828 = vunpack.c.l.b16 %v246
    %v829 = vunpack.c.h.b16 %v246
    %v830 = vunpack.c.l.b16 %v247
    %v831 = vunpack.c.h.b16 %v247
    %v832 = vunpack.c.l.b16 %v248
    %v833 = vunpack.c.h.b16 %v248
    %v834 = vunpack.c.l.b16 %v249
    %v835 = vunpack.c.h.b16 %v249
    %v836 = vunpack.c.l.b16 %v250
    %v837 = vunpack.c.h.b16 %v250
    %v838 = vunpack.c.l.b16 %v251
    %v839 = vunpack.c.h.b16 %v251
    %v840 = vunpack.c.l.b16 %v252
    %v841 = vunpack.c.h.b16 %v252
    %v842 = vunpack.c.l.b16 %v253
    %v843 = vunpack.c.h.b16 %v253
    %v844 = vunpack.c.l.b16 %v254
    %v845 = vunpack.c.h.b16 %v254
    %v846 = vunpack.c.l.b16 %v255
    %v847 = vunpack.c.h.b16 %v255
    %v848 = vunpack.c.l.b16 %v256
    %v849 = vunpack.c.h.b16 %v256
    %v850 = vunpack.c.l.b16 %v257
    %v851 = vunpack.c.h.b16 %v257
    %v852 = vunpack.c.l.b16 %v258
    %v853 = vunpack.c.h.b16 %v258
    %v854 = vunpack.c.l.b16 %v259
    %v855 = vunpack.c.h.b16 %v259
    %v856 = vunpack.c.l.b16 %v260
    %v857 = vunpack.c.h.b16 %v260
    %v858 = vunpack.c.l.b16 %v261
    %v859 = vunpack.c.h.b16 %v261
    %v860 = vunpack.c.l.b16 %v262
    %v861 = vunpack.c.h.b16 %v262
    %v862 = vunpack.c.l.b16 %v263
    %v863 = vunpack.c.h.b16 %v263
    %v864 = vunpack.c.l.b16 %v264
    %v865 = vunpack.c.h.b16 %v264
    %v866 = vunpack.c.l.b16 %v265
    %v867 = vunpack.c.h.b16 %v265
    %v868 = vunpack.c.l.b16 %v266
    %v869 = vunpack.c.h.b16 %v266
    %v870 = vunpack.c.l.b16 %v267
    %v871 = vunpack.c.h.b16 %v267
    %v872 = vunpack.c.l.b16 %v268
    %v873 = vunpack.c.h.b16 %v268
    %v874 = vunpack.c.l.b16 %v269
    %v875 = vunpack.c.h.b16 %v269
    %v876 = vunpack.c.l.b16 %v270
    %v877 = vunpack.c.h.b16 %v270
    %v878 = vunpack.c.l.b16 %v271
    %v879 = vunpack.c.h.b16 %v271
    %v880 = vunpack.c.l.b16 %v272
    %v881 = vunpack.c.h.b16 %v272
    %v882 = vunpack.c.l.b16 %v273
    %v883 = vunpack.c.h.b16 %v273
    %v884 = vunpack.c.l.b16 %v274
    %v885 = vunpack.c.h.b16 %v274
    %v886 = vunpack.c.l.b16 %v275
    %v887 = vunpack.c.h.b16 %v275
    %v888 = vunpack.c.l.b16 %v276
    %v889 = vunpack.c.h.b16 %v276
    %v890 = vunpack.c.l.b16 %v277
    %v891 = vunpack.c.h.b16 %v277
    %v892 = vunpack.c.l.b16 %v278
    %v893 = vunpack.c.h.b16 %v278
    %v894 = vpack.c.b16 %v642, %v638
    %v895 = vpack.c.b16 %v643, %v639
    %v896 = vpack.c.b16 %v644, %v640
    %v897 = vpack.c.b16 %v645, %v641
    %v898 = vpack.c.b16 %v650, %v646
    %v899 = vpack.c.b16 %v651, %v647
    %v900 = vpack.c.b16 %v652, %v648
    %v901 = vpack.c.b16 %v653, %v649
    %v902 = vpack.c.b16 %v658, %v654
    %v903 = vpack.c.b16 %v659, %v655
    %v904 = vpack.c.b16 %v660, %v656
    %v905 = vpack.c.b16 %v661, %v657
    %v906 = vpack.c.b16 %v666, %v662
    %v907 = vpack.c.b16 %v667, %v663
    %v908 = vpack.c.b16 %v668, %v664
    %v909 = vpack.c.b16 %v669, %v665
    %v910 = vpack.c.b16 %v674, %v670
    %v911 = vpack.c.b16 %v675, %v671
    %v912 = vpack.c.b16 %v676, %v672
    %v913 = vpack.c.b16 %v677, %v673
    %v914 = vpack.c.b16 %v682, %v678
    %v915 = vpack.c.b16 %v683, %v679
    %v916 = vpack.c.b16 %v684, %v680
    %v917 = vpack.c.b16 %v685, %v681
    %v918 = vpack.c.b16 %v690, %v686
    %v919 = vpack.c.b16 %v691, %v687
    %v920 = vpack.c.b16 %v692, %v688
    %v921 = vpack.c.b16 %v693, %v689
    %v922 = vpack.c.b16 %v698, %v694
    %v923 = vpack.c.b16 %v699, %v695
    %v924 = vpack.c.b16 %v700, %v696
    %v925 = vpack.c.b16 %v701, %v697
    %v926 = vpack.c.b16 %v706, %v702
    %v927 = vpack.c.b16 %v707, %v703
    %v928 = vpack.c.b16 %v708, %v704
    %v929 = vpack.c.b16 %v709, %v705
    %v930 = vpack.c.b16 %v714, %v710
    %v931 = vpack.c.b16 %v715, %v711
    %v932 = vpack.c.b16 %v716, %v712
    %v933 = vpack.c.b16 %v717, %v713
    %v934 = vpack.c.b16 %v722, %v718
    %v935 = vpack.c.b16 %v723, %v719
    %v936 = vpack.c.b16 %v724, %v720
    %v937 = vpack.c.b16 %v725, %v721
    %v938 = vpack.c.b16 %v730, %v726
    %v939 = vpack.c.b16 %v731, %v727
    %v940 = vpack.c.b16 %v732, %v728
    %v941 = vpack.c.b16 %v733, %v729
    %v942 = vpack.c.b16 %v738, %v734
    %v943 = vpack.c.b16 %v739, %v735
    %v944 = vpack.c.b16 %v740, %v736
    %v945 = vpack.c.b16 %v741, %v737
    %v946 = vpack.c.b16 %v746, %v742
    %v947 = vpack.c.b16 %v747, %v743
    %v948 = vpack.c.b16 %v748, %v744
    %v949 = vpack.c.b16 %v749, %v745
    %v950 = vpack.c.b16 %v754, %v750
    %v951 = vpack.c.b16 %v755, %v751
    %v952 = vpack.c.b16 %v756, %v752
    %v953 = vpack.c.b16 %v757, %v753
    %v954 = vpack.c.b16 %v762, %v758
    %v955 = vpack.c.b16 %v763, %v759
    %v956 = vpack.c.b16 %v764, %v760
    %v957 = vpack.c.b16 %v765, %v761
    %v958 = vpack.c.b16 %v770, %v766
    %v959 = vpack.c.b16 %v771, %v767
    %v960 = vpack.c.b16 %v772, %v768
    %v961 = vpack.c.b16 %v773, %v769
    %v962 = vpack.c.b16 %v778, %v774
    %v963 = vpack.c.b16 %v779, %v775
    %v964 = vpack.c.b16 %v780, %v776
    %v965 = vpack.c.b16 %v781, %v777
    %v966 = vpack.c.b16 %v786, %v782
    %v967 = vpack.c.b16 %v787, %v783
    %v968 = vpack.c.b16 %v788, %v784
    %v969 = vpack.c.b16 %v789, %v785
    %v970 = vpack.c.b16 %v794, %v790
    %v971 = vpack.c.b16 %v795, %v791
    %v972 = vpack.c.b16 %v796, %v792
    %v973 = vpack.c.b16 %v797, %v793
    %v974 = vpack.c.b16 %v802, %v798
    %v975 = vpack.c.b16 %v803, %v799
    %v976 = vpack.c.b16 %v804, %v800
    %v977 = vpack.c.b16 %v805, %v801
    %v978 = vpack.c.b16 %v810, %v806
    %v979 = vpack.c.b16 %v811, %v807
    %v980 = vpack.c.b16 %v812, %v808
    %v981 = vpack.c.b16 %v813, %v809
    %v982 = vpack.c.b16 %v818, %v814
    %v983 = vpack.c.b16 %v819, %v815
    %v984 = vpack.c.b16 %v820, %v816
    %v985 = vpack.c.b16 %v821, %v817
    %v986 = vpack.c.b16 %v826, %v822
    %v987 = vpack.c.b16 %v827, %v823
    %v988 = vpack.c.b16 %v828, %v824
    %v989 = vpack.c.b16 %v829, %v825
    %v990 = vpack.c.b16 %v834, %v830
    %v991 = vpack.c.b16 %v835, %v831
    %v992 = vpack.c.b16 %v836, %v832
    %v993 = vpack.c.b16 %v837, %v833
    %v994 = vpack.c.b16 %v842, %v838
    %v995 = vpack.c.b16 %v843, %v839
    %v996 = vpack.c.b16 %v844, %v840
    %v997 = vpack.c.b16 %v845, %v841
    %v998 = vpack.c.b16 %v850, %v846
    %v999 = vpack.c.b16 %v851, %v847
    %v1000 = vpack.c.b16 %v852, %v848
    %v1001 = vpack.c.b16 %v853, %v849
    %v1002 = vpack.c.b16 %v858, %v854
    %v1003 = vpack.c.b16 %v859, %v855
    %v1004 = vpack.c.b16 %v860, %v856
    %v1005 = vpack.c.b16 %v861, %v857
    %v1006 = vpack.c.b16 %v866, %v862
    %v1007 = vpack.c.b16 %v867, %v863
    %v1008 = vpack.c.b16 %v868, %v864
    %v1009 = vpack.c.b16 %v869, %v865
    %v1010 = vpack.c.b16 %v874, %v870
    %v1011 = vpack.c.b16 %v875, %v871
    %v1012 = vpack.c.b16 %v876, %v872
    %v1013 = vpack.c.b16 %v877, %v873
    %v1014 = vpack.c.b16 %v882, %v878
    %v1015 = vpack.c.b16 %v883, %v879
    %v1016 = vpack.c.b16 %v884, %v880
    %v1017 = vpack.c.b16 %v885, %v881
    %v1018 = vpack.c.b16 %v890, %v886
    %v1019 = vpack.c.b16 %v891, %v887
    %v1020 = vpack.c.b16 %v892, %v888
    %v1021 = vpack.c.b16 %v893, %v889
    %1150 = vmatprep.subr.bf16.mxu0 %v923
    %1151 = vmatpush1.bf16.msra.mxu0 %v922
    %1152 = vmatprep.subr.bf16.mxu0 %v919
    %1153 = vmatpush1.bf16.msra.mxu0 %v918
    %1154 = vmatprep.subr.bf16.mxu0 %v915
    %1155 = vmatpush1.bf16.msra.mxu0 %v914
    %1156 = vmatprep.subr.bf16.mxu0 %v911
    %1157 = vmatpush1.bf16.msra.mxu0 %v910
    %1158 = vmatprep.subr.bf16.mxu0 %v907
    %1159 = vmatpush1.bf16.msra.mxu0 %v906
    %1160 = vmatprep.subr.bf16.mxu0 %v903
    %1161 = vmatpush1.bf16.msra.mxu0 %v902
    %1162 = vmatprep.subr.bf16.mxu0 %v899
    %1163 = vmatpush1.bf16.msra.mxu0 %v898
    %1164 = vmatprep.subr.bf16.mxu0 %v895
    %1165 = vmatpush1.bf16.msra.mxu0 %v894
    %1166 = vmatprep.subr.bf16.mxu0 %v955
    %1167 = vmatpush2.bf16.msra.mxu0 %v954
    %1168 = vmatprep.subr.bf16.mxu0 %v951
    %1169 = vmatpush2.bf16.msra.mxu0 %v950
    %1170 = vmatprep.subr.bf16.mxu0 %v947
    %1171 = vmatpush2.bf16.msra.mxu0 %v946
    %1172 = vmatprep.subr.bf16.mxu0 %v943
    %1173 = vmatpush2.bf16.msra.mxu0 %v942
    %1174 = vmatprep.subr.bf16.mxu0 %v939
    %1175 = vmatpush2.bf16.msra.mxu0 %v938
    %1176 = vmatprep.subr.bf16.mxu0 %v935
    %1177 = vmatpush2.bf16.msra.mxu0 %v934
    %1178 = vmatprep.subr.bf16.mxu0 %v931
    %1179 = vmatpush2.bf16.msra.mxu0 %v930
    %1180 = vmatprep.subr.bf16.mxu0 %v927
    %1181 = vmatpush2.bf16.msra.mxu0 %v926
    %1182 = vmatprep.mubr.bf16.mxu0 %v479
    %1183 = vmatmul.mubr.bf16.gmra.mxu0 %v478
    %v1184 = vpop.f32.mrf.mxu0
    %v1185 = vadd.f32 %v413, %v1184
    %v1186 = vpop.f32.mrf.mxu0
    %v1187 = vadd.f32 %v417, %v1186
    %v1188 = vpop.f32.mrf.mxu0
    %v1189 = vadd.f32 %v413, %v1188
    %v1190 = vpop.f32.mrf.mxu0
    %v1191 = vadd.f32 %v417, %v1190
    %1192 = vmatprep.mubr.bf16.mxu0 %v483
    %1193 = vmatmul.mubr.bf16.gmra.mxu0 %v482
    %v1194 = vpop.f32.mrf.mxu0
    %v1195 = vadd.f32 %v413, %v1194
    %v1196 = vpop.f32.mrf.mxu0
    %v1197 = vadd.f32 %v417, %v1196
    %v1198 = vpop.f32.mrf.mxu0
    %v1199 = vadd.f32 %v413, %v1198
    %v1200 = vpop.f32.mrf.mxu0
    %v1201 = vadd.f32 %v417, %v1200
    %1202 = vmatprep.mubr.bf16.mxu0 %v487
    %1203 = vmatmul.mubr.bf16.gmra.mxu0 %v486
    %v1204 = vpop.f32.mrf.mxu0
    %v1205 = vadd.f32 %v413, %v1204
    %v1206 = vpop.f32.mrf.mxu0
    %v1207 = vadd.f32 %v417, %v1206
    %v1208 = vpop.f32.mrf.mxu0
    %v1209 = vadd.f32 %v413, %v1208
    %v1210 = vpop.f32.mrf.mxu0
    %v1211 = vadd.f32 %v417, %v1210
    %1212 = vmatprep.mubr.bf16.mxu0 %v491
    %1213 = vmatmul.mubr.bf16.gmra.mxu0 %v490
    %v1214 = vpop.f32.mrf.mxu0
    %v1215 = vadd.f32 %v413, %v1214
    %v1216 = vpop.f32.mrf.mxu0
    %v1217 = vadd.f32 %v417, %v1216
    %v1218 = vpop.f32.mrf.mxu0
    %v1219 = vadd.f32 %v413, %v1218
    %v1220 = vpop.f32.mrf.mxu0
    %v1221 = vadd.f32 %v417, %v1220
    %1222 = vdwg.mxu0
    %1223 = vmatprep.subr.bf16.mxu0 %v987
    %1224 = vmatpush1.bf16.msra.mxu0 %v986
    %1225 = vmatprep.subr.bf16.mxu0 %v983
    %1226 = vmatpush1.bf16.msra.mxu0 %v982
    %1227 = vmatprep.subr.bf16.mxu0 %v979
    %1228 = vmatpush1.bf16.msra.mxu0 %v978
    %1229 = vmatprep.subr.bf16.mxu0 %v975
    %1230 = vmatpush1.bf16.msra.mxu0 %v974
    %1231 = vmatprep.subr.bf16.mxu0 %v971
    %1232 = vmatpush1.bf16.msra.mxu0 %v970
    %1233 = vmatprep.subr.bf16.mxu0 %v967
    %1234 = vmatpush1.bf16.msra.mxu0 %v966
    %1235 = vmatprep.subr.bf16.mxu0 %v963
    %1236 = vmatpush1.bf16.msra.mxu0 %v962
    %1237 = vmatprep.subr.bf16.mxu0 %v959
    %1238 = vmatpush1.bf16.msra.mxu0 %v958
    %1239 = vmatprep.subr.bf16.mxu0 %v1019
    %1240 = vmatpush2.bf16.msra.mxu0 %v1018
    %1241 = vmatprep.subr.bf16.mxu0 %v1015
    %1242 = vmatpush2.bf16.msra.mxu0 %v1014
    %1243 = vmatprep.subr.bf16.mxu0 %v1011
    %1244 = vmatpush2.bf16.msra.mxu0 %v1010
    %1245 = vmatprep.subr.bf16.mxu0 %v1007
    %1246 = vmatpush2.bf16.msra.mxu0 %v1006
    %1247 = vmatprep.subr.bf16.mxu0 %v1003
    %1248 = vmatpush2.bf16.msra.mxu0 %v1002
    %1249 = vmatprep.subr.bf16.mxu0 %v999
    %1250 = vmatpush2.bf16.msra.mxu0 %v998
    %1251 = vmatprep.subr.bf16.mxu0 %v995
    %1252 = vmatpush2.bf16.msra.mxu0 %v994
    %1253 = vmatprep.subr.bf16.mxu0 %v991
    %1254 = vmatpush2.bf16.msra.mxu0 %v990
    %1255 = vmatprep.mubr.bf16.mxu0 %v481
    %1256 = vmatmul.mubr.bf16.gmra.mxu0 %v480
    %v1257 = vpop.f32.mrf.mxu0
    %v1258 = vadd.f32 %v1185, %v1257
    %v1259 = vpop.f32.mrf.mxu0
    %v1260 = vadd.f32 %v1187, %v1259
    %v1261 = vpop.f32.mrf.mxu0
    %v1262 = vadd.f32 %v1189, %v1261
    %v1263 = vpop.f32.mrf.mxu0
    %v1264 = vadd.f32 %v1191, %v1263
    %1265 = vmatprep.mubr.bf16.mxu0 %v485
    %1266 = vmatmul.mubr.bf16.gmra.mxu0 %v484
    %v1267 = vpop.f32.mrf.mxu0
    %v1268 = vadd.f32 %v1195, %v1267
    %v1269 = vpop.f32.mrf.mxu0
    %v1270 = vadd.f32 %v1197, %v1269
    %v1271 = vpop.f32.mrf.mxu0
    %v1272 = vadd.f32 %v1199, %v1271
    %v1273 = vpop.f32.mrf.mxu0
    %v1274 = vadd.f32 %v1201, %v1273
    %1275 = vmatprep.mubr.bf16.mxu0 %v489
    %1276 = vmatmul.mubr.bf16.gmra.mxu0 %v488
    %v1277 = vpop.f32.mrf.mxu0
    %v1278 = vadd.f32 %v1205, %v1277
    %v1279 = vpop.f32.mrf.mxu0
    %v1280 = vadd.f32 %v1207, %v1279
    %v1281 = vpop.f32.mrf.mxu0
    %v1282 = vadd.f32 %v1209, %v1281
    %v1283 = vpop.f32.mrf.mxu0
    %v1284 = vadd.f32 %v1211, %v1283
    %1285 = vmatprep.mubr.bf16.mxu0 %v493
    %1286 = vmatmul.mubr.bf16.gmra.mxu0 %v492
    %v1287 = vpop.f32.mrf.mxu0
    %v1288 = vadd.f32 %v1215, %v1287
    %v1289 = vpop.f32.mrf.mxu0
    %v1290 = vadd.f32 %v1217, %v1289
    %v1291 = vpop.f32.mrf.mxu0
    %v1292 = vadd.f32 %v1219, %v1291
    %v1293 = vpop.f32.mrf.mxu0
    %v1294 = vadd.f32 %v1221, %v1293
    %1295 = vdwg.mxu0
    %1296 = vmatprep.subr.bf16.mxu0 %v925
    %1297 = vmatpush1.bf16.msra.mxu0 %v924
    %1298 = vmatprep.subr.bf16.mxu0 %v921
    %1299 = vmatpush1.bf16.msra.mxu0 %v920
    %1300 = vmatprep.subr.bf16.mxu0 %v917
    %1301 = vmatpush1.bf16.msra.mxu0 %v916
    %1302 = vmatprep.subr.bf16.mxu0 %v913
    %1303 = vmatpush1.bf16.msra.mxu0 %v912
    %1304 = vmatprep.subr.bf16.mxu0 %v909
    %1305 = vmatpush1.bf16.msra.mxu0 %v908
    %1306 = vmatprep.subr.bf16.mxu0 %v905
    %1307 = vmatpush1.bf16.msra.mxu0 %v904
    %1308 = vmatprep.subr.bf16.mxu0 %v901
    %1309 = vmatpush1.bf16.msra.mxu0 %v900
    %1310 = vmatprep.subr.bf16.mxu0 %v897
    %1311 = vmatpush1.bf16.msra.mxu0 %v896
    %1312 = vmatprep.subr.bf16.mxu0 %v957
    %1313 = vmatpush2.bf16.msra.mxu0 %v956
    %1314 = vmatprep.subr.bf16.mxu0 %v953
    %1315 = vmatpush2.bf16.msra.mxu0 %v952
    %1316 = vmatprep.subr.bf16.mxu0 %v949
    %1317 = vmatpush2.bf16.msra.mxu0 %v948
    %1318 = vmatprep.subr.bf16.mxu0 %v945
    %1319 = vmatpush2.bf16.msra.mxu0 %v944
    %1320 = vmatprep.subr.bf16.mxu0 %v941
    %1321 = vmatpush2.bf16.msra.mxu0 %v940
    %1322 = vmatprep.subr.bf16.mxu0 %v937
    %1323 = vmatpush2.bf16.msra.mxu0 %v936
    %1324 = vmatprep.subr.bf16.mxu0 %v933
    %1325 = vmatpush2.bf16.msra.mxu0 %v932
    %1326 = vmatprep.subr.bf16.mxu0 %v929
    %1327 = vmatpush2.bf16.msra.mxu0 %v928
    %1328 = vmatprep.mubr.bf16.mxu0 %v479
    %1329 = vmatmul.mubr.bf16.gmra.mxu0 %v478
    %v1330 = vpop.f32.mrf.mxu0
    %v1331 = vadd.f32 %v421, %v1330
    %v1332 = vpop.f32.mrf.mxu0
    %v1333 = vadd.f32 %v425, %v1332
    %v1334 = vpop.f32.mrf.mxu0
    %v1335 = vadd.f32 %v421, %v1334
    %v1336 = vpop.f32.mrf.mxu0
    %v1337 = vadd.f32 %v425, %v1336
    %1338 = vmatprep.mubr.bf16.mxu0 %v483
    %1339 = vmatmul.mubr.bf16.gmra.mxu0 %v482
    %v1340 = vpop.f32.mrf.mxu0
    %v1341 = vadd.f32 %v421, %v1340
    %v1342 = vpop.f32.mrf.mxu0
    %v1343 = vadd.f32 %v425, %v1342
    %v1344 = vpop.f32.mrf.mxu0
    %v1345 = vadd.f32 %v421, %v1344
    %v1346 = vpop.f32.mrf.mxu0
    %v1347 = vadd.f32 %v425, %v1346
    %1348 = vmatprep.mubr.bf16.mxu0 %v487
    %1349 = vmatmul.mubr.bf16.gmra.mxu0 %v486
    %v1350 = vpop.f32.mrf.mxu0
    %v1351 = vadd.f32 %v421, %v1350
    %v1352 = vpop.f32.mrf.mxu0
    %v1353 = vadd.f32 %v425, %v1352
    %v1354 = vpop.f32.mrf.mxu0
    %v1355 = vadd.f32 %v421, %v1354
    %v1356 = vpop.f32.mrf.mxu0
    %v1357 = vadd.f32 %v425, %v1356
    %1358 = vmatprep.mubr.bf16.mxu0 %v491
    %1359 = vmatmul.mubr.bf16.gmra.mxu0 %v490
    %v1360 = vpop.f32.mrf.mxu0
    %v1361 = vadd.f32 %v421, %v1360
    %v1362 = vpop.f32.mrf.mxu0
    %v1363 = vadd.f32 %v425, %v1362
    %v1364 = vpop.f32.mrf.mxu0
    %v1365 = vadd.f32 %v421, %v1364
    %v1366 = vpop.f32.mrf.mxu0
    %v1367 = vadd.f32 %v425, %v1366
    %1368 = vdwg.mxu0
    %1369 = vmatprep.subr.bf16.mxu0 %v989
    %1370 = vmatpush1.bf16.msra.mxu0 %v988
    %1371 = vmatprep.subr.bf16.mxu0 %v985
    %1372 = vmatpush1.bf16.msra.mxu0 %v984
    %1373 = vmatprep.subr.bf16.mxu0 %v981
    %1374 = vmatpush1.bf16.msra.mxu0 %v980
    %1375 = vmatprep.subr.bf16.mxu0 %v977
    %1376 = vmatpush1.bf16.msra.mxu0 %v976
    %1377 = vmatprep.subr.bf16.mxu0 %v973
    %1378 = vmatpush1.bf16.msra.mxu0 %v972
    %1379 = vmatprep.subr.bf16.mxu0 %v969
    %1380 = vmatpush1.bf16.msra.mxu0 %v968
    %1381 = vmatprep.subr.bf16.mxu0 %v965
    %1382 = vmatpush1.bf16.msra.mxu0 %v964
    %1383 = vmatprep.subr.bf16.mxu0 %v961
    %1384 = vmatpush1.bf16.msra.mxu0 %v960
    %1385 = vmatprep.subr.bf16.mxu0 %v1021
    %1386 = vmatpush2.bf16.msra.mxu0 %v1020
    %1387 = vmatprep.subr.bf16.mxu0 %v1017
    %1388 = vmatpush2.bf16.msra.mxu0 %v1016
    %1389 = vmatprep.subr.bf16.mxu0 %v1013
    %1390 = vmatpush2.bf16.msra.mxu0 %v1012
    %1391 = vmatprep.subr.bf16.mxu0 %v1009
    %1392 = vmatpush2.bf16.msra.mxu0 %v1008
    %1393 = vmatprep.subr.bf16.mxu0 %v1005
    %1394 = vmatpush2.bf16.msra.mxu0 %v1004
    %1395 = vmatprep.subr.bf16.mxu0 %v1001
    %1396 = vmatpush2.bf16.msra.mxu0 %v1000
    %1397 = vmatprep.subr.bf16.mxu0 %v997
    %1398 = vmatpush2.bf16.msra.mxu0 %v996
    %1399 = vmatprep.subr.bf16.mxu0 %v993
    %1400 = vmatpush2.bf16.msra.mxu0 %v992
    %1401 = vmatprep.mubr.bf16.mxu0 %v481
    %1402 = vmatmul.mubr.bf16.gmra.mxu0 %v480
    %v1403 = vpop.f32.mrf.mxu0
    %v1404 = vadd.f32 %v1331, %v1403
    %v1405 = vpop.f32.mrf.mxu0
    %v1406 = vadd.f32 %v1333, %v1405
    %v1407 = vpop.f32.mrf.mxu0
    %v1408 = vadd.f32 %v1335, %v1407
    %v1409 = vpop.f32.mrf.mxu0
    %v1410 = vadd.f32 %v1337, %v1409
    %1411 = vmatprep.mubr.bf16.mxu0 %v485
    %1412 = vmatmul.mubr.bf16.gmra.mxu0 %v484
    %v1413 = vpop.f32.mrf.mxu0
    %v1414 = vadd.f32 %v1341, %v1413
    %v1415 = vpop.f32.mrf.mxu0
    %v1416 = vadd.f32 %v1343, %v1415
    %v1417 = vpop.f32.mrf.mxu0
    %v1418 = vadd.f32 %v1345, %v1417
    %v1419 = vpop.f32.mrf.mxu0
    %v1420 = vadd.f32 %v1347, %v1419
    %1421 = vmatprep.mubr.bf16.mxu0 %v489
    %1422 = vmatmul.mubr.bf16.gmra.mxu0 %v488
    %v1423 = vpop.f32.mrf.mxu0
    %v1424 = vadd.f32 %v1351, %v1423
    %v1425 = vpop.f32.mrf.mxu0
    %v1426 = vadd.f32 %v1353, %v1425
    %v1427 = vpop.f32.mrf.mxu0
    %v1428 = vadd.f32 %v1355, %v1427
    %v1429 = vpop.f32.mrf.mxu0
    %v1430 = vadd.f32 %v1357, %v1429
    %1431 = vmatprep.mubr.bf16.mxu0 %v493
    %1432 = vmatmul.mubr.bf16.gmra.mxu0 %v492
    %v1433 = vpop.f32.mrf.mxu0
    %v1434 = vadd.f32 %v1361, %v1433
    %v1435 = vpop.f32.mrf.mxu0
    %v1436 = vadd.f32 %v1363, %v1435
    %v1437 = vpop.f32.mrf.mxu0
    %v1438 = vadd.f32 %v1365, %v1437
    %v1439 = vpop.f32.mrf.mxu0
    %v1440 = vadd.f32 %v1367, %v1439
    %1441 = vdwg.mxu0
    %v1442 = vtanh.pop %v1258
    %v1443 = vtanh.pop %v1260
    %v1444 = vtanh.pop %v1404
    %v1445 = vtanh.pop %v1406
    %v1446 = vtanh.pop %v1262
    %v1447 = vtanh.pop %v1264
    %v1448 = vtanh.pop %v1408
    %v1449 = vtanh.pop %v1410
    %v1450 = vtanh.pop %v1268
    %v1451 = vtanh.pop %v1270
    %v1452 = vtanh.pop %v1414
    %v1453 = vtanh.pop %v1416
    %v1454 = vtanh.pop %v1272
    %v1455 = vtanh.pop %v1274
    %v1456 = vtanh.pop %v1418
    %v1457 = vtanh.pop %v1420
    %v1458 = vtanh.pop %v1278
    %v1459 = vtanh.pop %v1280
    %v1460 = vtanh.pop %v1424
    %v1461 = vtanh.pop %v1426
    %v1462 = vtanh.pop %v1282
    %v1463 = vtanh.pop %v1284
    %v1464 = vtanh.pop %v1428
    %v1465 = vtanh.pop %v1430
    %v1466 = vtanh.pop %v1288
    %v1467 = vtanh.pop %v1290
    %v1468 = vtanh.pop %v1434
    %v1469 = vtanh.pop %v1436
    %v1470 = vtanh.pop %v1292
    %v1471 = vtanh.pop %v1294
    %v1472 = vtanh.pop %v1438
    %v1473 = vtanh.pop %v1440
    %v1474 = vpack.c.bf16 %v1446, %v1442
    %v1475 = vpack.c.bf16 %v1447, %v1443
    %v1476 = vpack.c.bf16 %v1448, %v1444
    %v1477 = vpack.c.bf16 %v1449, %v1445
    %v1478 = vpack.c.bf16 %v1454, %v1450
    %v1479 = vpack.c.bf16 %v1455, %v1451
    %v1480 = vpack.c.bf16 %v1456, %v1452
    %v1481 = vpack.c.bf16 %v1457, %v1453
    %v1482 = vpack.c.bf16 %v1462, %v1458
    %v1483 = vpack.c.bf16 %v1463, %v1459
    %v1484 = vpack.c.bf16 %v1464, %v1460
    %v1485 = vpack.c.bf16 %v1465, %v1461
    %v1486 = vpack.c.bf16 %v1470, %v1466
    %v1487 = vpack.c.bf16 %v1471, %v1467
    %v1488 = vpack.c.bf16 %v1472, %v1468
    %v1489 = vpack.c.bf16 %v1473, %v1469
    %v1491 = vlaneseq
    %v1492 = vshrl.u32 %v1491, 7
    %v1493 = vsub.s32 0, %v1492
    %v1494 = vrot.slane %v408, %v1493
    %v1495 = vlaneseq
    %v1496 = vshrl.u32 %v1495, 7
    %v1497 = vsub.s32 1, %v1496
    %v1498 = vrot.slane %v408, %v1497
    %v1499 = vlaneseq
    %v1500 = vshrl.u32 %v1499, 7
    %v1501 = vsub.s32 2, %v1500
    %v1502 = vrot.slane %v408, %v1501
    %v1503 = vlaneseq
    %v1504 = vshrl.u32 %v1503, 7
    %v1505 = vsub.s32 3, %v1504
    %v1506 = vrot.slane %v408, %v1505
    %v1639 = vunpack.c.l.b16 %v280
    %v1640 = vunpack.c.h.b16 %v280
    %v1641 = vunpack.c.l.b16 %v281
    %v1642 = vunpack.c.h.b16 %v281
    %v1643 = vunpack.c.l.b16 %v282
    %v1644 = vunpack.c.h.b16 %v282
    %v1645 = vunpack.c.l.b16 %v283
    %v1646 = vunpack.c.h.b16 %v283
    %v1647 = vunpack.c.l.b16 %v284
    %v1648 = vunpack.c.h.b16 %v284
    %v1649 = vunpack.c.l.b16 %v285
    %v1650 = vunpack.c.h.b16 %v285
    %v1651 = vunpack.c.l.b16 %v286
    %v1652 = vunpack.c.h.b16 %v286
    %v1653 = vunpack.c.l.b16 %v287
    %v1654 = vunpack.c.h.b16 %v287
    %v1655 = vunpack.c.l.b16 %v288
    %v1656 = vunpack.c.h.b16 %v288
    %v1657 = vunpack.c.l.b16 %v289
    %v1658 = vunpack.c.h.b16 %v289
    %v1659 = vunpack.c.l.b16 %v290
    %v1660 = vunpack.c.h.b16 %v290
    %v1661 = vunpack.c.l.b16 %v291
    %v1662 = vunpack.c.h.b16 %v291
    %v1663 = vunpack.c.l.b16 %v292
    %v1664 = vunpack.c.h.b16 %v292
    %v1665 = vunpack.c.l.b16 %v293
    %v1666 = vunpack.c.h.b16 %v293
    %v1667 = vunpack.c.l.b16 %v294
    %v1668 = vunpack.c.h.b16 %v294
    %v1669 = vunpack.c.l.b16 %v295
    %v1670 = vunpack.c.h.b16 %v295
    %v1671 = vunpack.c.l.b16 %v296
    %v1672 = vunpack.c.h.b16 %v296
    %v1673 = vunpack.c.l.b16 %v297
    %v1674 = vunpack.c.h.b16 %v297
    %v1675 = vunpack.c.l.b16 %v298
    %v1676 = vunpack.c.h.b16 %v298
    %v1677 = vunpack.c.l.b16 %v299
    %v1678 = vunpack.c.h.b16 %v299
    %v1679 = vunpack.c.l.b16 %v300
    %v1680 = vunpack.c.h.b16 %v300
    %v1681 = vunpack.c.l.b16 %v301
    %v1682 = vunpack.c.h.b16 %v301
    %v1683 = vunpack.c.l.b16 %v302
    %v1684 = vunpack.c.h.b16 %v302
    %v1685 = vunpack.c.l.b16 %v303
    %v1686 = vunpack.c.h.b16 %v303
    %v1687 = vunpack.c.l.b16 %v304
    %v1688 = vunpack.c.h.b16 %v304
    %v1689 = vunpack.c.l.b16 %v305
    %v1690 = vunpack.c.h.b16 %v305
    %v1691 = vunpack.c.l.b16 %v306
    %v1692 = vunpack.c.h.b16 %v306
    %v1693 = vunpack.c.l.b16 %v307
    %v1694 = vunpack.c.h.b16 %v307
    %v1695 = vunpack.c.l.b16 %v308
    %v1696 = vunpack.c.h.b16 %v308
    %v1697 = vunpack.c.l.b16 %v309
    %v1698 = vunpack.c.h.b16 %v309
    %v1699 = vunpack.c.l.b16 %v310
    %v1700 = vunpack.c.h.b16 %v310
    %v1701 = vunpack.c.l.b16 %v311
    %v1702 = vunpack.c.h.b16 %v311
    %v1703 = vunpack.c.l.b16 %v312
    %v1704 = vunpack.c.h.b16 %v312
    %v1705 = vunpack.c.l.b16 %v313
    %v1706 = vunpack.c.h.b16 %v313
    %v1707 = vunpack.c.l.b16 %v314
    %v1708 = vunpack.c.h.b16 %v314
    %v1709 = vunpack.c.l.b16 %v315
    %v1710 = vunpack.c.h.b16 %v315
    %v1711 = vunpack.c.l.b16 %v316
    %v1712 = vunpack.c.h.b16 %v316
    %v1713 = vunpack.c.l.b16 %v317
    %v1714 = vunpack.c.h.b16 %v317
    %v1715 = vunpack.c.l.b16 %v318
    %v1716 = vunpack.c.h.b16 %v318
    %v1717 = vunpack.c.l.b16 %v319
    %v1718 = vunpack.c.h.b16 %v319
    %v1719 = vunpack.c.l.b16 %v320
    %v1720 = vunpack.c.h.b16 %v320
    %v1721 = vunpack.c.l.b16 %v321
    %v1722 = vunpack.c.h.b16 %v321
    %v1723 = vunpack.c.l.b16 %v322
    %v1724 = vunpack.c.h.b16 %v322
    %v1725 = vunpack.c.l.b16 %v323
    %v1726 = vunpack.c.h.b16 %v323
    %v1727 = vunpack.c.l.b16 %v324
    %v1728 = vunpack.c.h.b16 %v324
    %v1729 = vunpack.c.l.b16 %v325
    %v1730 = vunpack.c.h.b16 %v325
    %v1731 = vunpack.c.l.b16 %v326
    %v1732 = vunpack.c.h.b16 %v326
    %v1733 = vunpack.c.l.b16 %v327
    %v1734 = vunpack.c.h.b16 %v327
    %v1735 = vunpack.c.l.b16 %v328
    %v1736 = vunpack.c.h.b16 %v328
    %v1737 = vunpack.c.l.b16 %v329
    %v1738 = vunpack.c.h.b16 %v329
    %v1739 = vunpack.c.l.b16 %v330
    %v1740 = vunpack.c.h.b16 %v330
    %v1741 = vunpack.c.l.b16 %v331
    %v1742 = vunpack.c.h.b16 %v331
    %v1743 = vunpack.c.l.b16 %v332
    %v1744 = vunpack.c.h.b16 %v332
    %v1745 = vunpack.c.l.b16 %v333
    %v1746 = vunpack.c.h.b16 %v333
    %v1747 = vunpack.c.l.b16 %v334
    %v1748 = vunpack.c.h.b16 %v334
    %v1749 = vunpack.c.l.b16 %v335
    %v1750 = vunpack.c.h.b16 %v335
    %v1751 = vunpack.c.l.b16 %v336
    %v1752 = vunpack.c.h.b16 %v336
    %v1753 = vunpack.c.l.b16 %v337
    %v1754 = vunpack.c.h.b16 %v337
    %v1755 = vunpack.c.l.b16 %v338
    %v1756 = vunpack.c.h.b16 %v338
    %v1757 = vunpack.c.l.b16 %v339
    %v1758 = vunpack.c.h.b16 %v339
    %v1759 = vunpack.c.l.b16 %v340
    %v1760 = vunpack.c.h.b16 %v340
    %v1761 = vunpack.c.l.b16 %v341
    %v1762 = vunpack.c.h.b16 %v341
    %v1763 = vunpack.c.l.b16 %v342
    %v1764 = vunpack.c.h.b16 %v342
    %v1765 = vunpack.c.l.b16 %v343
    %v1766 = vunpack.c.h.b16 %v343
    %v1767 = vunpack.c.l.b16 %v344
    %v1768 = vunpack.c.h.b16 %v344
    %v1769 = vunpack.c.l.b16 %v345
    %v1770 = vunpack.c.h.b16 %v345
    %v1771 = vunpack.c.l.b16 %v346
    %v1772 = vunpack.c.h.b16 %v346
    %v1773 = vunpack.c.l.b16 %v347
    %v1774 = vunpack.c.h.b16 %v347
    %v1775 = vunpack.c.l.b16 %v348
    %v1776 = vunpack.c.h.b16 %v348
    %v1777 = vunpack.c.l.b16 %v349
    %v1778 = vunpack.c.h.b16 %v349
    %v1779 = vunpack.c.l.b16 %v350
    %v1780 = vunpack.c.h.b16 %v350
    %v1781 = vunpack.c.l.b16 %v351
    %v1782 = vunpack.c.h.b16 %v351
    %v1783 = vunpack.c.l.b16 %v352
    %v1784 = vunpack.c.h.b16 %v352
    %v1785 = vunpack.c.l.b16 %v353
    %v1786 = vunpack.c.h.b16 %v353
    %v1787 = vunpack.c.l.b16 %v354
    %v1788 = vunpack.c.h.b16 %v354
    %v1789 = vunpack.c.l.b16 %v355
    %v1790 = vunpack.c.h.b16 %v355
    %v1791 = vunpack.c.l.b16 %v356
    %v1792 = vunpack.c.h.b16 %v356
    %v1793 = vunpack.c.l.b16 %v357
    %v1794 = vunpack.c.h.b16 %v357
    %v1795 = vunpack.c.l.b16 %v358
    %v1796 = vunpack.c.h.b16 %v358
    %v1797 = vunpack.c.l.b16 %v359
    %v1798 = vunpack.c.h.b16 %v359
    %v1799 = vunpack.c.l.b16 %v360
    %v1800 = vunpack.c.h.b16 %v360
    %v1801 = vunpack.c.l.b16 %v361
    %v1802 = vunpack.c.h.b16 %v361
    %v1803 = vunpack.c.l.b16 %v362
    %v1804 = vunpack.c.h.b16 %v362
    %v1805 = vunpack.c.l.b16 %v363
    %v1806 = vunpack.c.h.b16 %v363
    %v1807 = vunpack.c.l.b16 %v364
    %v1808 = vunpack.c.h.b16 %v364
    %v1809 = vunpack.c.l.b16 %v365
    %v1810 = vunpack.c.h.b16 %v365
    %v1811 = vunpack.c.l.b16 %v366
    %v1812 = vunpack.c.h.b16 %v366
    %v1813 = vunpack.c.l.b16 %v367
    %v1814 = vunpack.c.h.b16 %v367
    %v1815 = vunpack.c.l.b16 %v368
    %v1816 = vunpack.c.h.b16 %v368
    %v1817 = vunpack.c.l.b16 %v369
    %v1818 = vunpack.c.h.b16 %v369
    %v1819 = vunpack.c.l.b16 %v370
    %v1820 = vunpack.c.h.b16 %v370
    %v1821 = vunpack.c.l.b16 %v371
    %v1822 = vunpack.c.h.b16 %v371
    %v1823 = vunpack.c.l.b16 %v372
    %v1824 = vunpack.c.h.b16 %v372
    %v1825 = vunpack.c.l.b16 %v373
    %v1826 = vunpack.c.h.b16 %v373
    %v1827 = vunpack.c.l.b16 %v374
    %v1828 = vunpack.c.h.b16 %v374
    %v1829 = vunpack.c.l.b16 %v375
    %v1830 = vunpack.c.h.b16 %v375
    %v1831 = vunpack.c.l.b16 %v376
    %v1832 = vunpack.c.h.b16 %v376
    %v1833 = vunpack.c.l.b16 %v377
    %v1834 = vunpack.c.h.b16 %v377
    %v1835 = vunpack.c.l.b16 %v378
    %v1836 = vunpack.c.h.b16 %v378
    %v1837 = vunpack.c.l.b16 %v379
    %v1838 = vunpack.c.h.b16 %v379
    %v1839 = vunpack.c.l.b16 %v380
    %v1840 = vunpack.c.h.b16 %v380
    %v1841 = vunpack.c.l.b16 %v381
    %v1842 = vunpack.c.h.b16 %v381
    %v1843 = vunpack.c.l.b16 %v382
    %v1844 = vunpack.c.h.b16 %v382
    %v1845 = vunpack.c.l.b16 %v383
    %v1846 = vunpack.c.h.b16 %v383
    %v1847 = vunpack.c.l.b16 %v384
    %v1848 = vunpack.c.h.b16 %v384
    %v1849 = vunpack.c.l.b16 %v385
    %v1850 = vunpack.c.h.b16 %v385
    %v1851 = vunpack.c.l.b16 %v386
    %v1852 = vunpack.c.h.b16 %v386
    %v1853 = vunpack.c.l.b16 %v387
    %v1854 = vunpack.c.h.b16 %v387
    %v1855 = vunpack.c.l.b16 %v388
    %v1856 = vunpack.c.h.b16 %v388
    %v1857 = vunpack.c.l.b16 %v389
    %v1858 = vunpack.c.h.b16 %v389
    %v1859 = vunpack.c.l.b16 %v390
    %v1860 = vunpack.c.h.b16 %v390
    %v1861 = vunpack.c.l.b16 %v391
    %v1862 = vunpack.c.h.b16 %v391
    %v1863 = vunpack.c.l.b16 %v392
    %v1864 = vunpack.c.h.b16 %v392
    %v1865 = vunpack.c.l.b16 %v393
    %v1866 = vunpack.c.h.b16 %v393
    %v1867 = vunpack.c.l.b16 %v394
    %v1868 = vunpack.c.h.b16 %v394
    %v1869 = vunpack.c.l.b16 %v395
    %v1870 = vunpack.c.h.b16 %v395
    %v1871 = vunpack.c.l.b16 %v396
    %v1872 = vunpack.c.h.b16 %v396
    %v1873 = vunpack.c.l.b16 %v397
    %v1874 = vunpack.c.h.b16 %v397
    %v1875 = vunpack.c.l.b16 %v398
    %v1876 = vunpack.c.h.b16 %v398
    %v1877 = vunpack.c.l.b16 %v399
    %v1878 = vunpack.c.h.b16 %v399
    %v1879 = vunpack.c.l.b16 %v400
    %v1880 = vunpack.c.h.b16 %v400
    %v1881 = vunpack.c.l.b16 %v401
    %v1882 = vunpack.c.h.b16 %v401
    %v1883 = vunpack.c.l.b16 %v402
    %v1884 = vunpack.c.h.b16 %v402
    %v1885 = vunpack.c.l.b16 %v403
    %v1886 = vunpack.c.h.b16 %v403
    %v1887 = vunpack.c.l.b16 %v404
    %v1888 = vunpack.c.h.b16 %v404
    %v1889 = vunpack.c.l.b16 %v405
    %v1890 = vunpack.c.h.b16 %v405
    %v1891 = vunpack.c.l.b16 %v406
    %v1892 = vunpack.c.h.b16 %v406
    %v1893 = vunpack.c.l.b16 %v407
    %v1894 = vunpack.c.h.b16 %v407
    %v1895 = vpack.c.b16 %v1643, %v1639
    %v1896 = vpack.c.b16 %v1644, %v1640
    %v1897 = vpack.c.b16 %v1645, %v1641
    %v1898 = vpack.c.b16 %v1646, %v1642
    %v1899 = vpack.c.b16 %v1651, %v1647
    %v1900 = vpack.c.b16 %v1652, %v1648
    %v1901 = vpack.c.b16 %v1653, %v1649
    %v1902 = vpack.c.b16 %v1654, %v1650
    %v1903 = vpack.c.b16 %v1659, %v1655
    %v1904 = vpack.c.b16 %v1660, %v1656
    %v1905 = vpack.c.b16 %v1661, %v1657
    %v1906 = vpack.c.b16 %v1662, %v1658
    %v1907 = vpack.c.b16 %v1667, %v1663
    %v1908 = vpack.c.b16 %v1668, %v1664
    %v1909 = vpack.c.b16 %v1669, %v1665
    %v1910 = vpack.c.b16 %v1670, %v1666
    %v1911 = vpack.c.b16 %v1675, %v1671
    %v1912 = vpack.c.b16 %v1676, %v1672
    %v1913 = vpack.c.b16 %v1677, %v1673
    %v1914 = vpack.c.b16 %v1678, %v1674
    %v1915 = vpack.c.b16 %v1683, %v1679
    %v1916 = vpack.c.b16 %v1684, %v1680
    %v1917 = vpack.c.b16 %v1685, %v1681
    %v1918 = vpack.c.b16 %v1686, %v1682
    %v1919 = vpack.c.b16 %v1691, %v1687
    %v1920 = vpack.c.b16 %v1692, %v1688
    %v1921 = vpack.c.b16 %v1693, %v1689
    %v1922 = vpack.c.b16 %v1694, %v1690
    %v1923 = vpack.c.b16 %v1699, %v1695
    %v1924 = vpack.c.b16 %v1700, %v1696
    %v1925 = vpack.c.b16 %v1701, %v1697
    %v1926 = vpack.c.b16 %v1702, %v1698
    %v1927 = vpack.c.b16 %v1707, %v1703
    %v1928 = vpack.c.b16 %v1708, %v1704
    %v1929 = vpack.c.b16 %v1709, %v1705
    %v1930 = vpack.c.b16 %v1710, %v1706
    %v1931 = vpack.c.b16 %v1715, %v1711
    %v1932 = vpack.c.b16 %v1716, %v1712
    %v1933 = vpack.c.b16 %v1717, %v1713
    %v1934 = vpack.c.b16 %v1718, %v1714
    %v1935 = vpack.c.b16 %v1723, %v1719
    %v1936 = vpack.c.b16 %v1724, %v1720
    %v1937 = vpack.c.b16 %v1725, %v1721
    %v1938 = vpack.c.b16 %v1726, %v1722
    %v1939 = vpack.c.b16 %v1731, %v1727
    %v1940 = vpack.c.b16 %v1732, %v1728
    %v1941 = vpack.c.b16 %v1733, %v1729
    %v1942 = vpack.c.b16 %v1734, %v1730
    %v1943 = vpack.c.b16 %v1739, %v1735
    %v1944 = vpack.c.b16 %v1740, %v1736
    %v1945 = vpack.c.b16 %v1741, %v1737
    %v1946 = vpack.c.b16 %v1742, %v1738
    %v1947 = vpack.c.b16 %v1747, %v1743
    %v1948 = vpack.c.b16 %v1748, %v1744
    %v1949 = vpack.c.b16 %v1749, %v1745
    %v1950 = vpack.c.b16 %v1750, %v1746
    %v1951 = vpack.c.b16 %v1755, %v1751
    %v1952 = vpack.c.b16 %v1756, %v1752
    %v1953 = vpack.c.b16 %v1757, %v1753
    %v1954 = vpack.c.b16 %v1758, %v1754
    %v1955 = vpack.c.b16 %v1763, %v1759
    %v1956 = vpack.c.b16 %v1764, %v1760
    %v1957 = vpack.c.b16 %v1765, %v1761
    %v1958 = vpack.c.b16 %v1766, %v1762
    %v1959 = vpack.c.b16 %v1771, %v1767
    %v1960 = vpack.c.b16 %v1772, %v1768
    %v1961 = vpack.c.b16 %v1773, %v1769
    %v1962 = vpack.c.b16 %v1774, %v1770
    %v1963 = vpack.c.b16 %v1779, %v1775
    %v1964 = vpack.c.b16 %v1780, %v1776
    %v1965 = vpack.c.b16 %v1781, %v1777
    %v1966 = vpack.c.b16 %v1782, %v1778
    %v1967 = vpack.c.b16 %v1787, %v1783
    %v1968 = vpack.c.b16 %v1788, %v1784
    %v1969 = vpack.c.b16 %v1789, %v1785
    %v1970 = vpack.c.b16 %v1790, %v1786
    %v1971 = vpack.c.b16 %v1795, %v1791
    %v1972 = vpack.c.b16 %v1796, %v1792
    %v1973 = vpack.c.b16 %v1797, %v1793
    %v1974 = vpack.c.b16 %v1798, %v1794
    %v1975 = vpack.c.b16 %v1803, %v1799
    %v1976 = vpack.c.b16 %v1804, %v1800
    %v1977 = vpack.c.b16 %v1805, %v1801
    %v1978 = vpack.c.b16 %v1806, %v1802
    %v1979 = vpack.c.b16 %v1811, %v1807
    %v1980 = vpack.c.b16 %v1812, %v1808
    %v1981 = vpack.c.b16 %v1813, %v1809
    %v1982 = vpack.c.b16 %v1814, %v1810
    %v1983 = vpack.c.b16 %v1819, %v1815
    %v1984 = vpack.c.b16 %v1820, %v1816
    %v1985 = vpack.c.b16 %v1821, %v1817
    %v1986 = vpack.c.b16 %v1822, %v1818
    %v1987 = vpack.c.b16 %v1827, %v1823
    %v1988 = vpack.c.b16 %v1828, %v1824
    %v1989 = vpack.c.b16 %v1829, %v1825
    %v1990 = vpack.c.b16 %v1830, %v1826
    %v1991 = vpack.c.b16 %v1835, %v1831
    %v1992 = vpack.c.b16 %v1836, %v1832
    %v1993 = vpack.c.b16 %v1837, %v1833
    %v1994 = vpack.c.b16 %v1838, %v1834
    %v1995 = vpack.c.b16 %v1843, %v1839
    %v1996 = vpack.c.b16 %v1844, %v1840
    %v1997 = vpack.c.b16 %v1845, %v1841
    %v1998 = vpack.c.b16 %v1846, %v1842
    %v1999 = vpack.c.b16 %v1851, %v1847
    %v2000 = vpack.c.b16 %v1852, %v1848
    %v2001 = vpack.c.b16 %v1853, %v1849
    %v2002 = vpack.c.b16 %v1854, %v1850
    %v2003 = vpack.c.b16 %v1859, %v1855
    %v2004 = vpack.c.b16 %v1860, %v1856
    %v2005 = vpack.c.b16 %v1861, %v1857
    %v2006 = vpack.c.b16 %v1862, %v1858
    %v2007 = vpack.c.b16 %v1867, %v1863
    %v2008 = vpack.c.b16 %v1868, %v1864
    %v2009 = vpack.c.b16 %v1869, %v1865
    %v2010 = vpack.c.b16 %v1870, %v1866
    %v2011 = vpack.c.b16 %v1875, %v1871
    %v2012 = vpack.c.b16 %v1876, %v1872
    %v2013 = vpack.c.b16 %v1877, %v1873
    %v2014 = vpack.c.b16 %v1878, %v1874
    %v2015 = vpack.c.b16 %v1883, %v1879
    %v2016 = vpack.c.b16 %v1884, %v1880
    %v2017 = vpack.c.b16 %v1885, %v1881
    %v2018 = vpack.c.b16 %v1886, %v1882
    %v2019 = vpack.c.b16 %v1891, %v1887
    %v2020 = vpack.c.b16 %v1892, %v1888
    %v2021 = vpack.c.b16 %v1893, %v1889
    %v2022 = vpack.c.b16 %v1894, %v1890
    %2151 = vmatprep.subr.bf16.mxu0 %v1924
    %2152 = vmatpush1.bf16.msra.mxu0 %v1923
    %2153 = vmatprep.subr.bf16.mxu0 %v1920
    %2154 = vmatpush1.bf16.msra.mxu0 %v1919
    %2155 = vmatprep.subr.bf16.mxu0 %v1916
    %2156 = vmatpush1.bf16.msra.mxu0 %v1915
    %2157 = vmatprep.subr.bf16.mxu0 %v1912
    %2158 = vmatpush1.bf16.msra.mxu0 %v1911
    %2159 = vmatprep.subr.bf16.mxu0 %v1908
    %2160 = vmatpush1.bf16.msra.mxu0 %v1907
    %2161 = vmatprep.subr.bf16.mxu0 %v1904
    %2162 = vmatpush1.bf16.msra.mxu0 %v1903
    %2163 = vmatprep.subr.bf16.mxu0 %v1900
    %2164 = vmatpush1.bf16.msra.mxu0 %v1899
    %2165 = vmatprep.subr.bf16.mxu0 %v1896
    %2166 = vmatpush1.bf16.msra.mxu0 %v1895
    %2167 = vmatprep.subr.bf16.mxu0 %v1956
    %2168 = vmatpush2.bf16.msra.mxu0 %v1955
    %2169 = vmatprep.subr.bf16.mxu0 %v1952
    %2170 = vmatpush2.bf16.msra.mxu0 %v1951
    %2171 = vmatprep.subr.bf16.mxu0 %v1948
    %2172 = vmatpush2.bf16.msra.mxu0 %v1947
    %2173 = vmatprep.subr.bf16.mxu0 %v1944
    %2174 = vmatpush2.bf16.msra.mxu0 %v1943
    %2175 = vmatprep.subr.bf16.mxu0 %v1940
    %2176 = vmatpush2.bf16.msra.mxu0 %v1939
    %2177 = vmatprep.subr.bf16.mxu0 %v1936
    %2178 = vmatpush2.bf16.msra.mxu0 %v1935
    %2179 = vmatprep.subr.bf16.mxu0 %v1932
    %2180 = vmatpush2.bf16.msra.mxu0 %v1931
    %2181 = vmatprep.subr.bf16.mxu0 %v1928
    %2182 = vmatpush2.bf16.msra.mxu0 %v1927
    %2183 = vmatprep.mubr.bf16.mxu0 %v1475
    %2184 = vmatmul.mubr.bf16.gmra.mxu0 %v1474
    %v2185 = vpop.f32.mrf.mxu0
    %v2186 = vadd.f32 %v1494, %v2185
    %v2187 = vpop.f32.mrf.mxu0
    %v2188 = vadd.f32 %v1498, %v2187
    %v2189 = vpop.f32.mrf.mxu0
    %v2190 = vadd.f32 %v1494, %v2189
    %v2191 = vpop.f32.mrf.mxu0
    %v2192 = vadd.f32 %v1498, %v2191
    %2193 = vmatprep.mubr.bf16.mxu0 %v1479
    %2194 = vmatmul.mubr.bf16.gmra.mxu0 %v1478
    %v2195 = vpop.f32.mrf.mxu0
    %v2196 = vadd.f32 %v1494, %v2195
    %v2197 = vpop.f32.mrf.mxu0
    %v2198 = vadd.f32 %v1498, %v2197
    %v2199 = vpop.f32.mrf.mxu0
    %v2200 = vpop.f32.mrf.mxu0
    %2201 = vmatprep.mubr.bf16.mxu0 %v1483
    %2202 = vmatmul.mubr.bf16.gmra.mxu0 %v1482
    %v2203 = vpop.f32.mrf.mxu0
    %v2204 = vadd.f32 %v1494, %v2203
    %v2205 = vpop.f32.mrf.mxu0
    %v2206 = vadd.f32 %v1498, %v2205
    %v2207 = vpop.f32.mrf.mxu0
    %v2208 = vadd.f32 %v1494, %v2207
    %v2209 = vpop.f32.mrf.mxu0
    %v2210 = vadd.f32 %v1498, %v2209
    %2211 = vmatprep.mubr.bf16.mxu0 %v1487
    %2212 = vmatmul.mubr.bf16.gmra.mxu0 %v1486
    %v2213 = vpop.f32.mrf.mxu0
    %v2214 = vadd.f32 %v1494, %v2213
    %v2215 = vpop.f32.mrf.mxu0
    %v2216 = vadd.f32 %v1498, %v2215
    %v2217 = vpop.f32.mrf.mxu0
    %v2218 = vpop.f32.mrf.mxu0
    %2219 = vdwg.mxu0
    %2220 = vmatprep.subr.bf16.mxu0 %v1988
    %2221 = vmatpush1.bf16.msra.mxu0 %v1987
    %2222 = vmatprep.subr.bf16.mxu0 %v1984
    %2223 = vmatpush1.bf16.msra.mxu0 %v1983
    %2224 = vmatprep.subr.bf16.mxu0 %v1980
    %2225 = vmatpush1.bf16.msra.mxu0 %v1979
    %2226 = vmatprep.subr.bf16.mxu0 %v1976
    %2227 = vmatpush1.bf16.msra.mxu0 %v1975
    %2228 = vmatprep.subr.bf16.mxu0 %v1972
    %2229 = vmatpush1.bf16.msra.mxu0 %v1971
    %2230 = vmatprep.subr.bf16.mxu0 %v1968
    %2231 = vmatpush1.bf16.msra.mxu0 %v1967
    %2232 = vmatprep.subr.bf16.mxu0 %v1964
    %2233 = vmatpush1.bf16.msra.mxu0 %v1963
    %2234 = vmatprep.subr.bf16.mxu0 %v1960
    %2235 = vmatpush1.bf16.msra.mxu0 %v1959
    %2236 = vmatprep.subr.bf16.mxu0 %v2020
    %2237 = vmatpush2.bf16.msra.mxu0 %v2019
    %2238 = vmatprep.subr.bf16.mxu0 %v2016
    %2239 = vmatpush2.bf16.msra.mxu0 %v2015
    %2240 = vmatprep.subr.bf16.mxu0 %v2012
    %2241 = vmatpush2.bf16.msra.mxu0 %v2011
    %2242 = vmatprep.subr.bf16.mxu0 %v2008
    %2243 = vmatpush2.bf16.msra.mxu0 %v2007
    %2244 = vmatprep.subr.bf16.mxu0 %v2004
    %2245 = vmatpush2.bf16.msra.mxu0 %v2003
    %2246 = vmatprep.subr.bf16.mxu0 %v2000
    %2247 = vmatpush2.bf16.msra.mxu0 %v1999
    %2248 = vmatprep.subr.bf16.mxu0 %v1996
    %2249 = vmatpush2.bf16.msra.mxu0 %v1995
    %2250 = vmatprep.subr.bf16.mxu0 %v1992
    %2251 = vmatpush2.bf16.msra.mxu0 %v1991
    %2252 = vmatprep.mubr.bf16.mxu0 %v1477
    %2253 = vmatmul.mubr.bf16.gmra.mxu0 %v1476
    %v2254 = vpop.f32.mrf.mxu0
    %v2255 = vadd.f32 %v2186, %v2254
    %v2256 = vpop.f32.mrf.mxu0
    %v2257 = vadd.f32 %v2188, %v2256
    %v2258 = vpop.f32.mrf.mxu0
    %v2259 = vadd.f32 %v2190, %v2258
    %v2260 = vpop.f32.mrf.mxu0
    %v2261 = vadd.f32 %v2192, %v2260
    %2262 = vmatprep.mubr.bf16.mxu0 %v1481
    %2263 = vmatmul.mubr.bf16.gmra.mxu0 %v1480
    %v2264 = vpop.f32.mrf.mxu0
    %v2265 = vadd.f32 %v2196, %v2264
    %v2266 = vpop.f32.mrf.mxu0
    %v2267 = vadd.f32 %v2198, %v2266
    %v2268 = vpop.f32.mrf.mxu0
    %v2269 = vpop.f32.mrf.mxu0
    %2270 = vmatprep.mubr.bf16.mxu0 %v1485
    %2271 = vmatmul.mubr.bf16.gmra.mxu0 %v1484
    %v2272 = vpop.f32.mrf.mxu0
    %v2273 = vadd.f32 %v2204, %v2272
    %v2274 = vpop.f32.mrf.mxu0
    %v2275 = vadd.f32 %v2206, %v2274
    %v2276 = vpop.f32.mrf.mxu0
    %v2277 = vadd.f32 %v2208, %v2276
    %v2278 = vpop.f32.mrf.mxu0
    %v2279 = vadd.f32 %v2210, %v2278
    %2280 = vmatprep.mubr.bf16.mxu0 %v1489
    %2281 = vmatmul.mubr.bf16.gmra.mxu0 %v1488
    %v2282 = vpop.f32.mrf.mxu0
    %v2283 = vadd.f32 %v2214, %v2282
    %v2284 = vpop.f32.mrf.mxu0
    %v2285 = vadd.f32 %v2216, %v2284
    %v2286 = vpop.f32.mrf.mxu0
    %v2287 = vpop.f32.mrf.mxu0
    %2288 = vdwg.mxu0
    %2289 = vmatprep.subr.bf16.mxu0 %v1926
    %2290 = vmatpush1.bf16.msra.mxu0 %v1925
    %2291 = vmatprep.subr.bf16.mxu0 %v1922
    %2292 = vmatpush1.bf16.msra.mxu0 %v1921
    %2293 = vmatprep.subr.bf16.mxu0 %v1918
    %2294 = vmatpush1.bf16.msra.mxu0 %v1917
    %2295 = vmatprep.subr.bf16.mxu0 %v1914
    %2296 = vmatpush1.bf16.msra.mxu0 %v1913
    %2297 = vmatprep.subr.bf16.mxu0 %v1910
    %2298 = vmatpush1.bf16.msra.mxu0 %v1909
    %2299 = vmatprep.subr.bf16.mxu0 %v1906
    %2300 = vmatpush1.bf16.msra.mxu0 %v1905
    %2301 = vmatprep.subr.bf16.mxu0 %v1902
    %2302 = vmatpush1.bf16.msra.mxu0 %v1901
    %2303 = vmatprep.subr.bf16.mxu0 %v1898
    %2304 = vmatpush1.bf16.msra.mxu0 %v1897
    %2305 = vmatprep.subr.bf16.mxu0 %v1958
    %2306 = vmatpush2.bf16.msra.mxu0 %v1957
    %2307 = vmatprep.subr.bf16.mxu0 %v1954
    %2308 = vmatpush2.bf16.msra.mxu0 %v1953
    %2309 = vmatprep.subr.bf16.mxu0 %v1950
    %2310 = vmatpush2.bf16.msra.mxu0 %v1949
    %2311 = vmatprep.subr.bf16.mxu0 %v1946
    %2312 = vmatpush2.bf16.msra.mxu0 %v1945
    %2313 = vmatprep.subr.bf16.mxu0 %v1942
    %2314 = vmatpush2.bf16.msra.mxu0 %v1941
    %2315 = vmatprep.subr.bf16.mxu0 %v1938
    %2316 = vmatpush2.bf16.msra.mxu0 %v1937
    %2317 = vmatprep.subr.bf16.mxu0 %v1934
    %2318 = vmatpush2.bf16.msra.mxu0 %v1933
    %2319 = vmatprep.subr.bf16.mxu0 %v1930
    %2320 = vmatpush2.bf16.msra.mxu0 %v1929
    %2321 = vmatprep.mubr.bf16.mxu0 %v1475
    %2322 = vmatmul.mubr.bf16.gmra.mxu0 %v1474
    %v2323 = vpop.f32.mrf.mxu0
    %v2324 = vadd.f32 %v1502, %v2323
    %v2325 = vpop.f32.mrf.mxu0
    %v2326 = vadd.f32 %v1506, %v2325
    %v2327 = vpop.f32.mrf.mxu0
    %v2328 = vadd.f32 %v1502, %v2327
    %v2329 = vpop.f32.mrf.mxu0
    %v2330 = vadd.f32 %v1506, %v2329
    %2331 = vmatprep.mubr.bf16.mxu0 %v1479
    %2332 = vmatmul.mubr.bf16.gmra.mxu0 %v1478
    %v2333 = vpop.f32.mrf.mxu0
    %v2334 = vadd.f32 %v1502, %v2333
    %v2335 = vpop.f32.mrf.mxu0
    %v2336 = vadd.f32 %v1506, %v2335
    %v2337 = vpop.f32.mrf.mxu0
    %v2338 = vpop.f32.mrf.mxu0
    %2339 = vmatprep.mubr.bf16.mxu0 %v1483
    %2340 = vmatmul.mubr.bf16.gmra.mxu0 %v1482
    %v2341 = vpop.f32.mrf.mxu0
    %v2342 = vadd.f32 %v1502, %v2341
    %v2343 = vpop.f32.mrf.mxu0
    %v2344 = vadd.f32 %v1506, %v2343
    %v2345 = vpop.f32.mrf.mxu0
    %v2346 = vadd.f32 %v1502, %v2345
    %v2347 = vpop.f32.mrf.mxu0
    %v2348 = vadd.f32 %v1506, %v2347
    %2349 = vmatprep.mubr.bf16.mxu0 %v1487
    %2350 = vmatmul.mubr.bf16.gmra.mxu0 %v1486
    %v2351 = vpop.f32.mrf.mxu0
    %v2352 = vadd.f32 %v1502, %v2351
    %v2353 = vpop.f32.mrf.mxu0
    %v2354 = vadd.f32 %v1506, %v2353
    %v2355 = vpop.f32.mrf.mxu0
    %v2356 = vpop.f32.mrf.mxu0
    %2357 = vdwg.mxu0
    %2358 = vmatprep.subr.bf16.mxu0 %v1990
    %2359 = vmatpush1.bf16.msra.mxu0 %v1989
    %2360 = vmatprep.subr.bf16.mxu0 %v1986
    %2361 = vmatpush1.bf16.msra.mxu0 %v1985
    %2362 = vmatprep.subr.bf16.mxu0 %v1982
    %2363 = vmatpush1.bf16.msra.mxu0 %v1981
    %2364 = vmatprep.subr.bf16.mxu0 %v1978
    %2365 = vmatpush1.bf16.msra.mxu0 %v1977
    %2366 = vmatprep.subr.bf16.mxu0 %v1974
    %2367 = vmatpush1.bf16.msra.mxu0 %v1973
    %2368 = vmatprep.subr.bf16.mxu0 %v1970
    %2369 = vmatpush1.bf16.msra.mxu0 %v1969
    %2370 = vmatprep.subr.bf16.mxu0 %v1966
    %2371 = vmatpush1.bf16.msra.mxu0 %v1965
    %2372 = vmatprep.subr.bf16.mxu0 %v1962
    %2373 = vmatpush1.bf16.msra.mxu0 %v1961
    %2374 = vmatprep.subr.bf16.mxu0 %v2022
    %2375 = vmatpush2.bf16.msra.mxu0 %v2021
    %2376 = vmatprep.subr.bf16.mxu0 %v2018
    %2377 = vmatpush2.bf16.msra.mxu0 %v2017
    %2378 = vmatprep.subr.bf16.mxu0 %v2014
    %2379 = vmatpush2.bf16.msra.mxu0 %v2013
    %2380 = vmatprep.subr.bf16.mxu0 %v2010
    %2381 = vmatpush2.bf16.msra.mxu0 %v2009
    %2382 = vmatprep.subr.bf16.mxu0 %v2006
    %2383 = vmatpush2.bf16.msra.mxu0 %v2005
    %2384 = vmatprep.subr.bf16.mxu0 %v2002
    %2385 = vmatpush2.bf16.msra.mxu0 %v2001
    %2386 = vmatprep.subr.bf16.mxu0 %v1998
    %2387 = vmatpush2.bf16.msra.mxu0 %v1997
    %2388 = vmatprep.subr.bf16.mxu0 %v1994
    %2389 = vmatpush2.bf16.msra.mxu0 %v1993
    %2390 = vmatprep.mubr.bf16.mxu0 %v1477
    %2391 = vmatmul.mubr.bf16.gmra.mxu0 %v1476
    %v2392 = vpop.f32.mrf.mxu0
    %v2393 = vadd.f32 %v2324, %v2392
    %v2394 = vpop.f32.mrf.mxu0
    %v2395 = vadd.f32 %v2326, %v2394
    %v2396 = vpop.f32.mrf.mxu0
    %v2397 = vadd.f32 %v2328, %v2396
    %v2398 = vpop.f32.mrf.mxu0
    %v2399 = vadd.f32 %v2330, %v2398
    %2400 = vmatprep.mubr.bf16.mxu0 %v1481
    %2401 = vmatmul.mubr.bf16.gmra.mxu0 %v1480
    %v2402 = vpop.f32.mrf.mxu0
    %v2403 = vadd.f32 %v2334, %v2402
    %v2404 = vpop.f32.mrf.mxu0
    %v2405 = vadd.f32 %v2336, %v2404
    %v2406 = vpop.f32.mrf.mxu0
    %v2407 = vpop.f32.mrf.mxu0
    %2408 = vmatprep.mubr.bf16.mxu0 %v1485
    %2409 = vmatmul.mubr.bf16.gmra.mxu0 %v1484
    %v2410 = vpop.f32.mrf.mxu0
    %v2411 = vadd.f32 %v2342, %v2410
    %v2412 = vpop.f32.mrf.mxu0
    %v2413 = vadd.f32 %v2344, %v2412
    %v2414 = vpop.f32.mrf.mxu0
    %v2415 = vadd.f32 %v2346, %v2414
    %v2416 = vpop.f32.mrf.mxu0
    %v2417 = vadd.f32 %v2348, %v2416
    %2418 = vmatprep.mubr.bf16.mxu0 %v1489
    %2419 = vmatmul.mubr.bf16.gmra.mxu0 %v1488
    %v2420 = vpop.f32.mrf.mxu0
    %v2421 = vadd.f32 %v2352, %v2420
    %v2422 = vpop.f32.mrf.mxu0
    %v2423 = vadd.f32 %v2354, %v2422
    %v2424 = vpop.f32.mrf.mxu0
    %v2425 = vpop.f32.mrf.mxu0
    %2426 = vdwg.mxu0
    %v2427 = vld [vmem:[#allocation10] sm:$0xff]
    %v2428 = vld [vmem:[#allocation10 + $0x8] sm:$0xff]
    %v2429 = vld [vmem:[#allocation10 + $0x10] sm:$0xff]
    %v2430 = vld [vmem:[#allocation10 + $0x18] sm:$0xff]
    %v2431 = vld [vmem:[#allocation10 + $0x20] sm:$0xff]
    %v2432 = vld [vmem:[#allocation10 + $0x28] sm:$0xff]
    %v2433 = vld [vmem:[#allocation10 + $0x30] sm:$0xff]
    %v2434 = vld [vmem:[#allocation10 + $0x38] sm:$0xff]
    %v2435 = vld [vmem:[#allocation10 + $0x40] sm:$0xff]
    %v2436 = vld [vmem:[#allocation10 + $0x48] sm:$0xff]
    %v2437 = vld [vmem:[#allocation10 + $0x50] sm:$0xff]
    %v2438 = vld [vmem:[#allocation10 + $0x58] sm:$0xff]
    %v2439 = vld [vmem:[#allocation10 + $0x60] sm:$0xff]
    %v2440 = vld [vmem:[#allocation10 + $0x68] sm:$0xff]
    %v2441 = vld [vmem:[#allocation10 + $0x70] sm:$0xff]
    %v2442 = vld [vmem:[#allocation10 + $0x78] sm:$0xff]
    %v2443 = vld [vmem:[#allocation10 + $0x80] sm:$0xff]
    %v2444 = vld [vmem:[#allocation10 + $0x88] sm:$0xff]
    %v2445 = vld [vmem:[#allocation10 + $0x90] sm:$0xff]
    %v2446 = vld [vmem:[#allocation10 + $0x98] sm:$0xff]
    %v2447 = vld [vmem:[#allocation10 + $0xa0] sm:$0xff]
    %v2448 = vld [vmem:[#allocation10 + $0xa8] sm:$0xff]
    %v2449 = vld [vmem:[#allocation10 + $0xb0] sm:$0xff]
    %v2450 = vld [vmem:[#allocation10 + $0xb8] sm:$0xff]
    %v2451 = vld [vmem:[#allocation10 + $0xc0] sm:$0xff]
    %v2452 = vld [vmem:[#allocation10 + $0xc8] sm:$0xff]
    %v2453 = vld [vmem:[#allocation10 + $0xd0] sm:$0xff]
    %v2454 = vld [vmem:[#allocation10 + $0xd8] sm:$0xff]
    %v2455 = vld [vmem:[#allocation10 + $0xe0] sm:$0xff]
    %v2456 = vld [vmem:[#allocation10 + $0xe8] sm:$0xff]
    %v2457 = vld [vmem:[#allocation10 + $0xf0] sm:$0xff]
    %v2458 = vld [vmem:[#allocation10 + $0xf8] sm:$0xff]
    %v2459 = vld [vmem:[#allocation10 + $0x100] sm:$0xff]
    %v2460 = vld [vmem:[#allocation10 + $0x108] sm:$0xff]
    %v2461 = vld [vmem:[#allocation10 + $0x110] sm:$0xff]
    %v2462 = vld [vmem:[#allocation10 + $0x118] sm:$0xff]
    %v2463 = vld [vmem:[#allocation10 + $0x120] sm:$0xff]
    %v2464 = vld [vmem:[#allocation10 + $0x128] sm:$0xff]
    %v2465 = vld [vmem:[#allocation10 + $0x130] sm:$0xff]
    %v2466 = vld [vmem:[#allocation10 + $0x138] sm:$0xff]
    %v2467 = vld [vmem:[#allocation10 + $0x140] sm:$0xff]
    %v2468 = vld [vmem:[#allocation10 + $0x148] sm:$0xff]
    %v2469 = vld [vmem:[#allocation10 + $0x150] sm:$0xff]
    %v2470 = vld [vmem:[#allocation10 + $0x158] sm:$0xff]
    %v2471 = vld [vmem:[#allocation10 + $0x160] sm:$0xff]
    %v2472 = vld [vmem:[#allocation10 + $0x168] sm:$0xff]
    %v2473 = vld [vmem:[#allocation10 + $0x170] sm:$0xff]
    %v2474 = vld [vmem:[#allocation10 + $0x178] sm:$0xff]
    %v2475 = vld [vmem:[#allocation10 + $0x180] sm:$0xff]
    %v2476 = vld [vmem:[#allocation10 + $0x188] sm:$0xff]
    %v2477 = vld [vmem:[#allocation10 + $0x190] sm:$0xff]
    %v2478 = vld [vmem:[#allocation10 + $0x198] sm:$0xff]
    %v2479 = vld [vmem:[#allocation10 + $0x1a0] sm:$0xff]
    %v2480 = vld [vmem:[#allocation10 + $0x1a8] sm:$0xff]
    %v2481 = vld [vmem:[#allocation10 + $0x1b0] sm:$0xff]
    %v2482 = vld [vmem:[#allocation10 + $0x1b8] sm:$0xff]
    %v2483 = vld [vmem:[#allocation10 + $0x1c0] sm:$0xff]
    %v2484 = vld [vmem:[#allocation10 + $0x1c8] sm:$0xff]
    %v2485 = vld [vmem:[#allocation10 + $0x1d0] sm:$0xff]
    %v2486 = vld [vmem:[#allocation10 + $0x1d8] sm:$0xff]
    %v2487 = vld [vmem:[#allocation10 + $0x1e0] sm:$0xff]
    %v2488 = vld [vmem:[#allocation10 + $0x1e8] sm:$0xff]
    %v2489 = vld [vmem:[#allocation10 + $0x1f0] sm:$0xff]
    %v2490 = vld [vmem:[#allocation10 + $0x1f8] sm:$0xff]
    %v2491 = vld [vmem:[#allocation10 + $0x200] sm:$0xff]
    %v2492 = vld [vmem:[#allocation10 + $0x208] sm:$0xff]
    %v2493 = vld [vmem:[#allocation10 + $0x210] sm:$0xff]
    %v2494 = vld [vmem:[#allocation10 + $0x218] sm:$0xff]
    %v2495 = vld [vmem:[#allocation10 + $0x220] sm:$0xff]
    %v2496 = vld [vmem:[#allocation10 + $0x228] sm:$0xff]
    %v2497 = vld [vmem:[#allocation10 + $0x230] sm:$0xff]
    %v2498 = vld [vmem:[#allocation10 + $0x238] sm:$0xff]
    %v2499 = vld [vmem:[#allocation10 + $0x240] sm:$0xff]
    %v2500 = vld [vmem:[#allocation10 + $0x248] sm:$0xff]
    %v2501 = vld [vmem:[#allocation10 + $0x250] sm:$0xff]
    %v2502 = vld [vmem:[#allocation10 + $0x258] sm:$0xff]
    %v2503 = vld [vmem:[#allocation10 + $0x260] sm:$0xff]
    %v2504 = vld [vmem:[#allocation10 + $0x268] sm:$0xff]
    %v2505 = vld [vmem:[#allocation10 + $0x270] sm:$0xff]
    %v2506 = vld [vmem:[#allocation10 + $0x278] sm:$0xff]
    %v2507 = vld [vmem:[#allocation10 + $0x280] sm:$0xff]
    %v2508 = vld [vmem:[#allocation10 + $0x288] sm:$0xff]
    %v2509 = vld [vmem:[#allocation10 + $0x290] sm:$0xff]
    %v2510 = vld [vmem:[#allocation10 + $0x298] sm:$0xff]
    %v2511 = vld [vmem:[#allocation10 + $0x2a0] sm:$0xff]
    %v2512 = vld [vmem:[#allocation10 + $0x2a8] sm:$0xff]
    %v2513 = vld [vmem:[#allocation10 + $0x2b0] sm:$0xff]
    %v2514 = vld [vmem:[#allocation10 + $0x2b8] sm:$0xff]
    %v2515 = vld [vmem:[#allocation10 + $0x2c0] sm:$0xff]
    %v2516 = vld [vmem:[#allocation10 + $0x2c8] sm:$0xff]
    %v2517 = vld [vmem:[#allocation10 + $0x2d0] sm:$0xff]
    %v2518 = vld [vmem:[#allocation10 + $0x2d8] sm:$0xff]
    %v2519 = vld [vmem:[#allocation10 + $0x2e0] sm:$0xff]
    %v2520 = vld [vmem:[#allocation10 + $0x2e8] sm:$0xff]
    %v2521 = vld [vmem:[#allocation10 + $0x2f0] sm:$0xff]
    %v2522 = vld [vmem:[#allocation10 + $0x2f8] sm:$0xff]
    %v2523 = vld [vmem:[#allocation10 + $0x300] sm:$0xff]
    %v2524 = vld [vmem:[#allocation10 + $0x308] sm:$0xff]
    %v2525 = vld [vmem:[#allocation10 + $0x310] sm:$0xff]
    %v2526 = vld [vmem:[#allocation10 + $0x318] sm:$0xff]
    %v2527 = vld [vmem:[#allocation10 + $0x320] sm:$0xff]
    %v2528 = vld [vmem:[#allocation10 + $0x328] sm:$0xff]
    %v2529 = vld [vmem:[#allocation10 + $0x330] sm:$0xff]
    %v2530 = vld [vmem:[#allocation10 + $0x338] sm:$0xff]
    %v2531 = vld [vmem:[#allocation10 + $0x340] sm:$0xff]
    %v2532 = vld [vmem:[#allocation10 + $0x348] sm:$0xff]
    %v2533 = vld [vmem:[#allocation10 + $0x350] sm:$0xff]
    %v2534 = vld [vmem:[#allocation10 + $0x358] sm:$0xff]
    %v2535 = vld [vmem:[#allocation10 + $0x360] sm:$0xff]
    %v2536 = vld [vmem:[#allocation10 + $0x368] sm:$0xff]
    %v2537 = vld [vmem:[#allocation10 + $0x370] sm:$0xff]
    %v2538 = vld [vmem:[#allocation10 + $0x378] sm:$0xff]
    %v2539 = vld [vmem:[#allocation10 + $0x380] sm:$0xff]
    %v2540 = vld [vmem:[#allocation10 + $0x388] sm:$0xff]
    %v2541 = vld [vmem:[#allocation10 + $0x390] sm:$0xff]
    %v2542 = vld [vmem:[#allocation10 + $0x398] sm:$0xff]
    %v2543 = vld [vmem:[#allocation10 + $0x3a0] sm:$0xff]
    %v2544 = vld [vmem:[#allocation10 + $0x3a8] sm:$0xff]
    %v2545 = vld [vmem:[#allocation10 + $0x3b0] sm:$0xff]
    %v2546 = vld [vmem:[#allocation10 + $0x3b8] sm:$0xff]
    %v2547 = vld [vmem:[#allocation10 + $0x3c0] sm:$0xff]
    %v2548 = vld [vmem:[#allocation10 + $0x3c8] sm:$0xff]
    %v2549 = vld [vmem:[#allocation10 + $0x3d0] sm:$0xff]
    %v2550 = vld [vmem:[#allocation10 + $0x3d8] sm:$0xff]
    %v2551 = vld [vmem:[#allocation10 + $0x3e0] sm:$0xff]
    %v2552 = vld [vmem:[#allocation10 + $0x3e8] sm:$0xff]
    %v2553 = vld [vmem:[#allocation10 + $0x3f0] sm:$0xff]
    %v2554 = vld [vmem:[#allocation10 + $0x3f8] sm:$0xff]
    %v2555 = vld [vmem:[%s7] sm:$0xf]
    %v2556 = vld [vmem:[#allocation11] sm:$0xff]
    %v2557 = vld [vmem:[#allocation11 + $0x8] sm:$0xff]
    %v2558 = vld [vmem:[#allocation11 + $0x10] sm:$0xff]
    %v2559 = vld [vmem:[#allocation11 + $0x18] sm:$0xff]
    %v2560 = vld [vmem:[#allocation11 + $0x20] sm:$0xff]
    %v2561 = vld [vmem:[#allocation11 + $0x28] sm:$0xff]
    %v2562 = vld [vmem:[#allocation11 + $0x30] sm:$0xff]
    %v2563 = vld [vmem:[#allocation11 + $0x38] sm:$0xff]
    %v2564 = vld [vmem:[#allocation11 + $0x40] sm:$0xff]
    %v2565 = vld [vmem:[#allocation11 + $0x48] sm:$0xff]
    %v2566 = vld [vmem:[#allocation11 + $0x50] sm:$0xff]
    %v2567 = vld [vmem:[#allocation11 + $0x58] sm:$0xff]
    %v2568 = vld [vmem:[#allocation11 + $0x60] sm:$0xff]
    %v2569 = vld [vmem:[#allocation11 + $0x68] sm:$0xff]
    %v2570 = vld [vmem:[#allocation11 + $0x70] sm:$0xff]
    %v2571 = vld [vmem:[#allocation11 + $0x78] sm:$0xff]
    %v2572 = vld [vmem:[#allocation11 + $0x80] sm:$0xff]
    %v2573 = vld [vmem:[#allocation11 + $0x88] sm:$0xff]
    %v2574 = vld [vmem:[#allocation11 + $0x90] sm:$0xff]
    %v2575 = vld [vmem:[#allocation11 + $0x98] sm:$0xff]
    %v2576 = vld [vmem:[#allocation11 + $0xa0] sm:$0xff]
    %v2577 = vld [vmem:[#allocation11 + $0xa8] sm:$0xff]
    %v2578 = vld [vmem:[#allocation11 + $0xb0] sm:$0xff]
    %v2579 = vld [vmem:[#allocation11 + $0xb8] sm:$0xff]
    %v2580 = vld [vmem:[#allocation11 + $0xc0] sm:$0xff]
    %v2581 = vld [vmem:[#allocation11 + $0xc8] sm:$0xff]
    %v2582 = vld [vmem:[#allocation11 + $0xd0] sm:$0xff]
    %v2583 = vld [vmem:[#allocation11 + $0xd8] sm:$0xff]
    %v2584 = vld [vmem:[#allocation11 + $0xe0] sm:$0xff]
    %v2585 = vld [vmem:[#allocation11 + $0xe8] sm:$0xff]
    %v2586 = vld [vmem:[#allocation11 + $0xf0] sm:$0xff]
    %v2587 = vld [vmem:[#allocation11 + $0xf8] sm:$0xff]
    %v2588 = vld [vmem:[#allocation11 + $0x100] sm:$0xff]
    %v2589 = vld [vmem:[#allocation11 + $0x108] sm:$0xff]
    %v2590 = vld [vmem:[#allocation11 + $0x110] sm:$0xff]
    %v2591 = vld [vmem:[#allocation11 + $0x118] sm:$0xff]
    %v2592 = vld [vmem:[#allocation11 + $0x120] sm:$0xff]
    %v2593 = vld [vmem:[#allocation11 + $0x128] sm:$0xff]
    %v2594 = vld [vmem:[#allocation11 + $0x130] sm:$0xff]
    %v2595 = vld [vmem:[#allocation11 + $0x138] sm:$0xff]
    %v2596 = vld [vmem:[#allocation11 + $0x140] sm:$0xff]
    %v2597 = vld [vmem:[#allocation11 + $0x148] sm:$0xff]
    %v2598 = vld [vmem:[#allocation11 + $0x150] sm:$0xff]
    %v2599 = vld [vmem:[#allocation11 + $0x158] sm:$0xff]
    %v2600 = vld [vmem:[#allocation11 + $0x160] sm:$0xff]
    %v2601 = vld [vmem:[#allocation11 + $0x168] sm:$0xff]
    %v2602 = vld [vmem:[#allocation11 + $0x170] sm:$0xff]
    %v2603 = vld [vmem:[#allocation11 + $0x178] sm:$0xff]
    %v2604 = vld [vmem:[#allocation11 + $0x180] sm:$0xff]
    %v2605 = vld [vmem:[#allocation11 + $0x188] sm:$0xff]
    %v2606 = vld [vmem:[#allocation11 + $0x190] sm:$0xff]
    %v2607 = vld [vmem:[#allocation11 + $0x198] sm:$0xff]
    %v2608 = vld [vmem:[#allocation11 + $0x1a0] sm:$0xff]
    %v2609 = vld [vmem:[#allocation11 + $0x1a8] sm:$0xff]
    %v2610 = vld [vmem:[#allocation11 + $0x1b0] sm:$0xff]
    %v2611 = vld [vmem:[#allocation11 + $0x1b8] sm:$0xff]
    %v2612 = vld [vmem:[#allocation11 + $0x1c0] sm:$0xff]
    %v2613 = vld [vmem:[#allocation11 + $0x1c8] sm:$0xff]
    %v2614 = vld [vmem:[#allocation11 + $0x1d0] sm:$0xff]
    %v2615 = vld [vmem:[#allocation11 + $0x1d8] sm:$0xff]
    %v2616 = vld [vmem:[#allocation11 + $0x1e0] sm:$0xff]
    %v2617 = vld [vmem:[#allocation11 + $0x1e8] sm:$0xff]
    %v2618 = vld [vmem:[#allocation11 + $0x1f0] sm:$0xff]
    %v2619 = vld [vmem:[#allocation11 + $0x1f8] sm:$0xff]
    %v2620 = vld [vmem:[#allocation11 + $0x200] sm:$0xff]
    %v2621 = vld [vmem:[#allocation11 + $0x208] sm:$0xff]
    %v2622 = vld [vmem:[#allocation11 + $0x210] sm:$0xff]
    %v2623 = vld [vmem:[#allocation11 + $0x218] sm:$0xff]
    %v2624 = vld [vmem:[#allocation11 + $0x220] sm:$0xff]
    %v2625 = vld [vmem:[#allocation11 + $0x228] sm:$0xff]
    %v2626 = vld [vmem:[#allocation11 + $0x230] sm:$0xff]
    %v2627 = vld [vmem:[#allocation11 + $0x238] sm:$0xff]
    %v2628 = vld [vmem:[#allocation11 + $0x240] sm:$0xff]
    %v2629 = vld [vmem:[#allocation11 + $0x248] sm:$0xff]
    %v2630 = vld [vmem:[#allocation11 + $0x250] sm:$0xff]
    %v2631 = vld [vmem:[#allocation11 + $0x258] sm:$0xff]
    %v2632 = vld [vmem:[#allocation11 + $0x260] sm:$0xff]
    %v2633 = vld [vmem:[#allocation11 + $0x268] sm:$0xff]
    %v2634 = vld [vmem:[#allocation11 + $0x270] sm:$0xff]
    %v2635 = vld [vmem:[#allocation11 + $0x278] sm:$0xff]
    %v2636 = vld [vmem:[#allocation11 + $0x280] sm:$0xff]
    %v2637 = vld [vmem:[#allocation11 + $0x288] sm:$0xff]
    %v2638 = vld [vmem:[#allocation11 + $0x290] sm:$0xff]
    %v2639 = vld [vmem:[#allocation11 + $0x298] sm:$0xff]
    %v2640 = vld [vmem:[#allocation11 + $0x2a0] sm:$0xff]
    %v2641 = vld [vmem:[#allocation11 + $0x2a8] sm:$0xff]
    %v2642 = vld [vmem:[#allocation11 + $0x2b0] sm:$0xff]
    %v2643 = vld [vmem:[#allocation11 + $0x2b8] sm:$0xff]
    %v2644 = vld [vmem:[#allocation11 + $0x2c0] sm:$0xff]
    %v2645 = vld [vmem:[#allocation11 + $0x2c8] sm:$0xff]
    %v2646 = vld [vmem:[#allocation11 + $0x2d0] sm:$0xff]
    %v2647 = vld [vmem:[#allocation11 + $0x2d8] sm:$0xff]
    %v2648 = vld [vmem:[#allocation11 + $0x2e0] sm:$0xff]
    %v2649 = vld [vmem:[#allocation11 + $0x2e8] sm:$0xff]
    %v2650 = vld [vmem:[#allocation11 + $0x2f0] sm:$0xff]
    %v2651 = vld [vmem:[#allocation11 + $0x2f8] sm:$0xff]
    %v2652 = vld [vmem:[#allocation11 + $0x300] sm:$0xff]
    %v2653 = vld [vmem:[#allocation11 + $0x308] sm:$0xff]
    %v2654 = vld [vmem:[#allocation11 + $0x310] sm:$0xff]
    %v2655 = vld [vmem:[#allocation11 + $0x318] sm:$0xff]
    %v2656 = vld [vmem:[#allocation11 + $0x320] sm:$0xff]
    %v2657 = vld [vmem:[#allocation11 + $0x328] sm:$0xff]
    %v2658 = vld [vmem:[#allocation11 + $0x330] sm:$0xff]
    %v2659 = vld [vmem:[#allocation11 + $0x338] sm:$0xff]
    %v2660 = vld [vmem:[#allocation11 + $0x340] sm:$0xff]
    %v2661 = vld [vmem:[#allocation11 + $0x348] sm:$0xff]
    %v2662 = vld [vmem:[#allocation11 + $0x350] sm:$0xff]
    %v2663 = vld [vmem:[#allocation11 + $0x358] sm:$0xff]
    %v2664 = vld [vmem:[#allocation11 + $0x360] sm:$0xff]
    %v2665 = vld [vmem:[#allocation11 + $0x368] sm:$0xff]
    %v2666 = vld [vmem:[#allocation11 + $0x370] sm:$0xff]
    %v2667 = vld [vmem:[#allocation11 + $0x378] sm:$0xff]
    %v2668 = vld [vmem:[#allocation11 + $0x380] sm:$0xff]
    %v2669 = vld [vmem:[#allocation11 + $0x388] sm:$0xff]
    %v2670 = vld [vmem:[#allocation11 + $0x390] sm:$0xff]
    %v2671 = vld [vmem:[#allocation11 + $0x398] sm:$0xff]
    %v2672 = vld [vmem:[#allocation11 + $0x3a0] sm:$0xff]
    %v2673 = vld [vmem:[#allocation11 + $0x3a8] sm:$0xff]
    %v2674 = vld [vmem:[#allocation11 + $0x3b0] sm:$0xff]
    %v2675 = vld [vmem:[#allocation11 + $0x3b8] sm:$0xff]
    %v2676 = vld [vmem:[#allocation11 + $0x3c0] sm:$0xff]
    %v2677 = vld [vmem:[#allocation11 + $0x3c8] sm:$0xff]
    %v2678 = vld [vmem:[#allocation11 + $0x3d0] sm:$0xff]
    %v2679 = vld [vmem:[#allocation11 + $0x3d8] sm:$0xff]
    %v2680 = vld [vmem:[#allocation11 + $0x3e0] sm:$0xff]
    %v2681 = vld [vmem:[#allocation11 + $0x3e8] sm:$0xff]
    %v2682 = vld [vmem:[#allocation11 + $0x3f0] sm:$0xff]
    %v2683 = vld [vmem:[#allocation11 + $0x3f8] sm:$0xff]
    %v2684 = vld [vmem:[%s9] sm:$0xf]
    %v2686 = vlaneseq
    %v2687 = vshrl.u32 %v2686, 7
    %v2688 = vsub.s32 0, %v2687
    %v2689 = vrot.slane %v2555, %v2688
    %v2690 = vlaneseq
    %v2691 = vshrl.u32 %v2690, 7
    %v2692 = vsub.s32 1, %v2691
    %v2693 = vrot.slane %v2555, %v2692
    %v2694 = vlaneseq
    %v2695 = vshrl.u32 %v2694, 7
    %v2696 = vsub.s32 2, %v2695
    %v2697 = vrot.slane %v2555, %v2696
    %v2698 = vlaneseq
    %v2699 = vshrl.u32 %v2698, 7
    %v2700 = vsub.s32 3, %v2699
    %v2701 = vrot.slane %v2555, %v2700
    %v2722 = vunpack.c.l.b16 %v135
    %v2723 = vunpack.c.h.b16 %v135
    %v2724 = vunpack.c.l.b16 %v136
    %v2725 = vunpack.c.h.b16 %v136
    %v2726 = vunpack.c.l.b16 %v137
    %v2727 = vunpack.c.h.b16 %v137
    %v2728 = vunpack.c.l.b16 %v138
    %v2729 = vunpack.c.h.b16 %v138
    %v2730 = vunpack.c.l.b16 %v139
    %v2731 = vunpack.c.h.b16 %v139
    %v2732 = vunpack.c.l.b16 %v140
    %v2733 = vunpack.c.h.b16 %v140
    %v2734 = vunpack.c.l.b16 %v141
    %v2735 = vunpack.c.h.b16 %v141
    %v2736 = vunpack.c.l.b16 %v142
    %v2737 = vunpack.c.h.b16 %v142
    %v2738 = vunpack.c.l.b16 %v143
    %v2739 = vunpack.c.h.b16 %v143
    %v2740 = vunpack.c.l.b16 %v144
    %v2741 = vunpack.c.h.b16 %v144
    %v2742 = vunpack.c.l.b16 %v145
    %v2743 = vunpack.c.h.b16 %v145
    %v2744 = vunpack.c.l.b16 %v146
    %v2745 = vunpack.c.h.b16 %v146
    %v2746 = vunpack.c.l.b16 %v147
    %v2747 = vunpack.c.h.b16 %v147
    %v2748 = vunpack.c.l.b16 %v148
    %v2749 = vunpack.c.h.b16 %v148
    %v2750 = vunpack.c.l.b16 %v149
    %v2751 = vunpack.c.h.b16 %v149
    %v2752 = vunpack.c.l.b16 %v150
    %v2753 = vunpack.c.h.b16 %v150
    %v2754 = vpack.c.b16 %v2726, %v2722
    %v2755 = vpack.c.b16 %v2727, %v2723
    %v2756 = vpack.c.b16 %v2728, %v2724
    %v2757 = vpack.c.b16 %v2729, %v2725
    %v2758 = vpack.c.b16 %v2734, %v2730
    %v2759 = vpack.c.b16 %v2735, %v2731
    %v2760 = vpack.c.b16 %v2736, %v2732
    %v2761 = vpack.c.b16 %v2737, %v2733
    %v2762 = vpack.c.b16 %v2742, %v2738
    %v2763 = vpack.c.b16 %v2743, %v2739
    %v2764 = vpack.c.b16 %v2744, %v2740
    %v2765 = vpack.c.b16 %v2745, %v2741
    %v2766 = vpack.c.b16 %v2750, %v2746
    %v2767 = vpack.c.b16 %v2751, %v2747
    %v2768 = vpack.c.b16 %v2752, %v2748
    %v2769 = vpack.c.b16 %v2753, %v2749
    %v2914 = vunpack.c.l.b16 %v2427
    %v2915 = vunpack.c.h.b16 %v2427
    %v2916 = vunpack.c.l.b16 %v2428
    %v2917 = vunpack.c.h.b16 %v2428
    %v2918 = vunpack.c.l.b16 %v2429
    %v2919 = vunpack.c.h.b16 %v2429
    %v2920 = vunpack.c.l.b16 %v2430
    %v2921 = vunpack.c.h.b16 %v2430
    %v2922 = vunpack.c.l.b16 %v2431
    %v2923 = vunpack.c.h.b16 %v2431
    %v2924 = vunpack.c.l.b16 %v2432
    %v2925 = vunpack.c.h.b16 %v2432
    %v2926 = vunpack.c.l.b16 %v2433
    %v2927 = vunpack.c.h.b16 %v2433
    %v2928 = vunpack.c.l.b16 %v2434
    %v2929 = vunpack.c.h.b16 %v2434
    %v2930 = vunpack.c.l.b16 %v2435
    %v2931 = vunpack.c.h.b16 %v2435
    %v2932 = vunpack.c.l.b16 %v2436
    %v2933 = vunpack.c.h.b16 %v2436
    %v2934 = vunpack.c.l.b16 %v2437
    %v2935 = vunpack.c.h.b16 %v2437
    %v2936 = vunpack.c.l.b16 %v2438
    %v2937 = vunpack.c.h.b16 %v2438
    %v2938 = vunpack.c.l.b16 %v2439
    %v2939 = vunpack.c.h.b16 %v2439
    %v2940 = vunpack.c.l.b16 %v2440
    %v2941 = vunpack.c.h.b16 %v2440
    %v2942 = vunpack.c.l.b16 %v2441
    %v2943 = vunpack.c.h.b16 %v2441
    %v2944 = vunpack.c.l.b16 %v2442
    %v2945 = vunpack.c.h.b16 %v2442
    %v2946 = vunpack.c.l.b16 %v2443
    %v2947 = vunpack.c.h.b16 %v2443
    %v2948 = vunpack.c.l.b16 %v2444
    %v2949 = vunpack.c.h.b16 %v2444
    %v2950 = vunpack.c.l.b16 %v2445
    %v2951 = vunpack.c.h.b16 %v2445
    %v2952 = vunpack.c.l.b16 %v2446
    %v2953 = vunpack.c.h.b16 %v2446
    %v2954 = vunpack.c.l.b16 %v2447
    %v2955 = vunpack.c.h.b16 %v2447
    %v2956 = vunpack.c.l.b16 %v2448
    %v2957 = vunpack.c.h.b16 %v2448
    %v2958 = vunpack.c.l.b16 %v2449
    %v2959 = vunpack.c.h.b16 %v2449
    %v2960 = vunpack.c.l.b16 %v2450
    %v2961 = vunpack.c.h.b16 %v2450
    %v2962 = vunpack.c.l.b16 %v2451
    %v2963 = vunpack.c.h.b16 %v2451
    %v2964 = vunpack.c.l.b16 %v2452
    %v2965 = vunpack.c.h.b16 %v2452
    %v2966 = vunpack.c.l.b16 %v2453
    %v2967 = vunpack.c.h.b16 %v2453
    %v2968 = vunpack.c.l.b16 %v2454
    %v2969 = vunpack.c.h.b16 %v2454
    %v2970 = vunpack.c.l.b16 %v2455
    %v2971 = vunpack.c.h.b16 %v2455
    %v2972 = vunpack.c.l.b16 %v2456
    %v2973 = vunpack.c.h.b16 %v2456
    %v2974 = vunpack.c.l.b16 %v2457
    %v2975 = vunpack.c.h.b16 %v2457
    %v2976 = vunpack.c.l.b16 %v2458
    %v2977 = vunpack.c.h.b16 %v2458
    %v2978 = vunpack.c.l.b16 %v2459
    %v2979 = vunpack.c.h.b16 %v2459
    %v2980 = vunpack.c.l.b16 %v2460
    %v2981 = vunpack.c.h.b16 %v2460
    %v2982 = vunpack.c.l.b16 %v2461
    %v2983 = vunpack.c.h.b16 %v2461
    %v2984 = vunpack.c.l.b16 %v2462
    %v2985 = vunpack.c.h.b16 %v2462
    %v2986 = vunpack.c.l.b16 %v2463
    %v2987 = vunpack.c.h.b16 %v2463
    %v2988 = vunpack.c.l.b16 %v2464
    %v2989 = vunpack.c.h.b16 %v2464
    %v2990 = vunpack.c.l.b16 %v2465
    %v2991 = vunpack.c.h.b16 %v2465
    %v2992 = vunpack.c.l.b16 %v2466
    %v2993 = vunpack.c.h.b16 %v2466
    %v2994 = vunpack.c.l.b16 %v2467
    %v2995 = vunpack.c.h.b16 %v2467
    %v2996 = vunpack.c.l.b16 %v2468
    %v2997 = vunpack.c.h.b16 %v2468
    %v2998 = vunpack.c.l.b16 %v2469
    %v2999 = vunpack.c.h.b16 %v2469
    %v3000 = vunpack.c.l.b16 %v2470
    %v3001 = vunpack.c.h.b16 %v2470
    %v3002 = vunpack.c.l.b16 %v2471
    %v3003 = vunpack.c.h.b16 %v2471
    %v3004 = vunpack.c.l.b16 %v2472
    %v3005 = vunpack.c.h.b16 %v2472
    %v3006 = vunpack.c.l.b16 %v2473
    %v3007 = vunpack.c.h.b16 %v2473
    %v3008 = vunpack.c.l.b16 %v2474
    %v3009 = vunpack.c.h.b16 %v2474
    %v3010 = vunpack.c.l.b16 %v2475
    %v3011 = vunpack.c.h.b16 %v2475
    %v3012 = vunpack.c.l.b16 %v2476
    %v3013 = vunpack.c.h.b16 %v2476
    %v3014 = vunpack.c.l.b16 %v2477
    %v3015 = vunpack.c.h.b16 %v2477
    %v3016 = vunpack.c.l.b16 %v2478
    %v3017 = vunpack.c.h.b16 %v2478
    %v3018 = vunpack.c.l.b16 %v2479
    %v3019 = vunpack.c.h.b16 %v2479
    %v3020 = vunpack.c.l.b16 %v2480
    %v3021 = vunpack.c.h.b16 %v2480
    %v3022 = vunpack.c.l.b16 %v2481
    %v3023 = vunpack.c.h.b16 %v2481
    %v3024 = vunpack.c.l.b16 %v2482
    %v3025 = vunpack.c.h.b16 %v2482
    %v3026 = vunpack.c.l.b16 %v2483
    %v3027 = vunpack.c.h.b16 %v2483
    %v3028 = vunpack.c.l.b16 %v2484
    %v3029 = vunpack.c.h.b16 %v2484
    %v3030 = vunpack.c.l.b16 %v2485
    %v3031 = vunpack.c.h.b16 %v2485
    %v3032 = vunpack.c.l.b16 %v2486
    %v3033 = vunpack.c.h.b16 %v2486
    %v3034 = vunpack.c.l.b16 %v2487
    %v3035 = vunpack.c.h.b16 %v2487
    %v3036 = vunpack.c.l.b16 %v2488
    %v3037 = vunpack.c.h.b16 %v2488
    %v3038 = vunpack.c.l.b16 %v2489
    %v3039 = vunpack.c.h.b16 %v2489
    %v3040 = vunpack.c.l.b16 %v2490
    %v3041 = vunpack.c.h.b16 %v2490
    %v3042 = vunpack.c.l.b16 %v2491
    %v3043 = vunpack.c.h.b16 %v2491
    %v3044 = vunpack.c.l.b16 %v2492
    %v3045 = vunpack.c.h.b16 %v2492
    %v3046 = vunpack.c.l.b16 %v2493
    %v3047 = vunpack.c.h.b16 %v2493
    %v3048 = vunpack.c.l.b16 %v2494
    %v3049 = vunpack.c.h.b16 %v2494
    %v3050 = vunpack.c.l.b16 %v2495
    %v3051 = vunpack.c.h.b16 %v2495
    %v3052 = vunpack.c.l.b16 %v2496
    %v3053 = vunpack.c.h.b16 %v2496
    %v3054 = vunpack.c.l.b16 %v2497
    %v3055 = vunpack.c.h.b16 %v2497
    %v3056 = vunpack.c.l.b16 %v2498
    %v3057 = vunpack.c.h.b16 %v2498
    %v3058 = vunpack.c.l.b16 %v2499
    %v3059 = vunpack.c.h.b16 %v2499
    %v3060 = vunpack.c.l.b16 %v2500
    %v3061 = vunpack.c.h.b16 %v2500
    %v3062 = vunpack.c.l.b16 %v2501
    %v3063 = vunpack.c.h.b16 %v2501
    %v3064 = vunpack.c.l.b16 %v2502
    %v3065 = vunpack.c.h.b16 %v2502
    %v3066 = vunpack.c.l.b16 %v2503
    %v3067 = vunpack.c.h.b16 %v2503
    %v3068 = vunpack.c.l.b16 %v2504
    %v3069 = vunpack.c.h.b16 %v2504
    %v3070 = vunpack.c.l.b16 %v2505
    %v3071 = vunpack.c.h.b16 %v2505
    %v3072 = vunpack.c.l.b16 %v2506
    %v3073 = vunpack.c.h.b16 %v2506
    %v3074 = vunpack.c.l.b16 %v2507
    %v3075 = vunpack.c.h.b16 %v2507
    %v3076 = vunpack.c.l.b16 %v2508
    %v3077 = vunpack.c.h.b16 %v2508
    %v3078 = vunpack.c.l.b16 %v2509
    %v3079 = vunpack.c.h.b16 %v2509
    %v3080 = vunpack.c.l.b16 %v2510
    %v3081 = vunpack.c.h.b16 %v2510
    %v3082 = vunpack.c.l.b16 %v2511
    %v3083 = vunpack.c.h.b16 %v2511
    %v3084 = vunpack.c.l.b16 %v2512
    %v3085 = vunpack.c.h.b16 %v2512
    %v3086 = vunpack.c.l.b16 %v2513
    %v3087 = vunpack.c.h.b16 %v2513
    %v3088 = vunpack.c.l.b16 %v2514
    %v3089 = vunpack.c.h.b16 %v2514
    %v3090 = vunpack.c.l.b16 %v2515
    %v3091 = vunpack.c.h.b16 %v2515
    %v3092 = vunpack.c.l.b16 %v2516
    %v3093 = vunpack.c.h.b16 %v2516
    %v3094 = vunpack.c.l.b16 %v2517
    %v3095 = vunpack.c.h.b16 %v2517
    %v3096 = vunpack.c.l.b16 %v2518
    %v3097 = vunpack.c.h.b16 %v2518
    %v3098 = vunpack.c.l.b16 %v2519
    %v3099 = vunpack.c.h.b16 %v2519
    %v3100 = vunpack.c.l.b16 %v2520
    %v3101 = vunpack.c.h.b16 %v2520
    %v3102 = vunpack.c.l.b16 %v2521
    %v3103 = vunpack.c.h.b16 %v2521
    %v3104 = vunpack.c.l.b16 %v2522
    %v3105 = vunpack.c.h.b16 %v2522
    %v3106 = vunpack.c.l.b16 %v2523
    %v3107 = vunpack.c.h.b16 %v2523
    %v3108 = vunpack.c.l.b16 %v2524
    %v3109 = vunpack.c.h.b16 %v2524
    %v3110 = vunpack.c.l.b16 %v2525
    %v3111 = vunpack.c.h.b16 %v2525
    %v3112 = vunpack.c.l.b16 %v2526
    %v3113 = vunpack.c.h.b16 %v2526
    %v3114 = vunpack.c.l.b16 %v2527
    %v3115 = vunpack.c.h.b16 %v2527
    %v3116 = vunpack.c.l.b16 %v2528
    %v3117 = vunpack.c.h.b16 %v2528
    %v3118 = vunpack.c.l.b16 %v2529
    %v3119 = vunpack.c.h.b16 %v2529
    %v3120 = vunpack.c.l.b16 %v2530
    %v3121 = vunpack.c.h.b16 %v2530
    %v3122 = vunpack.c.l.b16 %v2531
    %v3123 = vunpack.c.h.b16 %v2531
    %v3124 = vunpack.c.l.b16 %v2532
    %v3125 = vunpack.c.h.b16 %v2532
    %v3126 = vunpack.c.l.b16 %v2533
    %v3127 = vunpack.c.h.b16 %v2533
    %v3128 = vunpack.c.l.b16 %v2534
    %v3129 = vunpack.c.h.b16 %v2534
    %v3130 = vunpack.c.l.b16 %v2535
    %v3131 = vunpack.c.h.b16 %v2535
    %v3132 = vunpack.c.l.b16 %v2536
    %v3133 = vunpack.c.h.b16 %v2536
    %v3134 = vunpack.c.l.b16 %v2537
    %v3135 = vunpack.c.h.b16 %v2537
    %v3136 = vunpack.c.l.b16 %v2538
    %v3137 = vunpack.c.h.b16 %v2538
    %v3138 = vunpack.c.l.b16 %v2539
    %v3139 = vunpack.c.h.b16 %v2539
    %v3140 = vunpack.c.l.b16 %v2540
    %v3141 = vunpack.c.h.b16 %v2540
    %v3142 = vunpack.c.l.b16 %v2541
    %v3143 = vunpack.c.h.b16 %v2541
    %v3144 = vunpack.c.l.b16 %v2542
    %v3145 = vunpack.c.h.b16 %v2542
    %v3146 = vunpack.c.l.b16 %v2543
    %v3147 = vunpack.c.h.b16 %v2543
    %v3148 = vunpack.c.l.b16 %v2544
    %v3149 = vunpack.c.h.b16 %v2544
    %v3150 = vunpack.c.l.b16 %v2545
    %v3151 = vunpack.c.h.b16 %v2545
    %v3152 = vunpack.c.l.b16 %v2546
    %v3153 = vunpack.c.h.b16 %v2546
    %v3154 = vunpack.c.l.b16 %v2547
    %v3155 = vunpack.c.h.b16 %v2547
    %v3156 = vunpack.c.l.b16 %v2548
    %v3157 = vunpack.c.h.b16 %v2548
    %v3158 = vunpack.c.l.b16 %v2549
    %v3159 = vunpack.c.h.b16 %v2549
    %v3160 = vunpack.c.l.b16 %v2550
    %v3161 = vunpack.c.h.b16 %v2550
    %v3162 = vunpack.c.l.b16 %v2551
    %v3163 = vunpack.c.h.b16 %v2551
    %v3164 = vunpack.c.l.b16 %v2552
    %v3165 = vunpack.c.h.b16 %v2552
    %v3166 = vunpack.c.l.b16 %v2553
    %v3167 = vunpack.c.h.b16 %v2553
    %v3168 = vunpack.c.l.b16 %v2554
    %v3169 = vunpack.c.h.b16 %v2554
    %v3170 = vpack.c.b16 %v2918, %v2914
    %v3171 = vpack.c.b16 %v2919, %v2915
    %v3172 = vpack.c.b16 %v2920, %v2916
    %v3173 = vpack.c.b16 %v2921, %v2917
    %v3174 = vpack.c.b16 %v2926, %v2922
    %v3175 = vpack.c.b16 %v2927, %v2923
    %v3176 = vpack.c.b16 %v2928, %v2924
    %v3177 = vpack.c.b16 %v2929, %v2925
    %v3178 = vpack.c.b16 %v2934, %v2930
    %v3179 = vpack.c.b16 %v2935, %v2931
    %v3180 = vpack.c.b16 %v2936, %v2932
    %v3181 = vpack.c.b16 %v2937, %v2933
    %v3182 = vpack.c.b16 %v2942, %v2938
    %v3183 = vpack.c.b16 %v2943, %v2939
    %v3184 = vpack.c.b16 %v2944, %v2940
    %v3185 = vpack.c.b16 %v2945, %v2941
    %v3186 = vpack.c.b16 %v2950, %v2946
    %v3187 = vpack.c.b16 %v2951, %v2947
    %v3188 = vpack.c.b16 %v2952, %v2948
    %v3189 = vpack.c.b16 %v2953, %v2949
    %v3190 = vpack.c.b16 %v2958, %v2954
    %v3191 = vpack.c.b16 %v2959, %v2955
    %v3192 = vpack.c.b16 %v2960, %v2956
    %v3193 = vpack.c.b16 %v2961, %v2957
    %v3194 = vpack.c.b16 %v2966, %v2962
    %v3195 = vpack.c.b16 %v2967, %v2963
    %v3196 = vpack.c.b16 %v2968, %v2964
    %v3197 = vpack.c.b16 %v2969, %v2965
    %v3198 = vpack.c.b16 %v2974, %v2970
    %v3199 = vpack.c.b16 %v2975, %v2971
    %v3200 = vpack.c.b16 %v2976, %v2972
    %v3201 = vpack.c.b16 %v2977, %v2973
    %v3202 = vpack.c.b16 %v2982, %v2978
    %v3203 = vpack.c.b16 %v2983, %v2979
    %v3204 = vpack.c.b16 %v2984, %v2980
    %v3205 = vpack.c.b16 %v2985, %v2981
    %v3206 = vpack.c.b16 %v2990, %v2986
    %v3207 = vpack.c.b16 %v2991, %v2987
    %v3208 = vpack.c.b16 %v2992, %v2988
    %v3209 = vpack.c.b16 %v2993, %v2989
    %v3210 = vpack.c.b16 %v2998, %v2994
    %v3211 = vpack.c.b16 %v2999, %v2995
    %v3212 = vpack.c.b16 %v3000, %v2996
    %v3213 = vpack.c.b16 %v3001, %v2997
    %v3214 = vpack.c.b16 %v3006, %v3002
    %v3215 = vpack.c.b16 %v3007, %v3003
    %v3216 = vpack.c.b16 %v3008, %v3004
    %v3217 = vpack.c.b16 %v3009, %v3005
    %v3218 = vpack.c.b16 %v3014, %v3010
    %v3219 = vpack.c.b16 %v3015, %v3011
    %v3220 = vpack.c.b16 %v3016, %v3012
    %v3221 = vpack.c.b16 %v3017, %v3013
    %v3222 = vpack.c.b16 %v3022, %v3018
    %v3223 = vpack.c.b16 %v3023, %v3019
    %v3224 = vpack.c.b16 %v3024, %v3020
    %v3225 = vpack.c.b16 %v3025, %v3021
    %v3226 = vpack.c.b16 %v3030, %v3026
    %v3227 = vpack.c.b16 %v3031, %v3027
    %v3228 = vpack.c.b16 %v3032, %v3028
    %v3229 = vpack.c.b16 %v3033, %v3029
    %v3230 = vpack.c.b16 %v3038, %v3034
    %v3231 = vpack.c.b16 %v3039, %v3035
    %v3232 = vpack.c.b16 %v3040, %v3036
    %v3233 = vpack.c.b16 %v3041, %v3037
    %v3234 = vpack.c.b16 %v3046, %v3042
    %v3235 = vpack.c.b16 %v3047, %v3043
    %v3236 = vpack.c.b16 %v3048, %v3044
    %v3237 = vpack.c.b16 %v3049, %v3045
    %v3238 = vpack.c.b16 %v3054, %v3050
    %v3239 = vpack.c.b16 %v3055, %v3051
    %v3240 = vpack.c.b16 %v3056, %v3052
    %v3241 = vpack.c.b16 %v3057, %v3053
    %v3242 = vpack.c.b16 %v3062, %v3058
    %v3243 = vpack.c.b16 %v3063, %v3059
    %v3244 = vpack.c.b16 %v3064, %v3060
    %v3245 = vpack.c.b16 %v3065, %v3061
    %v3246 = vpack.c.b16 %v3070, %v3066
    %v3247 = vpack.c.b16 %v3071, %v3067
    %v3248 = vpack.c.b16 %v3072, %v3068
    %v3249 = vpack.c.b16 %v3073, %v3069
    %v3250 = vpack.c.b16 %v3078, %v3074
    %v3251 = vpack.c.b16 %v3079, %v3075
    %v3252 = vpack.c.b16 %v3080, %v3076
    %v3253 = vpack.c.b16 %v3081, %v3077
    %v3254 = vpack.c.b16 %v3086, %v3082
    %v3255 = vpack.c.b16 %v3087, %v3083
    %v3256 = vpack.c.b16 %v3088, %v3084
    %v3257 = vpack.c.b16 %v3089, %v3085
    %v3258 = vpack.c.b16 %v3094, %v3090
    %v3259 = vpack.c.b16 %v3095, %v3091
    %v3260 = vpack.c.b16 %v3096, %v3092
    %v3261 = vpack.c.b16 %v3097, %v3093
    %v3262 = vpack.c.b16 %v3102, %v3098
    %v3263 = vpack.c.b16 %v3103, %v3099
    %v3264 = vpack.c.b16 %v3104, %v3100
    %v3265 = vpack.c.b16 %v3105, %v3101
    %v3266 = vpack.c.b16 %v3110, %v3106
    %v3267 = vpack.c.b16 %v3111, %v3107
    %v3268 = vpack.c.b16 %v3112, %v3108
    %v3269 = vpack.c.b16 %v3113, %v3109
    %v3270 = vpack.c.b16 %v3118, %v3114
    %v3271 = vpack.c.b16 %v3119, %v3115
    %v3272 = vpack.c.b16 %v3120, %v3116
    %v3273 = vpack.c.b16 %v3121, %v3117
    %v3274 = vpack.c.b16 %v3126, %v3122
    %v3275 = vpack.c.b16 %v3127, %v3123
    %v3276 = vpack.c.b16 %v3128, %v3124
    %v3277 = vpack.c.b16 %v3129, %v3125
    %v3278 = vpack.c.b16 %v3134, %v3130
    %v3279 = vpack.c.b16 %v3135, %v3131
    %v3280 = vpack.c.b16 %v3136, %v3132
    %v3281 = vpack.c.b16 %v3137, %v3133
    %v3282 = vpack.c.b16 %v3142, %v3138
    %v3283 = vpack.c.b16 %v3143, %v3139
    %v3284 = vpack.c.b16 %v3144, %v3140
    %v3285 = vpack.c.b16 %v3145, %v3141
    %v3286 = vpack.c.b16 %v3150, %v3146
    %v3287 = vpack.c.b16 %v3151, %v3147
    %v3288 = vpack.c.b16 %v3152, %v3148
    %v3289 = vpack.c.b16 %v3153, %v3149
    %v3290 = vpack.c.b16 %v3158, %v3154
    %v3291 = vpack.c.b16 %v3159, %v3155
    %v3292 = vpack.c.b16 %v3160, %v3156
    %v3293 = vpack.c.b16 %v3161, %v3157
    %v3294 = vpack.c.b16 %v3166, %v3162
    %v3295 = vpack.c.b16 %v3167, %v3163
    %v3296 = vpack.c.b16 %v3168, %v3164
    %v3297 = vpack.c.b16 %v3169, %v3165
    %3426 = vmatprep.subr.bf16.mxu0 %v3199
    %3427 = vmatpush1.bf16.msra.mxu0 %v3198
    %3428 = vmatprep.subr.bf16.mxu0 %v3195
    %3429 = vmatpush1.bf16.msra.mxu0 %v3194
    %3430 = vmatprep.subr.bf16.mxu0 %v3191
    %3431 = vmatpush1.bf16.msra.mxu0 %v3190
    %3432 = vmatprep.subr.bf16.mxu0 %v3187
    %3433 = vmatpush1.bf16.msra.mxu0 %v3186
    %3434 = vmatprep.subr.bf16.mxu0 %v3183
    %3435 = vmatpush1.bf16.msra.mxu0 %v3182
    %3436 = vmatprep.subr.bf16.mxu0 %v3179
    %3437 = vmatpush1.bf16.msra.mxu0 %v3178
    %3438 = vmatprep.subr.bf16.mxu0 %v3175
    %3439 = vmatpush1.bf16.msra.mxu0 %v3174
    %3440 = vmatprep.subr.bf16.mxu0 %v3171
    %3441 = vmatpush1.bf16.msra.mxu0 %v3170
    %3442 = vmatprep.subr.bf16.mxu0 %v3231
    %3443 = vmatpush2.bf16.msra.mxu0 %v3230
    %3444 = vmatprep.subr.bf16.mxu0 %v3227
    %3445 = vmatpush2.bf16.msra.mxu0 %v3226
    %3446 = vmatprep.subr.bf16.mxu0 %v3223
    %3447 = vmatpush2.bf16.msra.mxu0 %v3222
    %3448 = vmatprep.subr.bf16.mxu0 %v3219
    %3449 = vmatpush2.bf16.msra.mxu0 %v3218
    %3450 = vmatprep.subr.bf16.mxu0 %v3215
    %3451 = vmatpush2.bf16.msra.mxu0 %v3214
    %3452 = vmatprep.subr.bf16.mxu0 %v3211
    %3453 = vmatpush2.bf16.msra.mxu0 %v3210
    %3454 = vmatprep.subr.bf16.mxu0 %v3207
    %3455 = vmatpush2.bf16.msra.mxu0 %v3206
    %3456 = vmatprep.subr.bf16.mxu0 %v3203
    %3457 = vmatpush2.bf16.msra.mxu0 %v3202
    %3458 = vmatprep.mubr.bf16.mxu0 %v2755
    %3459 = vmatmul.mubr.bf16.gmra.mxu0 %v2754
    %v3460 = vpop.f32.mrf.mxu0
    %v3461 = vadd.f32 %v2689, %v3460
    %v3462 = vpop.f32.mrf.mxu0
    %v3463 = vadd.f32 %v2693, %v3462
    %v3464 = vpop.f32.mrf.mxu0
    %v3465 = vadd.f32 %v2689, %v3464
    %v3466 = vpop.f32.mrf.mxu0
    %v3467 = vadd.f32 %v2693, %v3466
    %3468 = vmatprep.mubr.bf16.mxu0 %v2759
    %3469 = vmatmul.mubr.bf16.gmra.mxu0 %v2758
    %v3470 = vpop.f32.mrf.mxu0
    %v3471 = vadd.f32 %v2689, %v3470
    %v3472 = vpop.f32.mrf.mxu0
    %v3473 = vadd.f32 %v2693, %v3472
    %v3474 = vpop.f32.mrf.mxu0
    %v3475 = vadd.f32 %v2689, %v3474
    %v3476 = vpop.f32.mrf.mxu0
    %v3477 = vadd.f32 %v2693, %v3476
    %3478 = vmatprep.mubr.bf16.mxu0 %v2763
    %3479 = vmatmul.mubr.bf16.gmra.mxu0 %v2762
    %v3480 = vpop.f32.mrf.mxu0
    %v3481 = vadd.f32 %v2689, %v3480
    %v3482 = vpop.f32.mrf.mxu0
    %v3483 = vadd.f32 %v2693, %v3482
    %v3484 = vpop.f32.mrf.mxu0
    %v3485 = vadd.f32 %v2689, %v3484
    %v3486 = vpop.f32.mrf.mxu0
    %v3487 = vadd.f32 %v2693, %v3486
    %3488 = vmatprep.mubr.bf16.mxu0 %v2767
    %3489 = vmatmul.mubr.bf16.gmra.mxu0 %v2766
    %v3490 = vpop.f32.mrf.mxu0
    %v3491 = vadd.f32 %v2689, %v3490
    %v3492 = vpop.f32.mrf.mxu0
    %v3493 = vadd.f32 %v2693, %v3492
    %v3494 = vpop.f32.mrf.mxu0
    %v3495 = vadd.f32 %v2689, %v3494
    %v3496 = vpop.f32.mrf.mxu0
    %v3497 = vadd.f32 %v2693, %v3496
    %3498 = vdwg.mxu0
    %3499 = vmatprep.subr.bf16.mxu0 %v3263
    %3500 = vmatpush1.bf16.msra.mxu0 %v3262
    %3501 = vmatprep.subr.bf16.mxu0 %v3259
    %3502 = vmatpush1.bf16.msra.mxu0 %v3258
    %3503 = vmatprep.subr.bf16.mxu0 %v3255
    %3504 = vmatpush1.bf16.msra.mxu0 %v3254
    %3505 = vmatprep.subr.bf16.mxu0 %v3251
    %3506 = vmatpush1.bf16.msra.mxu0 %v3250
    %3507 = vmatprep.subr.bf16.mxu0 %v3247
    %3508 = vmatpush1.bf16.msra.mxu0 %v3246
    %3509 = vmatprep.subr.bf16.mxu0 %v3243
    %3510 = vmatpush1.bf16.msra.mxu0 %v3242
    %3511 = vmatprep.subr.bf16.mxu0 %v3239
    %3512 = vmatpush1.bf16.msra.mxu0 %v3238
    %3513 = vmatprep.subr.bf16.mxu0 %v3235
    %3514 = vmatpush1.bf16.msra.mxu0 %v3234
    %3515 = vmatprep.subr.bf16.mxu0 %v3295
    %3516 = vmatpush2.bf16.msra.mxu0 %v3294
    %3517 = vmatprep.subr.bf16.mxu0 %v3291
    %3518 = vmatpush2.bf16.msra.mxu0 %v3290
    %3519 = vmatprep.subr.bf16.mxu0 %v3287
    %3520 = vmatpush2.bf16.msra.mxu0 %v3286
    %3521 = vmatprep.subr.bf16.mxu0 %v3283
    %3522 = vmatpush2.bf16.msra.mxu0 %v3282
    %3523 = vmatprep.subr.bf16.mxu0 %v3279
    %3524 = vmatpush2.bf16.msra.mxu0 %v3278
    %3525 = vmatprep.subr.bf16.mxu0 %v3275
    %3526 = vmatpush2.bf16.msra.mxu0 %v3274
    %3527 = vmatprep.subr.bf16.mxu0 %v3271
    %3528 = vmatpush2.bf16.msra.mxu0 %v3270
    %3529 = vmatprep.subr.bf16.mxu0 %v3267
    %3530 = vmatpush2.bf16.msra.mxu0 %v3266
    %3531 = vmatprep.mubr.bf16.mxu0 %v2757
    %3532 = vmatmul.mubr.bf16.gmra.mxu0 %v2756
    %v3533 = vpop.f32.mrf.mxu0
    %v3534 = vadd.f32 %v3461, %v3533
    %v3535 = vpop.f32.mrf.mxu0
    %v3536 = vadd.f32 %v3463, %v3535
    %v3537 = vpop.f32.mrf.mxu0
    %v3538 = vadd.f32 %v3465, %v3537
    %v3539 = vpop.f32.mrf.mxu0
    %v3540 = vadd.f32 %v3467, %v3539
    %3541 = vmatprep.mubr.bf16.mxu0 %v2761
    %3542 = vmatmul.mubr.bf16.gmra.mxu0 %v2760
    %v3543 = vpop.f32.mrf.mxu0
    %v3544 = vadd.f32 %v3471, %v3543
    %v3545 = vpop.f32.mrf.mxu0
    %v3546 = vadd.f32 %v3473, %v3545
    %v3547 = vpop.f32.mrf.mxu0
    %v3548 = vadd.f32 %v3475, %v3547
    %v3549 = vpop.f32.mrf.mxu0
    %v3550 = vadd.f32 %v3477, %v3549
    %3551 = vmatprep.mubr.bf16.mxu0 %v2765
    %3552 = vmatmul.mubr.bf16.gmra.mxu0 %v2764
    %v3553 = vpop.f32.mrf.mxu0
    %v3554 = vadd.f32 %v3481, %v3553
    %v3555 = vpop.f32.mrf.mxu0
    %v3556 = vadd.f32 %v3483, %v3555
    %v3557 = vpop.f32.mrf.mxu0
    %v3558 = vadd.f32 %v3485, %v3557
    %v3559 = vpop.f32.mrf.mxu0
    %v3560 = vadd.f32 %v3487, %v3559
    %3561 = vmatprep.mubr.bf16.mxu0 %v2769
    %3562 = vmatmul.mubr.bf16.gmra.mxu0 %v2768
    %v3563 = vpop.f32.mrf.mxu0
    %v3564 = vadd.f32 %v3491, %v3563
    %v3565 = vpop.f32.mrf.mxu0
    %v3566 = vadd.f32 %v3493, %v3565
    %v3567 = vpop.f32.mrf.mxu0
    %v3568 = vadd.f32 %v3495, %v3567
    %v3569 = vpop.f32.mrf.mxu0
    %v3570 = vadd.f32 %v3497, %v3569
    %3571 = vdwg.mxu0
    %3572 = vmatprep.subr.bf16.mxu0 %v3201
    %3573 = vmatpush1.bf16.msra.mxu0 %v3200
    %3574 = vmatprep.subr.bf16.mxu0 %v3197
    %3575 = vmatpush1.bf16.msra.mxu0 %v3196
    %3576 = vmatprep.subr.bf16.mxu0 %v3193
    %3577 = vmatpush1.bf16.msra.mxu0 %v3192
    %3578 = vmatprep.subr.bf16.mxu0 %v3189
    %3579 = vmatpush1.bf16.msra.mxu0 %v3188
    %3580 = vmatprep.subr.bf16.mxu0 %v3185
    %3581 = vmatpush1.bf16.msra.mxu0 %v3184
    %3582 = vmatprep.subr.bf16.mxu0 %v3181
    %3583 = vmatpush1.bf16.msra.mxu0 %v3180
    %3584 = vmatprep.subr.bf16.mxu0 %v3177
    %3585 = vmatpush1.bf16.msra.mxu0 %v3176
    %3586 = vmatprep.subr.bf16.mxu0 %v3173
    %3587 = vmatpush1.bf16.msra.mxu0 %v3172
    %3588 = vmatprep.subr.bf16.mxu0 %v3233
    %3589 = vmatpush2.bf16.msra.mxu0 %v3232
    %3590 = vmatprep.subr.bf16.mxu0 %v3229
    %3591 = vmatpush2.bf16.msra.mxu0 %v3228
    %3592 = vmatprep.subr.bf16.mxu0 %v3225
    %3593 = vmatpush2.bf16.msra.mxu0 %v3224
    %3594 = vmatprep.subr.bf16.mxu0 %v3221
    %3595 = vmatpush2.bf16.msra.mxu0 %v3220
    %3596 = vmatprep.subr.bf16.mxu0 %v3217
    %3597 = vmatpush2.bf16.msra.mxu0 %v3216
    %3598 = vmatprep.subr.bf16.mxu0 %v3213
    %3599 = vmatpush2.bf16.msra.mxu0 %v3212
    %3600 = vmatprep.subr.bf16.mxu0 %v3209
    %3601 = vmatpush2.bf16.msra.mxu0 %v3208
    %3602 = vmatprep.subr.bf16.mxu0 %v3205
    %3603 = vmatpush2.bf16.msra.mxu0 %v3204
    %3604 = vmatprep.mubr.bf16.mxu0 %v2755
    %3605 = vmatmul.mubr.bf16.gmra.mxu0 %v2754
    %v3606 = vpop.f32.mrf.mxu0
    %v3607 = vadd.f32 %v2697, %v3606
    %v3608 = vpop.f32.mrf.mxu0
    %v3609 = vadd.f32 %v2701, %v3608
    %v3610 = vpop.f32.mrf.mxu0
    %v3611 = vadd.f32 %v2697, %v3610
    %v3612 = vpop.f32.mrf.mxu0
    %v3613 = vadd.f32 %v2701, %v3612
    %3614 = vmatprep.mubr.bf16.mxu0 %v2759
    %3615 = vmatmul.mubr.bf16.gmra.mxu0 %v2758
    %v3616 = vpop.f32.mrf.mxu0
    %v3617 = vadd.f32 %v2697, %v3616
    %v3618 = vpop.f32.mrf.mxu0
    %v3619 = vadd.f32 %v2701, %v3618
    %v3620 = vpop.f32.mrf.mxu0
    %v3621 = vadd.f32 %v2697, %v3620
    %v3622 = vpop.f32.mrf.mxu0
    %v3623 = vadd.f32 %v2701, %v3622
    %3624 = vmatprep.mubr.bf16.mxu0 %v2763
    %3625 = vmatmul.mubr.bf16.gmra.mxu0 %v2762
    %v3626 = vpop.f32.mrf.mxu0
    %v3627 = vadd.f32 %v2697, %v3626
    %v3628 = vpop.f32.mrf.mxu0
    %v3629 = vadd.f32 %v2701, %v3628
    %v3630 = vpop.f32.mrf.mxu0
    %v3631 = vadd.f32 %v2697, %v3630
    %v3632 = vpop.f32.mrf.mxu0
    %v3633 = vadd.f32 %v2701, %v3632
    %3634 = vmatprep.mubr.bf16.mxu0 %v2767
    %3635 = vmatmul.mubr.bf16.gmra.mxu0 %v2766
    %v3636 = vpop.f32.mrf.mxu0
    %v3637 = vadd.f32 %v2697, %v3636
    %v3638 = vpop.f32.mrf.mxu0
    %v3639 = vadd.f32 %v2701, %v3638
    %v3640 = vpop.f32.mrf.mxu0
    %v3641 = vadd.f32 %v2697, %v3640
    %v3642 = vpop.f32.mrf.mxu0
    %v3643 = vadd.f32 %v2701, %v3642
    %3644 = vdwg.mxu0
    %3645 = vmatprep.subr.bf16.mxu0 %v3265
    %3646 = vmatpush1.bf16.msra.mxu0 %v3264
    %3647 = vmatprep.subr.bf16.mxu0 %v3261
    %3648 = vmatpush1.bf16.msra.mxu0 %v3260
    %3649 = vmatprep.subr.bf16.mxu0 %v3257
    %3650 = vmatpush1.bf16.msra.mxu0 %v3256
    %3651 = vmatprep.subr.bf16.mxu0 %v3253
    %3652 = vmatpush1.bf16.msra.mxu0 %v3252
    %3653 = vmatprep.subr.bf16.mxu0 %v3249
    %3654 = vmatpush1.bf16.msra.mxu0 %v3248
    %3655 = vmatprep.subr.bf16.mxu0 %v3245
    %3656 = vmatpush1.bf16.msra.mxu0 %v3244
    %3657 = vmatprep.subr.bf16.mxu0 %v3241
    %3658 = vmatpush1.bf16.msra.mxu0 %v3240
    %3659 = vmatprep.subr.bf16.mxu0 %v3237
    %3660 = vmatpush1.bf16.msra.mxu0 %v3236
    %3661 = vmatprep.subr.bf16.mxu0 %v3297
    %3662 = vmatpush2.bf16.msra.mxu0 %v3296
    %3663 = vmatprep.subr.bf16.mxu0 %v3293
    %3664 = vmatpush2.bf16.msra.mxu0 %v3292
    %3665 = vmatprep.subr.bf16.mxu0 %v3289
    %3666 = vmatpush2.bf16.msra.mxu0 %v3288
    %3667 = vmatprep.subr.bf16.mxu0 %v3285
    %3668 = vmatpush2.bf16.msra.mxu0 %v3284
    %3669 = vmatprep.subr.bf16.mxu0 %v3281
    %3670 = vmatpush2.bf16.msra.mxu0 %v3280
    %3671 = vmatprep.subr.bf16.mxu0 %v3277
    %3672 = vmatpush2.bf16.msra.mxu0 %v3276
    %3673 = vmatprep.subr.bf16.mxu0 %v3273
    %3674 = vmatpush2.bf16.msra.mxu0 %v3272
    %3675 = vmatprep.subr.bf16.mxu0 %v3269
    %3676 = vmatpush2.bf16.msra.mxu0 %v3268
    %3677 = vmatprep.mubr.bf16.mxu0 %v2757
    %3678 = vmatmul.mubr.bf16.gmra.mxu0 %v2756
    %v3679 = vpop.f32.mrf.mxu0
    %v3680 = vadd.f32 %v3607, %v3679
    %v3681 = vpop.f32.mrf.mxu0
    %v3682 = vadd.f32 %v3609, %v3681
    %v3683 = vpop.f32.mrf.mxu0
    %v3684 = vadd.f32 %v3611, %v3683
    %v3685 = vpop.f32.mrf.mxu0
    %v3686 = vadd.f32 %v3613, %v3685
    %3687 = vmatprep.mubr.bf16.mxu0 %v2761
    %3688 = vmatmul.mubr.bf16.gmra.mxu0 %v2760
    %v3689 = vpop.f32.mrf.mxu0
    %v3690 = vadd.f32 %v3617, %v3689
    %v3691 = vpop.f32.mrf.mxu0
    %v3692 = vadd.f32 %v3619, %v3691
    %v3693 = vpop.f32.mrf.mxu0
    %v3694 = vadd.f32 %v3621, %v3693
    %v3695 = vpop.f32.mrf.mxu0
    %v3696 = vadd.f32 %v3623, %v3695
    %3697 = vmatprep.mubr.bf16.mxu0 %v2765
    %3698 = vmatmul.mubr.bf16.gmra.mxu0 %v2764
    %v3699 = vpop.f32.mrf.mxu0
    %v3700 = vadd.f32 %v3627, %v3699
    %v3701 = vpop.f32.mrf.mxu0
    %v3702 = vadd.f32 %v3629, %v3701
    %v3703 = vpop.f32.mrf.mxu0
    %v3704 = vadd.f32 %v3631, %v3703
    %v3705 = vpop.f32.mrf.mxu0
    %v3706 = vadd.f32 %v3633, %v3705
    %3707 = vmatprep.mubr.bf16.mxu0 %v2769
    %3708 = vmatmul.mubr.bf16.gmra.mxu0 %v2768
    %v3709 = vpop.f32.mrf.mxu0
    %v3710 = vadd.f32 %v3637, %v3709
    %v3711 = vpop.f32.mrf.mxu0
    %v3712 = vadd.f32 %v3639, %v3711
    %v3713 = vpop.f32.mrf.mxu0
    %v3714 = vadd.f32 %v3641, %v3713
    %v3715 = vpop.f32.mrf.mxu0
    %v3716 = vadd.f32 %v3643, %v3715
    %3717 = vdwg.mxu0
    %v3718 = vtanh.pop %v3534
    %v3719 = vtanh.pop %v3536
    %v3720 = vtanh.pop %v3680
    %v3721 = vtanh.pop %v3682
    %v3722 = vtanh.pop %v3538
    %v3723 = vtanh.pop %v3540
    %v3724 = vtanh.pop %v3684
    %v3725 = vtanh.pop %v3686
    %v3726 = vtanh.pop %v3544
    %v3727 = vtanh.pop %v3546
    %v3728 = vtanh.pop %v3690
    %v3729 = vtanh.pop %v3692
    %v3730 = vtanh.pop %v3548
    %v3731 = vtanh.pop %v3550
    %v3732 = vtanh.pop %v3694
    %v3733 = vtanh.pop %v3696
    %v3734 = vtanh.pop %v3554
    %v3735 = vtanh.pop %v3556
    %v3736 = vtanh.pop %v3700
    %v3737 = vtanh.pop %v3702
    %v3738 = vtanh.pop %v3558
    %v3739 = vtanh.pop %v3560
    %v3740 = vtanh.pop %v3704
    %v3741 = vtanh.pop %v3706
    %v3742 = vtanh.pop %v3564
    %v3743 = vtanh.pop %v3566
    %v3744 = vtanh.pop %v3710
    %v3745 = vtanh.pop %v3712
    %v3746 = vtanh.pop %v3568
    %v3747 = vtanh.pop %v3570
    %v3748 = vtanh.pop %v3714
    %v3749 = vtanh.pop %v3716
    %v3750 = vpack.c.bf16 %v3722, %v3718
    %v3751 = vpack.c.bf16 %v3723, %v3719
    %v3752 = vpack.c.bf16 %v3724, %v3720
    %v3753 = vpack.c.bf16 %v3725, %v3721
    %v3754 = vpack.c.bf16 %v3730, %v3726
    %v3755 = vpack.c.bf16 %v3731, %v3727
    %v3756 = vpack.c.bf16 %v3732, %v3728
    %v3757 = vpack.c.bf16 %v3733, %v3729
    %v3758 = vpack.c.bf16 %v3738, %v3734
    %v3759 = vpack.c.bf16 %v3739, %v3735
    %v3760 = vpack.c.bf16 %v3740, %v3736
    %v3761 = vpack.c.bf16 %v3741, %v3737
    %v3762 = vpack.c.bf16 %v3746, %v3742
    %v3763 = vpack.c.bf16 %v3747, %v3743
    %v3764 = vpack.c.bf16 %v3748, %v3744
    %v3765 = vpack.c.bf16 %v3749, %v3745
    %v3767 = vlaneseq
    %v3768 = vshrl.u32 %v3767, 7
    %v3769 = vsub.s32 0, %v3768
    %v3770 = vrot.slane %v2684, %v3769
    %v3771 = vlaneseq
    %v3772 = vshrl.u32 %v3771, 7
    %v3773 = vsub.s32 1, %v3772
    %v3774 = vrot.slane %v2684, %v3773
    %v3775 = vlaneseq
    %v3776 = vshrl.u32 %v3775, 7
    %v3777 = vsub.s32 2, %v3776
    %v3778 = vrot.slane %v2684, %v3777
    %v3779 = vlaneseq
    %v3780 = vshrl.u32 %v3779, 7
    %v3781 = vsub.s32 3, %v3780
    %v3782 = vrot.slane %v2684, %v3781
    %v3915 = vunpack.c.l.b16 %v2556
    %v3916 = vunpack.c.h.b16 %v2556
    %v3917 = vunpack.c.l.b16 %v2557
    %v3918 = vunpack.c.h.b16 %v2557
    %v3919 = vunpack.c.l.b16 %v2558
    %v3920 = vunpack.c.h.b16 %v2558
    %v3921 = vunpack.c.l.b16 %v2559
    %v3922 = vunpack.c.h.b16 %v2559
    %v3923 = vunpack.c.l.b16 %v2560
    %v3924 = vunpack.c.h.b16 %v2560
    %v3925 = vunpack.c.l.b16 %v2561
    %v3926 = vunpack.c.h.b16 %v2561
    %v3927 = vunpack.c.l.b16 %v2562
    %v3928 = vunpack.c.h.b16 %v2562
    %v3929 = vunpack.c.l.b16 %v2563
    %v3930 = vunpack.c.h.b16 %v2563
    %v3931 = vunpack.c.l.b16 %v2564
    %v3932 = vunpack.c.h.b16 %v2564
    %v3933 = vunpack.c.l.b16 %v2565
    %v3934 = vunpack.c.h.b16 %v2565
    %v3935 = vunpack.c.l.b16 %v2566
    %v3936 = vunpack.c.h.b16 %v2566
    %v3937 = vunpack.c.l.b16 %v2567
    %v3938 = vunpack.c.h.b16 %v2567
    %v3939 = vunpack.c.l.b16 %v2568
    %v3940 = vunpack.c.h.b16 %v2568
    %v3941 = vunpack.c.l.b16 %v2569
    %v3942 = vunpack.c.h.b16 %v2569
    %v3943 = vunpack.c.l.b16 %v2570
    %v3944 = vunpack.c.h.b16 %v2570
    %v3945 = vunpack.c.l.b16 %v2571
    %v3946 = vunpack.c.h.b16 %v2571
    %v3947 = vunpack.c.l.b16 %v2572
    %v3948 = vunpack.c.h.b16 %v2572
    %v3949 = vunpack.c.l.b16 %v2573
    %v3950 = vunpack.c.h.b16 %v2573
    %v3951 = vunpack.c.l.b16 %v2574
    %v3952 = vunpack.c.h.b16 %v2574
    %v3953 = vunpack.c.l.b16 %v2575
    %v3954 = vunpack.c.h.b16 %v2575
    %v3955 = vunpack.c.l.b16 %v2576
    %v3956 = vunpack.c.h.b16 %v2576
    %v3957 = vunpack.c.l.b16 %v2577
    %v3958 = vunpack.c.h.b16 %v2577
    %v3959 = vunpack.c.l.b16 %v2578
    %v3960 = vunpack.c.h.b16 %v2578
    %v3961 = vunpack.c.l.b16 %v2579
    %v3962 = vunpack.c.h.b16 %v2579
    %v3963 = vunpack.c.l.b16 %v2580
    %v3964 = vunpack.c.h.b16 %v2580
    %v3965 = vunpack.c.l.b16 %v2581
    %v3966 = vunpack.c.h.b16 %v2581
    %v3967 = vunpack.c.l.b16 %v2582
    %v3968 = vunpack.c.h.b16 %v2582
    %v3969 = vunpack.c.l.b16 %v2583
    %v3970 = vunpack.c.h.b16 %v2583
    %v3971 = vunpack.c.l.b16 %v2584
    %v3972 = vunpack.c.h.b16 %v2584
    %v3973 = vunpack.c.l.b16 %v2585
    %v3974 = vunpack.c.h.b16 %v2585
    %v3975 = vunpack.c.l.b16 %v2586
    %v3976 = vunpack.c.h.b16 %v2586
    %v3977 = vunpack.c.l.b16 %v2587
    %v3978 = vunpack.c.h.b16 %v2587
    %v3979 = vunpack.c.l.b16 %v2588
    %v3980 = vunpack.c.h.b16 %v2588
    %v3981 = vunpack.c.l.b16 %v2589
    %v3982 = vunpack.c.h.b16 %v2589
    %v3983 = vunpack.c.l.b16 %v2590
    %v3984 = vunpack.c.h.b16 %v2590
    %v3985 = vunpack.c.l.b16 %v2591
    %v3986 = vunpack.c.h.b16 %v2591
    %v3987 = vunpack.c.l.b16 %v2592
    %v3988 = vunpack.c.h.b16 %v2592
    %v3989 = vunpack.c.l.b16 %v2593
    %v3990 = vunpack.c.h.b16 %v2593
    %v3991 = vunpack.c.l.b16 %v2594
    %v3992 = vunpack.c.h.b16 %v2594
    %v3993 = vunpack.c.l.b16 %v2595
    %v3994 = vunpack.c.h.b16 %v2595
    %v3995 = vunpack.c.l.b16 %v2596
    %v3996 = vunpack.c.h.b16 %v2596
    %v3997 = vunpack.c.l.b16 %v2597
    %v3998 = vunpack.c.h.b16 %v2597
    %v3999 = vunpack.c.l.b16 %v2598
    %v4000 = vunpack.c.h.b16 %v2598
    %v4001 = vunpack.c.l.b16 %v2599
    %v4002 = vunpack.c.h.b16 %v2599
    %v4003 = vunpack.c.l.b16 %v2600
    %v4004 = vunpack.c.h.b16 %v2600
    %v4005 = vunpack.c.l.b16 %v2601
    %v4006 = vunpack.c.h.b16 %v2601
    %v4007 = vunpack.c.l.b16 %v2602
    %v4008 = vunpack.c.h.b16 %v2602
    %v4009 = vunpack.c.l.b16 %v2603
    %v4010 = vunpack.c.h.b16 %v2603
    %v4011 = vunpack.c.l.b16 %v2604
    %v4012 = vunpack.c.h.b16 %v2604
    %v4013 = vunpack.c.l.b16 %v2605
    %v4014 = vunpack.c.h.b16 %v2605
    %v4015 = vunpack.c.l.b16 %v2606
    %v4016 = vunpack.c.h.b16 %v2606
    %v4017 = vunpack.c.l.b16 %v2607
    %v4018 = vunpack.c.h.b16 %v2607
    %v4019 = vunpack.c.l.b16 %v2608
    %v4020 = vunpack.c.h.b16 %v2608
    %v4021 = vunpack.c.l.b16 %v2609
    %v4022 = vunpack.c.h.b16 %v2609
    %v4023 = vunpack.c.l.b16 %v2610
    %v4024 = vunpack.c.h.b16 %v2610
    %v4025 = vunpack.c.l.b16 %v2611
    %v4026 = vunpack.c.h.b16 %v2611
    %v4027 = vunpack.c.l.b16 %v2612
    %v4028 = vunpack.c.h.b16 %v2612
    %v4029 = vunpack.c.l.b16 %v2613
    %v4030 = vunpack.c.h.b16 %v2613
    %v4031 = vunpack.c.l.b16 %v2614
    %v4032 = vunpack.c.h.b16 %v2614
    %v4033 = vunpack.c.l.b16 %v2615
    %v4034 = vunpack.c.h.b16 %v2615
    %v4035 = vunpack.c.l.b16 %v2616
    %v4036 = vunpack.c.h.b16 %v2616
    %v4037 = vunpack.c.l.b16 %v2617
    %v4038 = vunpack.c.h.b16 %v2617
    %v4039 = vunpack.c.l.b16 %v2618
    %v4040 = vunpack.c.h.b16 %v2618
    %v4041 = vunpack.c.l.b16 %v2619
    %v4042 = vunpack.c.h.b16 %v2619
    %v4043 = vunpack.c.l.b16 %v2620
    %v4044 = vunpack.c.h.b16 %v2620
    %v4045 = vunpack.c.l.b16 %v2621
    %v4046 = vunpack.c.h.b16 %v2621
    %v4047 = vunpack.c.l.b16 %v2622
    %v4048 = vunpack.c.h.b16 %v2622
    %v4049 = vunpack.c.l.b16 %v2623
    %v4050 = vunpack.c.h.b16 %v2623
    %v4051 = vunpack.c.l.b16 %v2624
    %v4052 = vunpack.c.h.b16 %v2624
    %v4053 = vunpack.c.l.b16 %v2625
    %v4054 = vunpack.c.h.b16 %v2625
    %v4055 = vunpack.c.l.b16 %v2626
    %v4056 = vunpack.c.h.b16 %v2626
    %v4057 = vunpack.c.l.b16 %v2627
    %v4058 = vunpack.c.h.b16 %v2627
    %v4059 = vunpack.c.l.b16 %v2628
    %v4060 = vunpack.c.h.b16 %v2628
    %v4061 = vunpack.c.l.b16 %v2629
    %v4062 = vunpack.c.h.b16 %v2629
    %v4063 = vunpack.c.l.b16 %v2630
    %v4064 = vunpack.c.h.b16 %v2630
    %v4065 = vunpack.c.l.b16 %v2631
    %v4066 = vunpack.c.h.b16 %v2631
    %v4067 = vunpack.c.l.b16 %v2632
    %v4068 = vunpack.c.h.b16 %v2632
    %v4069 = vunpack.c.l.b16 %v2633
    %v4070 = vunpack.c.h.b16 %v2633
    %v4071 = vunpack.c.l.b16 %v2634
    %v4072 = vunpack.c.h.b16 %v2634
    %v4073 = vunpack.c.l.b16 %v2635
    %v4074 = vunpack.c.h.b16 %v2635
    %v4075 = vunpack.c.l.b16 %v2636
    %v4076 = vunpack.c.h.b16 %v2636
    %v4077 = vunpack.c.l.b16 %v2637
    %v4078 = vunpack.c.h.b16 %v2637
    %v4079 = vunpack.c.l.b16 %v2638
    %v4080 = vunpack.c.h.b16 %v2638
    %v4081 = vunpack.c.l.b16 %v2639
    %v4082 = vunpack.c.h.b16 %v2639
    %v4083 = vunpack.c.l.b16 %v2640
    %v4084 = vunpack.c.h.b16 %v2640
    %v4085 = vunpack.c.l.b16 %v2641
    %v4086 = vunpack.c.h.b16 %v2641
    %v4087 = vunpack.c.l.b16 %v2642
    %v4088 = vunpack.c.h.b16 %v2642
    %v4089 = vunpack.c.l.b16 %v2643
    %v4090 = vunpack.c.h.b16 %v2643
    %v4091 = vunpack.c.l.b16 %v2644
    %v4092 = vunpack.c.h.b16 %v2644
    %v4093 = vunpack.c.l.b16 %v2645
    %v4094 = vunpack.c.h.b16 %v2645
    %v4095 = vunpack.c.l.b16 %v2646
    %v4096 = vunpack.c.h.b16 %v2646
    %v4097 = vunpack.c.l.b16 %v2647
    %v4098 = vunpack.c.h.b16 %v2647
    %v4099 = vunpack.c.l.b16 %v2648
    %v4100 = vunpack.c.h.b16 %v2648
    %v4101 = vunpack.c.l.b16 %v2649
    %v4102 = vunpack.c.h.b16 %v2649
    %v4103 = vunpack.c.l.b16 %v2650
    %v4104 = vunpack.c.h.b16 %v2650
    %v4105 = vunpack.c.l.b16 %v2651
    %v4106 = vunpack.c.h.b16 %v2651
    %v4107 = vunpack.c.l.b16 %v2652
    %v4108 = vunpack.c.h.b16 %v2652
    %v4109 = vunpack.c.l.b16 %v2653
    %v4110 = vunpack.c.h.b16 %v2653
    %v4111 = vunpack.c.l.b16 %v2654
    %v4112 = vunpack.c.h.b16 %v2654
    %v4113 = vunpack.c.l.b16 %v2655
    %v4114 = vunpack.c.h.b16 %v2655
    %v4115 = vunpack.c.l.b16 %v2656
    %v4116 = vunpack.c.h.b16 %v2656
    %v4117 = vunpack.c.l.b16 %v2657
    %v4118 = vunpack.c.h.b16 %v2657
    %v4119 = vunpack.c.l.b16 %v2658
    %v4120 = vunpack.c.h.b16 %v2658
    %v4121 = vunpack.c.l.b16 %v2659
    %v4122 = vunpack.c.h.b16 %v2659
    %v4123 = vunpack.c.l.b16 %v2660
    %v4124 = vunpack.c.h.b16 %v2660
    %v4125 = vunpack.c.l.b16 %v2661
    %v4126 = vunpack.c.h.b16 %v2661
    %v4127 = vunpack.c.l.b16 %v2662
    %v4128 = vunpack.c.h.b16 %v2662
    %v4129 = vunpack.c.l.b16 %v2663
    %v4130 = vunpack.c.h.b16 %v2663
    %v4131 = vunpack.c.l.b16 %v2664
    %v4132 = vunpack.c.h.b16 %v2664
    %v4133 = vunpack.c.l.b16 %v2665
    %v4134 = vunpack.c.h.b16 %v2665
    %v4135 = vunpack.c.l.b16 %v2666
    %v4136 = vunpack.c.h.b16 %v2666
    %v4137 = vunpack.c.l.b16 %v2667
    %v4138 = vunpack.c.h.b16 %v2667
    %v4139 = vunpack.c.l.b16 %v2668
    %v4140 = vunpack.c.h.b16 %v2668
    %v4141 = vunpack.c.l.b16 %v2669
    %v4142 = vunpack.c.h.b16 %v2669
    %v4143 = vunpack.c.l.b16 %v2670
    %v4144 = vunpack.c.h.b16 %v2670
    %v4145 = vunpack.c.l.b16 %v2671
    %v4146 = vunpack.c.h.b16 %v2671
    %v4147 = vunpack.c.l.b16 %v2672
    %v4148 = vunpack.c.h.b16 %v2672
    %v4149 = vunpack.c.l.b16 %v2673
    %v4150 = vunpack.c.h.b16 %v2673
    %v4151 = vunpack.c.l.b16 %v2674
    %v4152 = vunpack.c.h.b16 %v2674
    %v4153 = vunpack.c.l.b16 %v2675
    %v4154 = vunpack.c.h.b16 %v2675
    %v4155 = vunpack.c.l.b16 %v2676
    %v4156 = vunpack.c.h.b16 %v2676
    %v4157 = vunpack.c.l.b16 %v2677
    %v4158 = vunpack.c.h.b16 %v2677
    %v4159 = vunpack.c.l.b16 %v2678
    %v4160 = vunpack.c.h.b16 %v2678
    %v4161 = vunpack.c.l.b16 %v2679
    %v4162 = vunpack.c.h.b16 %v2679
    %v4163 = vunpack.c.l.b16 %v2680
    %v4164 = vunpack.c.h.b16 %v2680
    %v4165 = vunpack.c.l.b16 %v2681
    %v4166 = vunpack.c.h.b16 %v2681
    %v4167 = vunpack.c.l.b16 %v2682
    %v4168 = vunpack.c.h.b16 %v2682
    %v4169 = vunpack.c.l.b16 %v2683
    %v4170 = vunpack.c.h.b16 %v2683
    %v4171 = vpack.c.b16 %v3919, %v3915
    %v4172 = vpack.c.b16 %v3920, %v3916
    %v4173 = vpack.c.b16 %v3921, %v3917
    %v4174 = vpack.c.b16 %v3922, %v3918
    %v4175 = vpack.c.b16 %v3927, %v3923
    %v4176 = vpack.c.b16 %v3928, %v3924
    %v4177 = vpack.c.b16 %v3929, %v3925
    %v4178 = vpack.c.b16 %v3930, %v3926
    %v4179 = vpack.c.b16 %v3935, %v3931
    %v4180 = vpack.c.b16 %v3936, %v3932
    %v4181 = vpack.c.b16 %v3937, %v3933
    %v4182 = vpack.c.b16 %v3938, %v3934
    %v4183 = vpack.c.b16 %v3943, %v3939
    %v4184 = vpack.c.b16 %v3944, %v3940
    %v4185 = vpack.c.b16 %v3945, %v3941
    %v4186 = vpack.c.b16 %v3946, %v3942
    %v4187 = vpack.c.b16 %v3951, %v3947
    %v4188 = vpack.c.b16 %v3952, %v3948
    %v4189 = vpack.c.b16 %v3953, %v3949
    %v4190 = vpack.c.b16 %v3954, %v3950
    %v4191 = vpack.c.b16 %v3959, %v3955
    %v4192 = vpack.c.b16 %v3960, %v3956
    %v4193 = vpack.c.b16 %v3961, %v3957
    %v4194 = vpack.c.b16 %v3962, %v3958
    %v4195 = vpack.c.b16 %v3967, %v3963
    %v4196 = vpack.c.b16 %v3968, %v3964
    %v4197 = vpack.c.b16 %v3969, %v3965
    %v4198 = vpack.c.b16 %v3970, %v3966
    %v4199 = vpack.c.b16 %v3975, %v3971
    %v4200 = vpack.c.b16 %v3976, %v3972
    %v4201 = vpack.c.b16 %v3977, %v3973
    %v4202 = vpack.c.b16 %v3978, %v3974
    %v4203 = vpack.c.b16 %v3983, %v3979
    %v4204 = vpack.c.b16 %v3984, %v3980
    %v4205 = vpack.c.b16 %v3985, %v3981
    %v4206 = vpack.c.b16 %v3986, %v3982
    %v4207 = vpack.c.b16 %v3991, %v3987
    %v4208 = vpack.c.b16 %v3992, %v3988
    %v4209 = vpack.c.b16 %v3993, %v3989
    %v4210 = vpack.c.b16 %v3994, %v3990
    %v4211 = vpack.c.b16 %v3999, %v3995
    %v4212 = vpack.c.b16 %v4000, %v3996
    %v4213 = vpack.c.b16 %v4001, %v3997
    %v4214 = vpack.c.b16 %v4002, %v3998
    %v4215 = vpack.c.b16 %v4007, %v4003
    %v4216 = vpack.c.b16 %v4008, %v4004
    %v4217 = vpack.c.b16 %v4009, %v4005
    %v4218 = vpack.c.b16 %v4010, %v4006
    %v4219 = vpack.c.b16 %v4015, %v4011
    %v4220 = vpack.c.b16 %v4016, %v4012
    %v4221 = vpack.c.b16 %v4017, %v4013
    %v4222 = vpack.c.b16 %v4018, %v4014
    %v4223 = vpack.c.b16 %v4023, %v4019
    %v4224 = vpack.c.b16 %v4024, %v4020
    %v4225 = vpack.c.b16 %v4025, %v4021
    %v4226 = vpack.c.b16 %v4026, %v4022
    %v4227 = vpack.c.b16 %v4031, %v4027
    %v4228 = vpack.c.b16 %v4032, %v4028
    %v4229 = vpack.c.b16 %v4033, %v4029
    %v4230 = vpack.c.b16 %v4034, %v4030
    %v4231 = vpack.c.b16 %v4039, %v4035
    %v4232 = vpack.c.b16 %v4040, %v4036
    %v4233 = vpack.c.b16 %v4041, %v4037
    %v4234 = vpack.c.b16 %v4042, %v4038
    %v4235 = vpack.c.b16 %v4047, %v4043
    %v4236 = vpack.c.b16 %v4048, %v4044
    %v4237 = vpack.c.b16 %v4049, %v4045
    %v4238 = vpack.c.b16 %v4050, %v4046
    %v4239 = vpack.c.b16 %v4055, %v4051
    %v4240 = vpack.c.b16 %v4056, %v4052
    %v4241 = vpack.c.b16 %v4057, %v4053
    %v4242 = vpack.c.b16 %v4058, %v4054
    %v4243 = vpack.c.b16 %v4063, %v4059
    %v4244 = vpack.c.b16 %v4064, %v4060
    %v4245 = vpack.c.b16 %v4065, %v4061
    %v4246 = vpack.c.b16 %v4066, %v4062
    %v4247 = vpack.c.b16 %v4071, %v4067
    %v4248 = vpack.c.b16 %v4072, %v4068
    %v4249 = vpack.c.b16 %v4073, %v4069
    %v4250 = vpack.c.b16 %v4074, %v4070
    %v4251 = vpack.c.b16 %v4079, %v4075
    %v4252 = vpack.c.b16 %v4080, %v4076
    %v4253 = vpack.c.b16 %v4081, %v4077
    %v4254 = vpack.c.b16 %v4082, %v4078
    %v4255 = vpack.c.b16 %v4087, %v4083
    %v4256 = vpack.c.b16 %v4088, %v4084
    %v4257 = vpack.c.b16 %v4089, %v4085
    %v4258 = vpack.c.b16 %v4090, %v4086
    %v4259 = vpack.c.b16 %v4095, %v4091
    %v4260 = vpack.c.b16 %v4096, %v4092
    %v4261 = vpack.c.b16 %v4097, %v4093
    %v4262 = vpack.c.b16 %v4098, %v4094
    %v4263 = vpack.c.b16 %v4103, %v4099
    %v4264 = vpack.c.b16 %v4104, %v4100
    %v4265 = vpack.c.b16 %v4105, %v4101
    %v4266 = vpack.c.b16 %v4106, %v4102
    %v4267 = vpack.c.b16 %v4111, %v4107
    %v4268 = vpack.c.b16 %v4112, %v4108
    %v4269 = vpack.c.b16 %v4113, %v4109
    %v4270 = vpack.c.b16 %v4114, %v4110
    %v4271 = vpack.c.b16 %v4119, %v4115
    %v4272 = vpack.c.b16 %v4120, %v4116
    %v4273 = vpack.c.b16 %v4121, %v4117
    %v4274 = vpack.c.b16 %v4122, %v4118
    %v4275 = vpack.c.b16 %v4127, %v4123
    %v4276 = vpack.c.b16 %v4128, %v4124
    %v4277 = vpack.c.b16 %v4129, %v4125
    %v4278 = vpack.c.b16 %v4130, %v4126
    %v4279 = vpack.c.b16 %v4135, %v4131
    %v4280 = vpack.c.b16 %v4136, %v4132
    %v4281 = vpack.c.b16 %v4137, %v4133
    %v4282 = vpack.c.b16 %v4138, %v4134
    %v4283 = vpack.c.b16 %v4143, %v4139
    %v4284 = vpack.c.b16 %v4144, %v4140
    %v4285 = vpack.c.b16 %v4145, %v4141
    %v4286 = vpack.c.b16 %v4146, %v4142
    %v4287 = vpack.c.b16 %v4151, %v4147
    %v4288 = vpack.c.b16 %v4152, %v4148
    %v4289 = vpack.c.b16 %v4153, %v4149
    %v4290 = vpack.c.b16 %v4154, %v4150
    %v4291 = vpack.c.b16 %v4159, %v4155
    %v4292 = vpack.c.b16 %v4160, %v4156
    %v4293 = vpack.c.b16 %v4161, %v4157
    %v4294 = vpack.c.b16 %v4162, %v4158
    %v4295 = vpack.c.b16 %v4167, %v4163
    %v4296 = vpack.c.b16 %v4168, %v4164
    %v4297 = vpack.c.b16 %v4169, %v4165
    %v4298 = vpack.c.b16 %v4170, %v4166
    %4427 = vmatprep.subr.bf16.mxu0 %v4200
    %4428 = vmatpush1.bf16.msra.mxu0 %v4199
    %4429 = vmatprep.subr.bf16.mxu0 %v4196
    %4430 = vmatpush1.bf16.msra.mxu0 %v4195
    %4431 = vmatprep.subr.bf16.mxu0 %v4192
    %4432 = vmatpush1.bf16.msra.mxu0 %v4191
    %4433 = vmatprep.subr.bf16.mxu0 %v4188
    %4434 = vmatpush1.bf16.msra.mxu0 %v4187
    %4435 = vmatprep.subr.bf16.mxu0 %v4184
    %4436 = vmatpush1.bf16.msra.mxu0 %v4183
    %4437 = vmatprep.subr.bf16.mxu0 %v4180
    %4438 = vmatpush1.bf16.msra.mxu0 %v4179
    %4439 = vmatprep.subr.bf16.mxu0 %v4176
    %4440 = vmatpush1.bf16.msra.mxu0 %v4175
    %4441 = vmatprep.subr.bf16.mxu0 %v4172
    %4442 = vmatpush1.bf16.msra.mxu0 %v4171
    %4443 = vmatprep.subr.bf16.mxu0 %v4232
    %4444 = vmatpush2.bf16.msra.mxu0 %v4231
    %4445 = vmatprep.subr.bf16.mxu0 %v4228
    %4446 = vmatpush2.bf16.msra.mxu0 %v4227
    %4447 = vmatprep.subr.bf16.mxu0 %v4224
    %4448 = vmatpush2.bf16.msra.mxu0 %v4223
    %4449 = vmatprep.subr.bf16.mxu0 %v4220
    %4450 = vmatpush2.bf16.msra.mxu0 %v4219
    %4451 = vmatprep.subr.bf16.mxu0 %v4216
    %4452 = vmatpush2.bf16.msra.mxu0 %v4215
    %4453 = vmatprep.subr.bf16.mxu0 %v4212
    %4454 = vmatpush2.bf16.msra.mxu0 %v4211
    %4455 = vmatprep.subr.bf16.mxu0 %v4208
    %4456 = vmatpush2.bf16.msra.mxu0 %v4207
    %4457 = vmatprep.subr.bf16.mxu0 %v4204
    %4458 = vmatpush2.bf16.msra.mxu0 %v4203
    %4459 = vmatprep.mubr.bf16.mxu0 %v3751
    %4460 = vmatmul.mubr.bf16.gmra.mxu0 %v3750
    %v4461 = vpop.f32.mrf.mxu0
    %v4462 = vadd.f32 %v3770, %v4461
    %v4463 = vpop.f32.mrf.mxu0
    %v4464 = vadd.f32 %v3774, %v4463
    %v4465 = vpop.f32.mrf.mxu0
    %v4466 = vadd.f32 %v3770, %v4465
    %v4467 = vpop.f32.mrf.mxu0
    %v4468 = vadd.f32 %v3774, %v4467
    %4469 = vmatprep.mubr.bf16.mxu0 %v3755
    %4470 = vmatmul.mubr.bf16.gmra.mxu0 %v3754
    %v4471 = vpop.f32.mrf.mxu0
    %v4472 = vadd.f32 %v3770, %v4471
    %v4473 = vpop.f32.mrf.mxu0
    %v4474 = vadd.f32 %v3774, %v4473
    %v4475 = vpop.f32.mrf.mxu0
    %v4476 = vpop.f32.mrf.mxu0
    %4477 = vmatprep.mubr.bf16.mxu0 %v3759
    %4478 = vmatmul.mubr.bf16.gmra.mxu0 %v3758
    %v4479 = vpop.f32.mrf.mxu0
    %v4480 = vadd.f32 %v3770, %v4479
    %v4481 = vpop.f32.mrf.mxu0
    %v4482 = vadd.f32 %v3774, %v4481
    %v4483 = vpop.f32.mrf.mxu0
    %v4484 = vadd.f32 %v3770, %v4483
    %v4485 = vpop.f32.mrf.mxu0
    %v4486 = vadd.f32 %v3774, %v4485
    %4487 = vmatprep.mubr.bf16.mxu0 %v3763
    %4488 = vmatmul.mubr.bf16.gmra.mxu0 %v3762
    %v4489 = vpop.f32.mrf.mxu0
    %v4490 = vadd.f32 %v3770, %v4489
    %v4491 = vpop.f32.mrf.mxu0
    %v4492 = vadd.f32 %v3774, %v4491
    %v4493 = vpop.f32.mrf.mxu0
    %v4494 = vpop.f32.mrf.mxu0
    %4495 = vdwg.mxu0
    %4496 = vmatprep.subr.bf16.mxu0 %v4264
    %4497 = vmatpush1.bf16.msra.mxu0 %v4263
    %4498 = vmatprep.subr.bf16.mxu0 %v4260
    %4499 = vmatpush1.bf16.msra.mxu0 %v4259
    %4500 = vmatprep.subr.bf16.mxu0 %v4256
    %4501 = vmatpush1.bf16.msra.mxu0 %v4255
    %4502 = vmatprep.subr.bf16.mxu0 %v4252
    %4503 = vmatpush1.bf16.msra.mxu0 %v4251
    %4504 = vmatprep.subr.bf16.mxu0 %v4248
    %4505 = vmatpush1.bf16.msra.mxu0 %v4247
    %4506 = vmatprep.subr.bf16.mxu0 %v4244
    %4507 = vmatpush1.bf16.msra.mxu0 %v4243
    %4508 = vmatprep.subr.bf16.mxu0 %v4240
    %4509 = vmatpush1.bf16.msra.mxu0 %v4239
    %4510 = vmatprep.subr.bf16.mxu0 %v4236
    %4511 = vmatpush1.bf16.msra.mxu0 %v4235
    %4512 = vmatprep.subr.bf16.mxu0 %v4296
    %4513 = vmatpush2.bf16.msra.mxu0 %v4295
    %4514 = vmatprep.subr.bf16.mxu0 %v4292
    %4515 = vmatpush2.bf16.msra.mxu0 %v4291
    %4516 = vmatprep.subr.bf16.mxu0 %v4288
    %4517 = vmatpush2.bf16.msra.mxu0 %v4287
    %4518 = vmatprep.subr.bf16.mxu0 %v4284
    %4519 = vmatpush2.bf16.msra.mxu0 %v4283
    %4520 = vmatprep.subr.bf16.mxu0 %v4280
    %4521 = vmatpush2.bf16.msra.mxu0 %v4279
    %4522 = vmatprep.subr.bf16.mxu0 %v4276
    %4523 = vmatpush2.bf16.msra.mxu0 %v4275
    %4524 = vmatprep.subr.bf16.mxu0 %v4272
    %4525 = vmatpush2.bf16.msra.mxu0 %v4271
    %4526 = vmatprep.subr.bf16.mxu0 %v4268
    %4527 = vmatpush2.bf16.msra.mxu0 %v4267
    %4528 = vmatprep.mubr.bf16.mxu0 %v3753
    %4529 = vmatmul.mubr.bf16.gmra.mxu0 %v3752
    %v4530 = vpop.f32.mrf.mxu0
    %v4531 = vadd.f32 %v4462, %v4530
    %v4532 = vpop.f32.mrf.mxu0
    %v4533 = vadd.f32 %v4464, %v4532
    %v4534 = vpop.f32.mrf.mxu0
    %v4535 = vadd.f32 %v4466, %v4534
    %v4536 = vpop.f32.mrf.mxu0
    %v4537 = vadd.f32 %v4468, %v4536
    %4538 = vmatprep.mubr.bf16.mxu0 %v3757
    %4539 = vmatmul.mubr.bf16.gmra.mxu0 %v3756
    %v4540 = vpop.f32.mrf.mxu0
    %v4541 = vadd.f32 %v4472, %v4540
    %v4542 = vpop.f32.mrf.mxu0
    %v4543 = vadd.f32 %v4474, %v4542
    %v4544 = vpop.f32.mrf.mxu0
    %v4545 = vpop.f32.mrf.mxu0
    %4546 = vmatprep.mubr.bf16.mxu0 %v3761
    %4547 = vmatmul.mubr.bf16.gmra.mxu0 %v3760
    %v4548 = vpop.f32.mrf.mxu0
    %v4549 = vadd.f32 %v4480, %v4548
    %v4550 = vpop.f32.mrf.mxu0
    %v4551 = vadd.f32 %v4482, %v4550
    %v4552 = vpop.f32.mrf.mxu0
    %v4553 = vadd.f32 %v4484, %v4552
    %v4554 = vpop.f32.mrf.mxu0
    %v4555 = vadd.f32 %v4486, %v4554
    %4556 = vmatprep.mubr.bf16.mxu0 %v3765
    %4557 = vmatmul.mubr.bf16.gmra.mxu0 %v3764
    %v4558 = vpop.f32.mrf.mxu0
    %v4559 = vadd.f32 %v4490, %v4558
    %v4560 = vpop.f32.mrf.mxu0
    %v4561 = vadd.f32 %v4492, %v4560
    %v4562 = vpop.f32.mrf.mxu0
    %v4563 = vpop.f32.mrf.mxu0
    %4564 = vdwg.mxu0
    %4565 = vmatprep.subr.bf16.mxu0 %v4202
    %4566 = vmatpush1.bf16.msra.mxu0 %v4201
    %4567 = vmatprep.subr.bf16.mxu0 %v4198
    %4568 = vmatpush1.bf16.msra.mxu0 %v4197
    %4569 = vmatprep.subr.bf16.mxu0 %v4194
    %4570 = vmatpush1.bf16.msra.mxu0 %v4193
    %4571 = vmatprep.subr.bf16.mxu0 %v4190
    %4572 = vmatpush1.bf16.msra.mxu0 %v4189
    %4573 = vmatprep.subr.bf16.mxu0 %v4186
    %4574 = vmatpush1.bf16.msra.mxu0 %v4185
    %4575 = vmatprep.subr.bf16.mxu0 %v4182
    %4576 = vmatpush1.bf16.msra.mxu0 %v4181
    %4577 = vmatprep.subr.bf16.mxu0 %v4178
    %4578 = vmatpush1.bf16.msra.mxu0 %v4177
    %4579 = vmatprep.subr.bf16.mxu0 %v4174
    %4580 = vmatpush1.bf16.msra.mxu0 %v4173
    %4581 = vmatprep.subr.bf16.mxu0 %v4234
    %4582 = vmatpush2.bf16.msra.mxu0 %v4233
    %4583 = vmatprep.subr.bf16.mxu0 %v4230
    %4584 = vmatpush2.bf16.msra.mxu0 %v4229
    %4585 = vmatprep.subr.bf16.mxu0 %v4226
    %4586 = vmatpush2.bf16.msra.mxu0 %v4225
    %4587 = vmatprep.subr.bf16.mxu0 %v4222
    %4588 = vmatpush2.bf16.msra.mxu0 %v4221
    %4589 = vmatprep.subr.bf16.mxu0 %v4218
    %4590 = vmatpush2.bf16.msra.mxu0 %v4217
    %4591 = vmatprep.subr.bf16.mxu0 %v4214
    %4592 = vmatpush2.bf16.msra.mxu0 %v4213
    %4593 = vmatprep.subr.bf16.mxu0 %v4210
    %4594 = vmatpush2.bf16.msra.mxu0 %v4209
    %4595 = vmatprep.subr.bf16.mxu0 %v4206
    %4596 = vmatpush2.bf16.msra.mxu0 %v4205
    %4597 = vmatprep.mubr.bf16.mxu0 %v3751
    %4598 = vmatmul.mubr.bf16.gmra.mxu0 %v3750
    %v4599 = vpop.f32.mrf.mxu0
    %v4600 = vadd.f32 %v3778, %v4599
    %v4601 = vpop.f32.mrf.mxu0
    %v4602 = vadd.f32 %v3782, %v4601
    %v4603 = vpop.f32.mrf.mxu0
    %v4604 = vadd.f32 %v3778, %v4603
    %v4605 = vpop.f32.mrf.mxu0
    %v4606 = vadd.f32 %v3782, %v4605
    %4607 = vmatprep.mubr.bf16.mxu0 %v3755
    %4608 = vmatmul.mubr.bf16.gmra.mxu0 %v3754
    %v4609 = vpop.f32.mrf.mxu0
    %v4610 = vadd.f32 %v3778, %v4609
    %v4611 = vpop.f32.mrf.mxu0
    %v4612 = vadd.f32 %v3782, %v4611
    %v4613 = vpop.f32.mrf.mxu0
    %v4614 = vpop.f32.mrf.mxu0
    %4615 = vmatprep.mubr.bf16.mxu0 %v3759
    %4616 = vmatmul.mubr.bf16.gmra.mxu0 %v3758
    %v4617 = vpop.f32.mrf.mxu0
    %v4618 = vadd.f32 %v3778, %v4617
    %v4619 = vpop.f32.mrf.mxu0
    %v4620 = vadd.f32 %v3782, %v4619
    %v4621 = vpop.f32.mrf.mxu0
    %v4622 = vadd.f32 %v3778, %v4621
    %v4623 = vpop.f32.mrf.mxu0
    %v4624 = vadd.f32 %v3782, %v4623
    %4625 = vmatprep.mubr.bf16.mxu0 %v3763
    %4626 = vmatmul.mubr.bf16.gmra.mxu0 %v3762
    %v4627 = vpop.f32.mrf.mxu0
    %v4628 = vadd.f32 %v3778, %v4627
    %v4629 = vpop.f32.mrf.mxu0
    %v4630 = vadd.f32 %v3782, %v4629
    %v4631 = vpop.f32.mrf.mxu0
    %v4632 = vpop.f32.mrf.mxu0
    %4633 = vdwg.mxu0
    %4634 = vmatprep.subr.bf16.mxu0 %v4266
    %4635 = vmatpush1.bf16.msra.mxu0 %v4265
    %4636 = vmatprep.subr.bf16.mxu0 %v4262
    %4637 = vmatpush1.bf16.msra.mxu0 %v4261
    %4638 = vmatprep.subr.bf16.mxu0 %v4258
    %4639 = vmatpush1.bf16.msra.mxu0 %v4257
    %4640 = vmatprep.subr.bf16.mxu0 %v4254
    %4641 = vmatpush1.bf16.msra.mxu0 %v4253
    %4642 = vmatprep.subr.bf16.mxu0 %v4250
    %4643 = vmatpush1.bf16.msra.mxu0 %v4249
    %4644 = vmatprep.subr.bf16.mxu0 %v4246
    %4645 = vmatpush1.bf16.msra.mxu0 %v4245
    %4646 = vmatprep.subr.bf16.mxu0 %v4242
    %4647 = vmatpush1.bf16.msra.mxu0 %v4241
    %4648 = vmatprep.subr.bf16.mxu0 %v4238
    %4649 = vmatpush1.bf16.msra.mxu0 %v4237
    %4650 = vmatprep.subr.bf16.mxu0 %v4298
    %4651 = vmatpush2.bf16.msra.mxu0 %v4297
    %4652 = vmatprep.subr.bf16.mxu0 %v4294
    %4653 = vmatpush2.bf16.msra.mxu0 %v4293
    %4654 = vmatprep.subr.bf16.mxu0 %v4290
    %4655 = vmatpush2.bf16.msra.mxu0 %v4289
    %4656 = vmatprep.subr.bf16.mxu0 %v4286
    %4657 = vmatpush2.bf16.msra.mxu0 %v4285
    %4658 = vmatprep.subr.bf16.mxu0 %v4282
    %4659 = vmatpush2.bf16.msra.mxu0 %v4281
    %4660 = vmatprep.subr.bf16.mxu0 %v4278
    %4661 = vmatpush2.bf16.msra.mxu0 %v4277
    %4662 = vmatprep.subr.bf16.mxu0 %v4274
    %4663 = vmatpush2.bf16.msra.mxu0 %v4273
    %4664 = vmatprep.subr.bf16.mxu0 %v4270
    %4665 = vmatpush2.bf16.msra.mxu0 %v4269
    %4666 = vmatprep.mubr.bf16.mxu0 %v3753
    %4667 = vmatmul.mubr.bf16.gmra.mxu0 %v3752
    %v4668 = vpop.f32.mrf.mxu0
    %v4669 = vadd.f32 %v4600, %v4668
    %v4670 = vpop.f32.mrf.mxu0
    %v4671 = vadd.f32 %v4602, %v4670
    %v4672 = vpop.f32.mrf.mxu0
    %v4673 = vadd.f32 %v4604, %v4672
    %v4674 = vpop.f32.mrf.mxu0
    %v4675 = vadd.f32 %v4606, %v4674
    %4676 = vmatprep.mubr.bf16.mxu0 %v3757
    %4677 = vmatmul.mubr.bf16.gmra.mxu0 %v3756
    %v4678 = vpop.f32.mrf.mxu0
    %v4679 = vadd.f32 %v4610, %v4678
    %v4680 = vpop.f32.mrf.mxu0
    %v4681 = vadd.f32 %v4612, %v4680
    %v4682 = vpop.f32.mrf.mxu0
    %v4683 = vpop.f32.mrf.mxu0
    %4684 = vmatprep.mubr.bf16.mxu0 %v3761
    %4685 = vmatmul.mubr.bf16.gmra.mxu0 %v3760
    %v4686 = vpop.f32.mrf.mxu0
    %v4687 = vadd.f32 %v4618, %v4686
    %v4688 = vpop.f32.mrf.mxu0
    %v4689 = vadd.f32 %v4620, %v4688
    %v4690 = vpop.f32.mrf.mxu0
    %v4691 = vadd.f32 %v4622, %v4690
    %v4692 = vpop.f32.mrf.mxu0
    %v4693 = vadd.f32 %v4624, %v4692
    %4694 = vmatprep.mubr.bf16.mxu0 %v3765
    %4695 = vmatmul.mubr.bf16.gmra.mxu0 %v3764
    %v4696 = vpop.f32.mrf.mxu0
    %v4697 = vadd.f32 %v4628, %v4696
    %v4698 = vpop.f32.mrf.mxu0
    %v4699 = vadd.f32 %v4630, %v4698
    %v4700 = vpop.f32.mrf.mxu0
    %v4701 = vpop.f32.mrf.mxu0
    %4702 = vdwg.mxu0
    %v4703 = vpack.c.bf16 %v2255, %v2255
    %v4704 = vpack.c.bf16 %v2257, %v2257
    %v4705 = vpack.c.bf16 %v2393, %v2393
    %v4706 = vpack.c.bf16 %v2395, %v2395
    %v4707 = vpack.c.bf16 %v2273, %v2273
    %v4708 = vpack.c.bf16 %v2275, %v2275
    %v4709 = vpack.c.bf16 %v2411, %v2411
    %v4710 = vpack.c.bf16 %v2413, %v2413
    %v4711 = vpack.c.bf16 %v2265, %v2259
    %v4712 = vpack.c.bf16 %v2267, %v2261
    %v4713 = vpack.c.bf16 %v2403, %v2397
    %v4714 = vpack.c.bf16 %v2405, %v2399
    %v4715 = vpack.c.bf16 %v2283, %v2277
    %v4716 = vpack.c.bf16 %v2285, %v2279
    %v4717 = vpack.c.bf16 %v2421, %v2415
    %v4718 = vpack.c.bf16 %v2423, %v2417
    %v4719 = vpack.c.bf16 %v4531, %v4531
    %v4720 = vpack.c.bf16 %v4533, %v4533
    %v4721 = vpack.c.bf16 %v4669, %v4669
    %v4722 = vpack.c.bf16 %v4671, %v4671
    %v4723 = vpack.c.bf16 %v4549, %v4549
    %v4724 = vpack.c.bf16 %v4551, %v4551
    %v4725 = vpack.c.bf16 %v4687, %v4687
    %v4726 = vpack.c.bf16 %v4689, %v4689
    %v4727 = vpack.c.bf16 %v4541, %v4535
    %v4728 = vpack.c.bf16 %v4543, %v4537
    %v4729 = vpack.c.bf16 %v4679, %v4673
    %v4730 = vpack.c.bf16 %v4681, %v4675
    %v4731 = vpack.c.bf16 %v4559, %v4553
    %v4732 = vpack.c.bf16 %v4561, %v4555
    %v4733 = vpack.c.bf16 %v4697, %v4691
    %v4734 = vpack.c.bf16 %v4699, %v4693
    %4735 = vmatprep.subr.bf16.mxu0 0
    %4736 = vmatpush1.bf16.xpose.msra.mxu0 0
    %4737 = vmatprep.subr.bf16.mxu0 0
    %4738 = vmatpush1.bf16.xpose.msra.mxu0 0
    %4739 = vmatprep.subr.bf16.mxu0 0
    %4740 = vmatpush1.bf16.xpose.msra.mxu0 0
    %4741 = vmatprep.subr.bf16.mxu0 0
    %4742 = vmatpush1.bf16.xpose.msra.mxu0 0
    %4743 = vmatprep.subr.bf16.mxu0 0
    %4744 = vmatpush1.bf16.xpose.msra.mxu0 0
    %4745 = vmatprep.subr.bf16.mxu0 0
    %4746 = vmatpush1.bf16.xpose.msra.mxu0 0
    %4747 = vmatprep.subr.bf16.mxu0 0
    %4748 = vmatpush1.bf16.xpose.msra.mxu0 0
    %4749 = vmatprep.subr.bf16.mxu0 %v4712
    %4750 = vmatpush1.bf16.xpose.msra.mxu0 %v4711
    %4751 = vmatprep.subr.bf16.mxu0 0
    %4752 = vmatpush2.bf16.xpose.msra.mxu0 0
    %4753 = vmatprep.subr.bf16.mxu0 0
    %4754 = vmatpush2.bf16.xpose.msra.mxu0 0
    %4755 = vmatprep.subr.bf16.mxu0 0
    %4756 = vmatpush2.bf16.xpose.msra.mxu0 0
    %4757 = vmatprep.subr.bf16.mxu0 0
    %4758 = vmatpush2.bf16.xpose.msra.mxu0 0
    %4759 = vmatprep.subr.bf16.mxu0 0
    %4760 = vmatpush2.bf16.xpose.msra.mxu0 0
    %4761 = vmatprep.subr.bf16.mxu0 0
    %4762 = vmatpush2.bf16.xpose.msra.mxu0 0
    %4763 = vmatprep.subr.bf16.mxu0 0
    %4764 = vmatpush2.bf16.xpose.msra.mxu0 0
    %4765 = vmatprep.subr.bf16.mxu0 0
    %4766 = vmatpush2.bf16.xpose.msra.mxu0 0
    %4767 = vmatprep.mubr.bf16.mxu0 %v4704
    %4768 = vmatmul.mubr.bf16.gmra.mxu0 %v4703
    %v4769 = vpop.f32.mrf.mxu0
    %v4770 = vadd.f32 0.0, %v4769
    %v4771 = vpop.f32.mrf.mxu0
    %v4772 = vpop.f32.mrf.mxu0
    %v4773 = vpop.f32.mrf.mxu0
    %4774 = vdwg.mxu0
    %4775 = vmatprep.subr.bf16.mxu0 0
    %4776 = vmatpush1.bf16.xpose.msra.mxu0 0
    %4777 = vmatprep.subr.bf16.mxu0 0
    %4778 = vmatpush1.bf16.xpose.msra.mxu0 0
    %4779 = vmatprep.subr.bf16.mxu0 0
    %4780 = vmatpush1.bf16.xpose.msra.mxu0 0
    %4781 = vmatprep.subr.bf16.mxu0 0
    %4782 = vmatpush1.bf16.xpose.msra.mxu0 0
    %4783 = vmatprep.subr.bf16.mxu0 0
    %4784 = vmatpush1.bf16.xpose.msra.mxu0 0
    %4785 = vmatprep.subr.bf16.mxu0 0
    %4786 = vmatpush1.bf16.xpose.msra.mxu0 0
    %4787 = vmatprep.subr.bf16.mxu0 0
    %4788 = vmatpush1.bf16.xpose.msra.mxu0 0
    %4789 = vmatprep.subr.bf16.mxu0 %v4714
    %4790 = vmatpush1.bf16.xpose.msra.mxu0 %v4713
    %4791 = vmatprep.subr.bf16.mxu0 0
    %4792 = vmatpush2.bf16.xpose.msra.mxu0 0
    %4793 = vmatprep.subr.bf16.mxu0 0
    %4794 = vmatpush2.bf16.xpose.msra.mxu0 0
    %4795 = vmatprep.subr.bf16.mxu0 0
    %4796 = vmatpush2.bf16.xpose.msra.mxu0 0
    %4797 = vmatprep.subr.bf16.mxu0 0
    %4798 = vmatpush2.bf16.xpose.msra.mxu0 0
    %4799 = vmatprep.subr.bf16.mxu0 0
    %4800 = vmatpush2.bf16.xpose.msra.mxu0 0
    %4801 = vmatprep.subr.bf16.mxu0 0
    %4802 = vmatpush2.bf16.xpose.msra.mxu0 0
    %4803 = vmatprep.subr.bf16.mxu0 0
    %4804 = vmatpush2.bf16.xpose.msra.mxu0 0
    %4805 = vmatprep.subr.bf16.mxu0 0
    %4806 = vmatpush2.bf16.xpose.msra.mxu0 0
    %4807 = vmatprep.mubr.bf16.mxu0 %v4706
    %4808 = vmatmul.mubr.bf16.gmra.mxu0 %v4705
    %v4809 = vpop.f32.mrf.mxu0
    %v4810 = vadd.f32 %v4770, %v4809
    %v4811 = vpop.f32.mrf.mxu0
    %v4812 = vpop.f32.mrf.mxu0
    %v4813 = vpop.f32.mrf.mxu0
    %4814 = vdwg.mxu0
    %4815 = vmatprep.subr.bf16.mxu0 0
    %4816 = vmatpush1.bf16.xpose.msra.mxu0 0
    %4817 = vmatprep.subr.bf16.mxu0 0
    %4818 = vmatpush1.bf16.xpose.msra.mxu0 0
    %4819 = vmatprep.subr.bf16.mxu0 0
    %4820 = vmatpush1.bf16.xpose.msra.mxu0 0
    %4821 = vmatprep.subr.bf16.mxu0 0
    %4822 = vmatpush1.bf16.xpose.msra.mxu0 0
    %4823 = vmatprep.subr.bf16.mxu0 0
    %4824 = vmatpush1.bf16.xpose.msra.mxu0 0
    %4825 = vmatprep.subr.bf16.mxu0 0
    %4826 = vmatpush1.bf16.xpose.msra.mxu0 0
    %4827 = vmatprep.subr.bf16.mxu0 0
    %4828 = vmatpush1.bf16.xpose.msra.mxu0 0
    %4829 = vmatprep.subr.bf16.mxu0 %v4716
    %4830 = vmatpush1.bf16.xpose.msra.mxu0 %v4715
    %4831 = vmatprep.subr.bf16.mxu0 0
    %4832 = vmatpush2.bf16.xpose.msra.mxu0 0
    %4833 = vmatprep.subr.bf16.mxu0 0
    %4834 = vmatpush2.bf16.xpose.msra.mxu0 0
    %4835 = vmatprep.subr.bf16.mxu0 0
    %4836 = vmatpush2.bf16.xpose.msra.mxu0 0
    %4837 = vmatprep.subr.bf16.mxu0 0
    %4838 = vmatpush2.bf16.xpose.msra.mxu0 0
    %4839 = vmatprep.subr.bf16.mxu0 0
    %4840 = vmatpush2.bf16.xpose.msra.mxu0 0
    %4841 = vmatprep.subr.bf16.mxu0 0
    %4842 = vmatpush2.bf16.xpose.msra.mxu0 0
    %4843 = vmatprep.subr.bf16.mxu0 0
    %4844 = vmatpush2.bf16.xpose.msra.mxu0 0
    %4845 = vmatprep.subr.bf16.mxu0 0
    %4846 = vmatpush2.bf16.xpose.msra.mxu0 0
    %4847 = vmatprep.mubr.bf16.mxu0 %v4708
    %4848 = vmatmul.mubr.bf16.gmra.mxu0 %v4707
    %v4849 = vpop.f32.mrf.mxu0
    %v4850 = vadd.f32 0.0, %v4849
    %v4851 = vpop.f32.mrf.mxu0
    %v4852 = vpop.f32.mrf.mxu0
    %v4853 = vpop.f32.mrf.mxu0
    %4854 = vdwg.mxu0
    %4855 = vmatprep.subr.bf16.mxu0 0
    %4856 = vmatpush1.bf16.xpose.msra.mxu0 0
    %4857 = vmatprep.subr.bf16.mxu0 0
    %4858 = vmatpush1.bf16.xpose.msra.mxu0 0
    %4859 = vmatprep.subr.bf16.mxu0 0
    %4860 = vmatpush1.bf16.xpose.msra.mxu0 0
    %4861 = vmatprep.subr.bf16.mxu0 0
    %4862 = vmatpush1.bf16.xpose.msra.mxu0 0
    %4863 = vmatprep.subr.bf16.mxu0 0
    %4864 = vmatpush1.bf16.xpose.msra.mxu0 0
    %4865 = vmatprep.subr.bf16.mxu0 0
    %4866 = vmatpush1.bf16.xpose.msra.mxu0 0
    %4867 = vmatprep.subr.bf16.mxu0 0
    %4868 = vmatpush1.bf16.xpose.msra.mxu0 0
    %4869 = vmatprep.subr.bf16.mxu0 %v4718
    %4870 = vmatpush1.bf16.xpose.msra.mxu0 %v4717
    %4871 = vmatprep.subr.bf16.mxu0 0
    %4872 = vmatpush2.bf16.xpose.msra.mxu0 0
    %4873 = vmatprep.subr.bf16.mxu0 0
    %4874 = vmatpush2.bf16.xpose.msra.mxu0 0
    %4875 = vmatprep.subr.bf16.mxu0 0
    %4876 = vmatpush2.bf16.xpose.msra.mxu0 0
    %4877 = vmatprep.subr.bf16.mxu0 0
    %4878 = vmatpush2.bf16.xpose.msra.mxu0 0
    %4879 = vmatprep.subr.bf16.mxu0 0
    %4880 = vmatpush2.bf16.xpose.msra.mxu0 0
    %4881 = vmatprep.subr.bf16.mxu0 0
    %4882 = vmatpush2.bf16.xpose.msra.mxu0 0
    %4883 = vmatprep.subr.bf16.mxu0 0
    %4884 = vmatpush2.bf16.xpose.msra.mxu0 0
    %4885 = vmatprep.subr.bf16.mxu0 0
    %4886 = vmatpush2.bf16.xpose.msra.mxu0 0
    %4887 = vmatprep.mubr.bf16.mxu0 %v4710
    %4888 = vmatmul.mubr.bf16.gmra.mxu0 %v4709
    %v4889 = vpop.f32.mrf.mxu0
    %v4890 = vadd.f32 %v4850, %v4889
    %v4891 = vpop.f32.mrf.mxu0
    %v4892 = vpop.f32.mrf.mxu0
    %v4893 = vpop.f32.mrf.mxu0
    %4894 = vdwg.mxu0
    %4895 = vmatprep.subr.bf16.mxu0 0
    %4896 = vmatpush1.bf16.xpose.msra.mxu0 0
    %4897 = vmatprep.subr.bf16.mxu0 0
    %4898 = vmatpush1.bf16.xpose.msra.mxu0 0
    %4899 = vmatprep.subr.bf16.mxu0 0
    %4900 = vmatpush1.bf16.xpose.msra.mxu0 0
    %4901 = vmatprep.subr.bf16.mxu0 0
    %4902 = vmatpush1.bf16.xpose.msra.mxu0 0
    %4903 = vmatprep.subr.bf16.mxu0 0
    %4904 = vmatpush1.bf16.xpose.msra.mxu0 0
    %4905 = vmatprep.subr.bf16.mxu0 0
    %4906 = vmatpush1.bf16.xpose.msra.mxu0 0
    %4907 = vmatprep.subr.bf16.mxu0 0
    %4908 = vmatpush1.bf16.xpose.msra.mxu0 0
    %4909 = vmatprep.subr.bf16.mxu0 %v4728
    %4910 = vmatpush1.bf16.xpose.msra.mxu0 %v4727
    %4911 = vmatprep.subr.bf16.mxu0 0
    %4912 = vmatpush2.bf16.xpose.msra.mxu0 0
    %4913 = vmatprep.subr.bf16.mxu0 0
    %4914 = vmatpush2.bf16.xpose.msra.mxu0 0
    %4915 = vmatprep.subr.bf16.mxu0 0
    %4916 = vmatpush2.bf16.xpose.msra.mxu0 0
    %4917 = vmatprep.subr.bf16.mxu0 0
    %4918 = vmatpush2.bf16.xpose.msra.mxu0 0
    %4919 = vmatprep.subr.bf16.mxu0 0
    %4920 = vmatpush2.bf16.xpose.msra.mxu0 0
    %4921 = vmatprep.subr.bf16.mxu0 0
    %4922 = vmatpush2.bf16.xpose.msra.mxu0 0
    %4923 = vmatprep.subr.bf16.mxu0 0
    %4924 = vmatpush2.bf16.xpose.msra.mxu0 0
    %4925 = vmatprep.subr.bf16.mxu0 0
    %4926 = vmatpush2.bf16.xpose.msra.mxu0 0
    %4927 = vmatprep.mubr.bf16.mxu0 %v4720
    %4928 = vmatmul.mubr.bf16.gmra.mxu0 %v4719
    %v4929 = vpop.f32.mrf.mxu0
    %v4930 = vadd.f32 0.0, %v4929
    %v4931 = vpop.f32.mrf.mxu0
    %v4932 = vpop.f32.mrf.mxu0
    %v4933 = vpop.f32.mrf.mxu0
    %4934 = vdwg.mxu0
    %4935 = vmatprep.subr.bf16.mxu0 0
    %4936 = vmatpush1.bf16.xpose.msra.mxu0 0
    %4937 = vmatprep.subr.bf16.mxu0 0
    %4938 = vmatpush1.bf16.xpose.msra.mxu0 0
    %4939 = vmatprep.subr.bf16.mxu0 0
    %4940 = vmatpush1.bf16.xpose.msra.mxu0 0
    %4941 = vmatprep.subr.bf16.mxu0 0
    %4942 = vmatpush1.bf16.xpose.msra.mxu0 0
    %4943 = vmatprep.subr.bf16.mxu0 0
    %4944 = vmatpush1.bf16.xpose.msra.mxu0 0
    %4945 = vmatprep.subr.bf16.mxu0 0
    %4946 = vmatpush1.bf16.xpose.msra.mxu0 0
    %4947 = vmatprep.subr.bf16.mxu0 0
    %4948 = vmatpush1.bf16.xpose.msra.mxu0 0
    %4949 = vmatprep.subr.bf16.mxu0 %v4730
    %4950 = vmatpush1.bf16.xpose.msra.mxu0 %v4729
    %4951 = vmatprep.subr.bf16.mxu0 0
    %4952 = vmatpush2.bf16.xpose.msra.mxu0 0
    %4953 = vmatprep.subr.bf16.mxu0 0
    %4954 = vmatpush2.bf16.xpose.msra.mxu0 0
    %4955 = vmatprep.subr.bf16.mxu0 0
    %4956 = vmatpush2.bf16.xpose.msra.mxu0 0
    %4957 = vmatprep.subr.bf16.mxu0 0
    %4958 = vmatpush2.bf16.xpose.msra.mxu0 0
    %4959 = vmatprep.subr.bf16.mxu0 0
    %4960 = vmatpush2.bf16.xpose.msra.mxu0 0
    %4961 = vmatprep.subr.bf16.mxu0 0
    %4962 = vmatpush2.bf16.xpose.msra.mxu0 0
    %4963 = vmatprep.subr.bf16.mxu0 0
    %4964 = vmatpush2.bf16.xpose.msra.mxu0 0
    %4965 = vmatprep.subr.bf16.mxu0 0
    %4966 = vmatpush2.bf16.xpose.msra.mxu0 0
    %4967 = vmatprep.mubr.bf16.mxu0 %v4722
    %4968 = vmatmul.mubr.bf16.gmra.mxu0 %v4721
    %v4969 = vpop.f32.mrf.mxu0
    %v4970 = vadd.f32 %v4930, %v4969
    %v4971 = vpop.f32.mrf.mxu0
    %v4972 = vpop.f32.mrf.mxu0
    %v4973 = vpop.f32.mrf.mxu0
    %4974 = vdwg.mxu0
    %4975 = vmatprep.subr.bf16.mxu0 0
    %4976 = vmatpush1.bf16.xpose.msra.mxu0 0
    %4977 = vmatprep.subr.bf16.mxu0 0
    %4978 = vmatpush1.bf16.xpose.msra.mxu0 0
    %4979 = vmatprep.subr.bf16.mxu0 0
    %4980 = vmatpush1.bf16.xpose.msra.mxu0 0
    %4981 = vmatprep.subr.bf16.mxu0 0
    %4982 = vmatpush1.bf16.xpose.msra.mxu0 0
    %4983 = vmatprep.subr.bf16.mxu0 0
    %4984 = vmatpush1.bf16.xpose.msra.mxu0 0
    %4985 = vmatprep.subr.bf16.mxu0 0
    %4986 = vmatpush1.bf16.xpose.msra.mxu0 0
    %4987 = vmatprep.subr.bf16.mxu0 0
    %4988 = vmatpush1.bf16.xpose.msra.mxu0 0
    %4989 = vmatprep.subr.bf16.mxu0 %v4732
    %4990 = vmatpush1.bf16.xpose.msra.mxu0 %v4731
    %4991 = vmatprep.subr.bf16.mxu0 0
    %4992 = vmatpush2.bf16.xpose.msra.mxu0 0
    %4993 = vmatprep.subr.bf16.mxu0 0
    %4994 = vmatpush2.bf16.xpose.msra.mxu0 0
    %4995 = vmatprep.subr.bf16.mxu0 0
    %4996 = vmatpush2.bf16.xpose.msra.mxu0 0
    %4997 = vmatprep.subr.bf16.mxu0 0
    %4998 = vmatpush2.bf16.xpose.msra.mxu0 0
    %4999 = vmatprep.subr.bf16.mxu0 0
    %5000 = vmatpush2.bf16.xpose.msra.mxu0 0
    %5001 = vmatprep.subr.bf16.mxu0 0
    %5002 = vmatpush2.bf16.xpose.msra.mxu0 0
    %5003 = vmatprep.subr.bf16.mxu0 0
    %5004 = vmatpush2.bf16.xpose.msra.mxu0 0
    %5005 = vmatprep.subr.bf16.mxu0 0
    %5006 = vmatpush2.bf16.xpose.msra.mxu0 0
    %5007 = vmatprep.mubr.bf16.mxu0 %v4724
    %5008 = vmatmul.mubr.bf16.gmra.mxu0 %v4723
    %v5009 = vpop.f32.mrf.mxu0
    %v5010 = vadd.f32 0.0, %v5009
    %v5011 = vpop.f32.mrf.mxu0
    %v5012 = vpop.f32.mrf.mxu0
    %v5013 = vpop.f32.mrf.mxu0
    %5014 = vdwg.mxu0
    %5015 = vmatprep.subr.bf16.mxu0 0
    %5016 = vmatpush1.bf16.xpose.msra.mxu0 0
    %5017 = vmatprep.subr.bf16.mxu0 0
    %5018 = vmatpush1.bf16.xpose.msra.mxu0 0
    %5019 = vmatprep.subr.bf16.mxu0 0
    %5020 = vmatpush1.bf16.xpose.msra.mxu0 0
    %5021 = vmatprep.subr.bf16.mxu0 0
    %5022 = vmatpush1.bf16.xpose.msra.mxu0 0
    %5023 = vmatprep.subr.bf16.mxu0 0
    %5024 = vmatpush1.bf16.xpose.msra.mxu0 0
    %5025 = vmatprep.subr.bf16.mxu0 0
    %5026 = vmatpush1.bf16.xpose.msra.mxu0 0
    %5027 = vmatprep.subr.bf16.mxu0 0
    %5028 = vmatpush1.bf16.xpose.msra.mxu0 0
    %5029 = vmatprep.subr.bf16.mxu0 %v4734
    %5030 = vmatpush1.bf16.xpose.msra.mxu0 %v4733
    %5031 = vmatprep.subr.bf16.mxu0 0
    %5032 = vmatpush2.bf16.xpose.msra.mxu0 0
    %5033 = vmatprep.subr.bf16.mxu0 0
    %5034 = vmatpush2.bf16.xpose.msra.mxu0 0
    %5035 = vmatprep.subr.bf16.mxu0 0
    %5036 = vmatpush2.bf16.xpose.msra.mxu0 0
    %5037 = vmatprep.subr.bf16.mxu0 0
    %5038 = vmatpush2.bf16.xpose.msra.mxu0 0
    %5039 = vmatprep.subr.bf16.mxu0 0
    %5040 = vmatpush2.bf16.xpose.msra.mxu0 0
    %5041 = vmatprep.subr.bf16.mxu0 0
    %5042 = vmatpush2.bf16.xpose.msra.mxu0 0
    %5043 = vmatprep.subr.bf16.mxu0 0
    %5044 = vmatpush2.bf16.xpose.msra.mxu0 0
    %5045 = vmatprep.subr.bf16.mxu0 0
    %5046 = vmatpush2.bf16.xpose.msra.mxu0 0
    %5047 = vmatprep.mubr.bf16.mxu0 %v4726
    %5048 = vmatmul.mubr.bf16.gmra.mxu0 %v4725
    %v5049 = vpop.f32.mrf.mxu0
    %v5050 = vadd.f32 %v5010, %v5049
    %v5051 = vpop.f32.mrf.mxu0
    %v5052 = vpop.f32.mrf.mxu0
    %v5053 = vpop.f32.mrf.mxu0
    %5054 = vdwg.mxu0
    %v5055 = vmul.f32 %v4810, 0.5
    %v5056 = vmul.f32 %v4890, 0.5
    %v5057 = vmul.f32 %v4970, 0.5
    %v5058 = vmul.f32 %v5050, 0.5
    %v5059 = vlaneseq
    %v5060 = vshrl.u32 %v5059, 7
    %v5061 = vsub.s32 0, %v5060
    %v5062 = vrot.slane %v5057, %v5061
    %v5063 = vlaneseq
    %v5064 = vshrl.u32 %v5063, 7
    %v5065 = vsub.s32 0, %v5064
    %v5066 = vrot.slane %v5058, %v5065
    %v5067 = vadd.f32 %v5055, %v5062
    %v5068 = vadd.f32 %v5056, %v5066
    %5069 = vst [vmem:[#allocation13] sm:$0xff] %v5067
    %5070 = vst [vmem:[#allocation13 + $0x8] sm:$0xff] %v5068
    // Predicated region
    $region66: #{tpu_custom_call.1} parent=1 // pred_check
      _
    $region67: #{tpu_custom_call.1} parent=1 // pred_check_branch
      %5072 = sbr.rel (0) target = $region69
    $region68: #{tpu_custom_call.1} parent=1 // pred_region
      %s5074 = ssub.s32 256, 256
      %5075 = vsyncadd [#allocation4], %s5074
      %s5076 = sshll.u32 [#allocation13], 4
      %s5077 = int_to_ptr.vmem [resolvable:$true] %s5076
      %5082 = dma.vmem_to_hbm [thread:$0]  %s5077, 256, %s10, [#allocation4], 128, 128, 8
    $region69: #{tpu_custom_call.1} parent=1 // pred_fallthru
      _
    // Predicated region
    $region70: #{tpu_custom_call.1} parent=1 // pred_check
      _
    $region71: #{tpu_custom_call.1} parent=1 // pred_check_branch
      %5084 = sbr.rel (0) target = $region73
    $region72: #{tpu_custom_call.1} parent=1 // pred_region
      %5085 = dma.done [#allocation4], 256
    $region73: #{tpu_custom_call.1} parent=1 // pred_fallthru
      _
    %5086 = vsyncpa [#allocation3], 1
    %5087 = vsyncpa [#allocation6], 1
    %5088 = vsyncpa [#allocation9], 1
    %5089 = vsyncpa [#allocation12], 1
    %5090 = vsyncpa [#allocation4], 1

</llo_original>
